<compile_context>
chip_gen: v7x
topology: tpu7x:2x2x1
jax: 0.10.0
libtpu: 0.0.40
codegen_flags: <defaults>
</compile_context>

<pallas_src>
import jax
import jax.numpy as jnp
from jax.experimental import pallas as pl
from jax.experimental.pallas import tpu as pltpu


def _round_up(x, m):
    return ((x + m - 1) // m) * m


def _linear(h, w_ref, b_ref, relu):
    # bf16 operands, f32 accumulation on the MXU; f32 bias add; f32 activations.
    y = jnp.dot(h.astype(jnp.bfloat16), w_ref[...],
                preferred_element_type=jnp.float32) + b_ref[...]
    if relu:
        y = jnp.maximum(y, 0.0)
    return y


def ae_forward_kernel(
    x_ref,
    w_e1, b_e1, w_e2, b_e2, w_e3, b_e3, w_z, b_z,
    w_d1, b_d1, w_d2, b_d2, w_d3, b_d3, w_xb, b_xb,
    xbar_ref, h1_ref, h2_ref, h3_ref, z_ref,
):
    x = x_ref[...]

    enc_h1 = _linear(x, w_e1, b_e1, relu=True)
    enc_h2 = _linear(enc_h1, w_e2, b_e2, relu=True)
    enc_h3 = _linear(enc_h2, w_e3, b_e3, relu=True)
    z = _linear(enc_h3, w_z, b_z, relu=False)

    dec_h1 = _linear(z, w_d1, b_d1, relu=True)
    dec_h2 = _linear(dec_h1, w_d2, b_d2, relu=True)
    dec_h3 = _linear(dec_h2, w_d3, b_d3, relu=True)
    x_bar = _linear(dec_h3, w_xb, b_xb, relu=False)

    h1_ref[...] = enc_h1
    h2_ref[...] = enc_h2
    h3_ref[...] = enc_h3
    z_ref[...] = z
    xbar_ref[...] = x_bar


def prepare_params(params):
    """Hoisted, once-per-model prep: weights -> bf16, biases -> (1, out) f32."""
    prepared = []
    for w, b in params:
        w_bf = jnp.asarray(w, jnp.bfloat16)
        b_f = jnp.asarray(b, jnp.float32).reshape(1, -1)
        prepared.append((w_bf, b_f))
    return prepared


def _choose_tile_m(n, max_tile_m):
    # Fit the tile to the batch: minimal padded/garbage rows, >=2 grid steps
    # whenever there is enough work (keeps both v7x TensorCores busy).
    n_steps = max(2, pl.cdiv(n, max_tile_m))
    tile_m = _round_up(pl.cdiv(n, n_steps), 16)
    return min(tile_m, _round_up(n, 16))


def ae_forward(x, prepared_params, max_tile_m=1024):
    """x: (batch, n_input) f32. prepared_params: list of (W bf16 (in,out), b f32 (1,out))."""
    n, n_input = x.shape
    n_enc_1 = prepared_params[0][0].shape[1]
    n_enc_2 = prepared_params[1][0].shape[1]
    n_enc_3 = prepared_params[2][0].shape[1]
    n_z = prepared_params[3][0].shape[1]

    tile_m = _choose_tile_m(n, max_tile_m)
    grid = (pl.cdiv(n, tile_m),)

    def act_spec(feat):
        # Batch-tiled; feature dim = full array extent (no lane padding).
        return pl.BlockSpec((tile_m, feat), lambda i: (i, 0))

    def const_spec(arr):
        # Full array, same block every step -> stays resident in VMEM.
        return pl.BlockSpec(arr.shape, lambda i: (0, 0))

    flat = []
    in_specs = [act_spec(n_input)]
    for w, b in prepared_params:
        flat.extend([w, b])
        in_specs.append(const_spec(w))
        in_specs.append(const_spec(b))

    out_shapes = (
        jax.ShapeDtypeStruct((n, n_input), jnp.float32),   # x_bar
        jax.ShapeDtypeStruct((n, n_enc_1), jnp.float32),   # enc_h1
        jax.ShapeDtypeStruct((n, n_enc_2), jnp.float32),   # enc_h2
        jax.ShapeDtypeStruct((n, n_enc_3), jnp.float32),   # enc_h3
        jax.ShapeDtypeStruct((n, n_z), jnp.float32),       # z
    )
    out_specs = (
        act_spec(n_input),
        act_spec(n_enc_1),
        act_spec(n_enc_2),
        act_spec(n_enc_3),
        act_spec(n_z),
    )

    return pl.pallas_call(
        ae_forward_kernel,
        out_shape=out_shapes,
        grid=grid,
        in_specs=in_specs,
        out_specs=out_specs,
        compiler_params=pltpu.CompilerParams(
            dimension_semantics=("parallel",),
        ),
    )(x, *flat)


def init_params(key, dims):
    """dims: [(in, out), ...]; PyTorch-Linear-style uniform(-1/sqrt(in), 1/sqrt(in))."""
    params = []
    for (din, dout) in dims:
        key, kw, kb = jax.random.split(key, 3)
        bound = 1.0 / (din ** 0.5)
        w = jax.random.uniform(kw, (din, dout), jnp.float32, -bound, bound)
        b = jax.random.uniform(kb, (1, dout), jnp.float32, -bound, bound)
        params.append((w, b))
    return params


def ae_reference(x, prepared_params):
    """Plain-JAX reference with identical precision (bf16 operands, f32 accum)."""
    def lin(h, p, relu):
        y = jnp.dot(h.astype(jnp.bfloat16), p[0],
                    preferred_element_type=jnp.float32) + p[1]
        return jnp.maximum(y, 0.0) if relu else y
    h1 = lin(x, prepared_params[0], True)
    h2 = lin(h1, prepared_params[1], True)
    h3 = lin(h2, prepared_params[2], True)
    z = lin(h3, prepared_params[3], False)
    d1 = lin(z, prepared_params[4], True)
    d2 = lin(d1, prepared_params[5], True)
    d3 = lin(d2, prepared_params[6], True)
    xb = lin(d3, prepared_params[7], False)
    return xb, h1, h2, h3, z


if __name__ == "__main__":
    # AE(n_enc_1, n_enc_2, n_enc_3, n_dec_1, n_dec_2, n_dec_3, n_input, n_z)
    n_input, n_enc_1, n_enc_2, n_enc_3 = 32, 128, 64, 32
    n_z, n_dec_1, n_dec_2, n_dec_3 = 16, 32, 64, 128
    batch = 300  # not a tile multiple on purpose: exercises boundary block + grid of 2

    layer_dims = [
        (n_input, n_enc_1),
        (n_enc_1, n_enc_2),
        (n_enc_2, n_enc_3),
        (n_enc_3, n_z),
        (n_z, n_dec_1),
        (n_dec_1, n_dec_2),
        (n_dec_2, n_dec_3),
        (n_dec_3, n_input),
    ]

    key = jax.random.PRNGKey(0)
    key, kx = jax.random.split(key)
    x = jax.random.normal(kx, (batch, n_input), jnp.float32)
    params = init_params(key, layer_dims)

    prepared = prepare_params(params)  # once-per-model: bf16 weights, f32 biases

    outs = ae_forward(x, prepared, max_tile_m=1024)
    outs = jax.block_until_ready(outs)

    refs = ae_reference(x, prepared)
    for got, want in zip(outs, refs):
        assert got.shape == want.shape and got.dtype == want.dtype
        assert bool(jnp.all(jnp.isfinite(got)))
        assert jnp.allclose(got, want, atol=2e-3, rtol=2e-3), "mismatch vs reference"

    print("KERNEL_OK")
</pallas_src>

<mosaic_0001>
module attributes {stable_mosaic.version = 11 : i64} {
  func.func @ae_forward_kernel(%arg0: i32, %arg1: memref<160x32xf32, #tpu.memory_space<vmem>>, %arg2: memref<32x128xbf16, #tpu.memory_space<vmem>>, %arg3: memref<1x128xf32, #tpu.memory_space<vmem>>, %arg4: memref<128x64xbf16, #tpu.memory_space<vmem>>, %arg5: memref<1x64xf32, #tpu.memory_space<vmem>>, %arg6: memref<64x32xbf16, #tpu.memory_space<vmem>>, %arg7: memref<1x32xf32, #tpu.memory_space<vmem>>, %arg8: memref<32x16xbf16, #tpu.memory_space<vmem>>, %arg9: memref<1x16xf32, #tpu.memory_space<vmem>>, %arg10: memref<16x32xbf16, #tpu.memory_space<vmem>>, %arg11: memref<1x32xf32, #tpu.memory_space<vmem>>, %arg12: memref<32x64xbf16, #tpu.memory_space<vmem>>, %arg13: memref<1x64xf32, #tpu.memory_space<vmem>>, %arg14: memref<64x128xbf16, #tpu.memory_space<vmem>>, %arg15: memref<1x128xf32, #tpu.memory_space<vmem>>, %arg16: memref<128x32xbf16, #tpu.memory_space<vmem>>, %arg17: memref<1x32xf32, #tpu.memory_space<vmem>>, %arg18: memref<160x32xf32, #tpu.memory_space<vmem>>, %arg19: memref<160x128xf32, #tpu.memory_space<vmem>>, %arg20: memref<160x64xf32, #tpu.memory_space<vmem>>, %arg21: memref<160x32xf32, #tpu.memory_space<vmem>>, %arg22: memref<160x16xf32, #tpu.memory_space<vmem>>) attributes {dimension_semantics = [#tpu.dimension_semantics<parallel>], iteration_bounds = array<i64: 2>, scalar_prefetch = 0 : i64, scratch_operands = 0 : i64, tpu.core_type = #tpu.core_type<tc>, window_params = [{transform_indices = @transform_0, window_bounds = array<i64: 160, 32>}, {pipeline_mode = #tpu.pipeline_mode<synchronous>, transform_indices = @transform_1, window_bounds = array<i64: 32, 128>}, {pipeline_mode = #tpu.pipeline_mode<synchronous>, transform_indices = @transform_2, window_bounds = array<i64: 1, 128>}, {pipeline_mode = #tpu.pipeline_mode<synchronous>, transform_indices = @transform_3, window_bounds = array<i64: 128, 64>}, {pipeline_mode = #tpu.pipeline_mode<synchronous>, transform_indices = @transform_4, window_bounds = array<i64: 1, 64>}, {pipeline_mode = #tpu.pipeline_mode<synchronous>, transform_indices = @transform_5, window_bounds = array<i64: 64, 32>}, {pipeline_mode = #tpu.pipeline_mode<synchronous>, transform_indices = @transform_6, window_bounds = array<i64: 1, 32>}, {pipeline_mode = #tpu.pipeline_mode<synchronous>, transform_indices = @transform_7, window_bounds = array<i64: 32, 16>}, {pipeline_mode = #tpu.pipeline_mode<synchronous>, transform_indices = @transform_8, window_bounds = array<i64: 1, 16>}, {pipeline_mode = #tpu.pipeline_mode<synchronous>, transform_indices = @transform_9, window_bounds = array<i64: 16, 32>}, {pipeline_mode = #tpu.pipeline_mode<synchronous>, transform_indices = @transform_10, window_bounds = array<i64: 1, 32>}, {pipeline_mode = #tpu.pipeline_mode<synchronous>, transform_indices = @transform_11, window_bounds = array<i64: 32, 64>}, {pipeline_mode = #tpu.pipeline_mode<synchronous>, transform_indices = @transform_12, window_bounds = array<i64: 1, 64>}, {pipeline_mode = #tpu.pipeline_mode<synchronous>, transform_indices = @transform_13, window_bounds = array<i64: 64, 128>}, {pipeline_mode = #tpu.pipeline_mode<synchronous>, transform_indices = @transform_14, window_bounds = array<i64: 1, 128>}, {pipeline_mode = #tpu.pipeline_mode<synchronous>, transform_indices = @transform_15, window_bounds = array<i64: 128, 32>}, {pipeline_mode = #tpu.pipeline_mode<synchronous>, transform_indices = @transform_16, window_bounds = array<i64: 1, 32>}, {transform_indices = @transform_17, window_bounds = array<i64: 160, 32>}, {transform_indices = @transform_18, window_bounds = array<i64: 160, 128>}, {transform_indices = @transform_19, window_bounds = array<i64: 160, 64>}, {transform_indices = @transform_20, window_bounds = array<i64: 160, 32>}, {transform_indices = @transform_21, window_bounds = array<i64: 160, 16>}]} {
    %c0 = arith.constant 0 : index
    %c0_0 = arith.constant 0 : index
    %0 = vector.load %arg1[%c0, %c0_0] : memref<160x32xf32, #tpu.memory_space<vmem>>, vector<160x32xf32>
    %1 = arith.truncf %0 : vector<160x32xf32> to vector<160x32xbf16>
    %c0_1 = arith.constant 0 : index
    %c0_2 = arith.constant 0 : index
    %2 = vector.load %arg2[%c0_1, %c0_2] : memref<32x128xbf16, #tpu.memory_space<vmem>>, vector<32x128xbf16>
    %cst = arith.constant dense<0.000000e+00> : vector<160x128xf32>
    %3 = tpu.matmul %1, %2, %cst {dimension_numbers = #tpu.dot_dimension_numbers<[1], [0], [0], [1], [0, 0, 1, 1], [], []>} : vector<160x32xbf16>, vector<32x128xbf16>, vector<160x128xf32> -> vector<160x128xf32>
    %c0_3 = arith.constant 0 : index
    %c0_4 = arith.constant 0 : index
    %4 = vector.load %arg3[%c0_3, %c0_4] : memref<1x128xf32, #tpu.memory_space<vmem>>, vector<1x128xf32>
    %5 = vector.broadcast %4 : vector<1x128xf32> to vector<160x128xf32>
    %6 = arith.addf %3, %5 : vector<160x128xf32>
    %cst_5 = arith.constant 0.000000e+00 : f32
    %7 = vector.broadcast %cst_5 : f32 to vector<160x128xf32>
    %8 = arith.maximumf %6, %7 : vector<160x128xf32>
    %9 = arith.truncf %8 : vector<160x128xf32> to vector<160x128xbf16>
    %c0_6 = arith.constant 0 : index
    %c0_7 = arith.constant 0 : index
    %10 = vector.load %arg4[%c0_6, %c0_7] : memref<128x64xbf16, #tpu.memory_space<vmem>>, vector<128x64xbf16>
    %cst_8 = arith.constant dense<0.000000e+00> : vector<160x64xf32>
    %11 = tpu.matmul %9, %10, %cst_8 {dimension_numbers = #tpu.dot_dimension_numbers<[1], [0], [0], [1], [0, 0, 1, 1], [], []>} : vector<160x128xbf16>, vector<128x64xbf16>, vector<160x64xf32> -> vector<160x64xf32>
    %c0_9 = arith.constant 0 : index
    %c0_10 = arith.constant 0 : index
    %12 = vector.load %arg5[%c0_9, %c0_10] : memref<1x64xf32, #tpu.memory_space<vmem>>, vector<1x64xf32>
    %13 = vector.broadcast %12 : vector<1x64xf32> to vector<160x64xf32>
    %14 = arith.addf %11, %13 : vector<160x64xf32>
    %cst_11 = arith.constant 0.000000e+00 : f32
    %15 = vector.broadcast %cst_11 : f32 to vector<160x64xf32>
    %16 = arith.maximumf %14, %15 : vector<160x64xf32>
    %17 = arith.truncf %16 : vector<160x64xf32> to vector<160x64xbf16>
    %c0_12 = arith.constant 0 : index
    %c0_13 = arith.constant 0 : index
    %18 = vector.load %arg6[%c0_12, %c0_13] : memref<64x32xbf16, #tpu.memory_space<vmem>>, vector<64x32xbf16>
    %cst_14 = arith.constant dense<0.000000e+00> : vector<160x32xf32>
    %19 = tpu.matmul %17, %18, %cst_14 {dimension_numbers = #tpu.dot_dimension_numbers<[1], [0], [0], [1], [0, 0, 1, 1], [], []>} : vector<160x64xbf16>, vector<64x32xbf16>, vector<160x32xf32> -> vector<160x32xf32>
    %c0_15 = arith.constant 0 : index
    %c0_16 = arith.constant 0 : index
    %20 = vector.load %arg7[%c0_15, %c0_16] : memref<1x32xf32, #tpu.memory_space<vmem>>, vector<1x32xf32>
    %21 = vector.broadcast %20 : vector<1x32xf32> to vector<160x32xf32>
    %22 = arith.addf %19, %21 : vector<160x32xf32>
    %cst_17 = arith.constant 0.000000e+00 : f32
    %23 = vector.broadcast %cst_17 : f32 to vector<160x32xf32>
    %24 = arith.maximumf %22, %23 : vector<160x32xf32>
    %25 = arith.truncf %24 : vector<160x32xf32> to vector<160x32xbf16>
    %c0_18 = arith.constant 0 : index
    %c0_19 = arith.constant 0 : index
    %26 = vector.load %arg8[%c0_18, %c0_19] : memref<32x16xbf16, #tpu.memory_space<vmem>>, vector<32x16xbf16>
    %cst_20 = arith.constant dense<0.000000e+00> : vector<160x16xf32>
    %27 = tpu.matmul %25, %26, %cst_20 {dimension_numbers = #tpu.dot_dimension_numbers<[1], [0], [0], [1], [0, 0, 1, 1], [], []>} : vector<160x32xbf16>, vector<32x16xbf16>, vector<160x16xf32> -> vector<160x16xf32>
    %c0_21 = arith.constant 0 : index
    %c0_22 = arith.constant 0 : index
    %28 = vector.load %arg9[%c0_21, %c0_22] : memref<1x16xf32, #tpu.memory_space<vmem>>, vector<1x16xf32>
    %29 = vector.broadcast %28 : vector<1x16xf32> to vector<160x16xf32>
    %30 = arith.addf %27, %29 : vector<160x16xf32>
    %31 = arith.truncf %30 : vector<160x16xf32> to vector<160x16xbf16>
    %c0_23 = arith.constant 0 : index
    %c0_24 = arith.constant 0 : index
    %32 = vector.load %arg10[%c0_23, %c0_24] : memref<16x32xbf16, #tpu.memory_space<vmem>>, vector<16x32xbf16>
    %cst_25 = arith.constant dense<0.000000e+00> : vector<160x32xf32>
    %33 = tpu.matmul %31, %32, %cst_25 {dimension_numbers = #tpu.dot_dimension_numbers<[1], [0], [0], [1], [0, 0, 1, 1], [], []>} : vector<160x16xbf16>, vector<16x32xbf16>, vector<160x32xf32> -> vector<160x32xf32>
    %c0_26 = arith.constant 0 : index
    %c0_27 = arith.constant 0 : index
    %34 = vector.load %arg11[%c0_26, %c0_27] : memref<1x32xf32, #tpu.memory_space<vmem>>, vector<1x32xf32>
    %35 = vector.broadcast %34 : vector<1x32xf32> to vector<160x32xf32>
    %36 = arith.addf %33, %35 : vector<160x32xf32>
    %cst_28 = arith.constant 0.000000e+00 : f32
    %37 = vector.broadcast %cst_28 : f32 to vector<160x32xf32>
    %38 = arith.maximumf %36, %37 : vector<160x32xf32>
    %39 = arith.truncf %38 : vector<160x32xf32> to vector<160x32xbf16>
    %c0_29 = arith.constant 0 : index
    %c0_30 = arith.constant 0 : index
    %40 = vector.load %arg12[%c0_29, %c0_30] : memref<32x64xbf16, #tpu.memory_space<vmem>>, vector<32x64xbf16>
    %cst_31 = arith.constant dense<0.000000e+00> : vector<160x64xf32>
    %41 = tpu.matmul %39, %40, %cst_31 {dimension_numbers = #tpu.dot_dimension_numbers<[1], [0], [0], [1], [0, 0, 1, 1], [], []>} : vector<160x32xbf16>, vector<32x64xbf16>, vector<160x64xf32> -> vector<160x64xf32>
    %c0_32 = arith.constant 0 : index
    %c0_33 = arith.constant 0 : index
    %42 = vector.load %arg13[%c0_32, %c0_33] : memref<1x64xf32, #tpu.memory_space<vmem>>, vector<1x64xf32>
    %43 = vector.broadcast %42 : vector<1x64xf32> to vector<160x64xf32>
    %44 = arith.addf %41, %43 : vector<160x64xf32>
    %cst_34 = arith.constant 0.000000e+00 : f32
    %45 = vector.broadcast %cst_34 : f32 to vector<160x64xf32>
    %46 = arith.maximumf %44, %45 : vector<160x64xf32>
    %47 = arith.truncf %46 : vector<160x64xf32> to vector<160x64xbf16>
    %c0_35 = arith.constant 0 : index
    %c0_36 = arith.constant 0 : index
    %48 = vector.load %arg14[%c0_35, %c0_36] : memref<64x128xbf16, #tpu.memory_space<vmem>>, vector<64x128xbf16>
    %cst_37 = arith.constant dense<0.000000e+00> : vector<160x128xf32>
    %49 = tpu.matmul %47, %48, %cst_37 {dimension_numbers = #tpu.dot_dimension_numbers<[1], [0], [0], [1], [0, 0, 1, 1], [], []>} : vector<160x64xbf16>, vector<64x128xbf16>, vector<160x128xf32> -> vector<160x128xf32>
    %c0_38 = arith.constant 0 : index
    %c0_39 = arith.constant 0 : index
    %50 = vector.load %arg15[%c0_38, %c0_39] : memref<1x128xf32, #tpu.memory_space<vmem>>, vector<1x128xf32>
    %51 = vector.broadcast %50 : vector<1x128xf32> to vector<160x128xf32>
    %52 = arith.addf %49, %51 : vector<160x128xf32>
    %cst_40 = arith.constant 0.000000e+00 : f32
    %53 = vector.broadcast %cst_40 : f32 to vector<160x128xf32>
    %54 = arith.maximumf %52, %53 : vector<160x128xf32>
    %55 = arith.truncf %54 : vector<160x128xf32> to vector<160x128xbf16>
    %c0_41 = arith.constant 0 : index
    %c0_42 = arith.constant 0 : index
    %56 = vector.load %arg16[%c0_41, %c0_42] : memref<128x32xbf16, #tpu.memory_space<vmem>>, vector<128x32xbf16>
    %cst_43 = arith.constant dense<0.000000e+00> : vector<160x32xf32>
    %57 = tpu.matmul %55, %56, %cst_43 {dimension_numbers = #tpu.dot_dimension_numbers<[1], [0], [0], [1], [0, 0, 1, 1], [], []>} : vector<160x128xbf16>, vector<128x32xbf16>, vector<160x32xf32> -> vector<160x32xf32>
    %c0_44 = arith.constant 0 : index
    %c0_45 = arith.constant 0 : index
    %58 = vector.load %arg17[%c0_44, %c0_45] : memref<1x32xf32, #tpu.memory_space<vmem>>, vector<1x32xf32>
    %59 = vector.broadcast %58 : vector<1x32xf32> to vector<160x32xf32>
    %60 = arith.addf %57, %59 : vector<160x32xf32>
    %c0_46 = arith.constant 0 : index
    %c0_47 = arith.constant 0 : index
    %61 = vector.load %arg19[%c0_46, %c0_47] : memref<160x128xf32, #tpu.memory_space<vmem>>, vector<160x128xf32>
    tpu.vector_store %arg19[%c0_46, %c0_47], %8 {strides = array<i32>} : memref<160x128xf32, #tpu.memory_space<vmem>>, vector<160x128xf32>,
    %c0_48 = arith.constant 0 : index
    %c0_49 = arith.constant 0 : index
    %62 = vector.load %arg20[%c0_48, %c0_49] : memref<160x64xf32, #tpu.memory_space<vmem>>, vector<160x64xf32>
    tpu.vector_store %arg20[%c0_48, %c0_49], %16 {strides = array<i32>} : memref<160x64xf32, #tpu.memory_space<vmem>>, vector<160x64xf32>,
    %c0_50 = arith.constant 0 : index
    %c0_51 = arith.constant 0 : index
    %63 = vector.load %arg21[%c0_50, %c0_51] : memref<160x32xf32, #tpu.memory_space<vmem>>, vector<160x32xf32>
    tpu.vector_store %arg21[%c0_50, %c0_51], %24 {strides = array<i32>} : memref<160x32xf32, #tpu.memory_space<vmem>>, vector<160x32xf32>,
    %c0_52 = arith.constant 0 : index
    %c0_53 = arith.constant 0 : index
    %64 = vector.load %arg22[%c0_52, %c0_53] : memref<160x16xf32, #tpu.memory_space<vmem>>, vector<160x16xf32>
    tpu.vector_store %arg22[%c0_52, %c0_53], %30 {strides = array<i32>} : memref<160x16xf32, #tpu.memory_space<vmem>>, vector<160x16xf32>,
    %c0_54 = arith.constant 0 : index
    %c0_55 = arith.constant 0 : index
    %65 = vector.load %arg18[%c0_54, %c0_55] : memref<160x32xf32, #tpu.memory_space<vmem>>, vector<160x32xf32>
    tpu.vector_store %arg18[%c0_54, %c0_55], %60 {strides = array<i32>} : memref<160x32xf32, #tpu.memory_space<vmem>>, vector<160x32xf32>,
    return
  }
  func.func @transform_0(%arg0: i32) -> (i32, i32) {
    %c0_i32 = arith.constant 0 : i32
    %c0_i32_0 = arith.constant 0 : i32
    return %arg0, %c0_i32 : i32, i32
  }
  func.func @transform_1(%arg0: i32) -> (i32, i32) {
    %c0_i32 = arith.constant 0 : i32
    %c0_i32_0 = arith.constant 0 : i32
    %c0_i32_1 = arith.constant 0 : i32
    return %c0_i32, %c0_i32_0 : i32, i32
  }
  func.func @transform_2(%arg0: i32) -> (i32, i32) {
    %c0_i32 = arith.constant 0 : i32
    %c0_i32_0 = arith.constant 0 : i32
    %c0_i32_1 = arith.constant 0 : i32
    return %c0_i32, %c0_i32_0 : i32, i32
  }
  func.func @transform_3(%arg0: i32) -> (i32, i32) {
    %c0_i32 = arith.constant 0 : i32
    %c0_i32_0 = arith.constant 0 : i32
    %c0_i32_1 = arith.constant 0 : i32
    return %c0_i32, %c0_i32_0 : i32, i32
  }
  func.func @transform_4(%arg0: i32) -> (i32, i32) {
    %c0_i32 = arith.constant 0 : i32
    %c0_i32_0 = arith.constant 0 : i32
    %c0_i32_1 = arith.constant 0 : i32
    return %c0_i32, %c0_i32_0 : i32, i32
  }
  func.func @transform_5(%arg0: i32) -> (i32, i32) {
    %c0_i32 = arith.constant 0 : i32
    %c0_i32_0 = arith.constant 0 : i32
    %c0_i32_1 = arith.constant 0 : i32
    return %c0_i32, %c0_i32_0 : i32, i32
  }
  func.func @transform_6(%arg0: i32) -> (i32, i32) {
    %c0_i32 = arith.constant 0 : i32
    %c0_i32_0 = arith.constant 0 : i32
    %c0_i32_1 = arith.constant 0 : i32
    return %c0_i32, %c0_i32_0 : i32, i32
  }
  func.func @transform_7(%arg0: i32) -> (i32, i32) {
    %c0_i32 = arith.constant 0 : i32
    %c0_i32_0 = arith.constant 0 : i32
    %c0_i32_1 = arith.constant 0 : i32
    return %c0_i32, %c0_i32_0 : i32, i32
  }
  func.func @transform_8(%arg0: i32) -> (i32, i32) {
    %c0_i32 = arith.constant 0 : i32
    %c0_i32_0 = arith.constant 0 : i32
    %c0_i32_1 = arith.constant 0 : i32
    return %c0_i32, %c0_i32_0 : i32, i32
  }
  func.func @transform_9(%arg0: i32) -> (i32, i32) {
    %c0_i32 = arith.constant 0 : i32
    %c0_i32_0 = arith.constant 0 : i32
    %c0_i32_1 = arith.constant 0 : i32
    return %c0_i32, %c0_i32_0 : i32, i32
  }
  func.func @transform_10(%arg0: i32) -> (i32, i32) {
    %c0_i32 = arith.constant 0 : i32
    %c0_i32_0 = arith.constant 0 : i32
    %c0_i32_1 = arith.constant 0 : i32
    return %c0_i32, %c0_i32_0 : i32, i32
  }
  func.func @transform_11(%arg0: i32) -> (i32, i32) {
    %c0_i32 = arith.constant 0 : i32
    %c0_i32_0 = arith.constant 0 : i32
    %c0_i32_1 = arith.constant 0 : i32
    return %c0_i32, %c0_i32_0 : i32, i32
  }
  func.func @transform_12(%arg0: i32) -> (i32, i32) {
    %c0_i32 = arith.constant 0 : i32
    %c0_i32_0 = arith.constant 0 : i32
    %c0_i32_1 = arith.constant 0 : i32
    return %c0_i32, %c0_i32_0 : i32, i32
  }
  func.func @transform_13(%arg0: i32) -> (i32, i32) {
    %c0_i32 = arith.constant 0 : i32
    %c0_i32_0 = arith.constant 0 : i32
    %c0_i32_1 = arith.constant 0 : i32
    return %c0_i32, %c0_i32_0 : i32, i32
  }
  func.func @transform_14(%arg0: i32) -> (i32, i32) {
    %c0_i32 = arith.constant 0 : i32
    %c0_i32_0 = arith.constant 0 : i32
    %c0_i32_1 = arith.constant 0 : i32
    return %c0_i32, %c0_i32_0 : i32, i32
  }
  func.func @transform_15(%arg0: i32) -> (i32, i32) {
    %c0_i32 = arith.constant 0 : i32
    %c0_i32_0 = arith.constant 0 : i32
    %c0_i32_1 = arith.constant 0 : i32
    return %c0_i32, %c0_i32_0 : i32, i32
  }
  func.func @transform_16(%arg0: i32) -> (i32, i32) {
    %c0_i32 = arith.constant 0 : i32
    %c0_i32_0 = arith.constant 0 : i32
    %c0_i32_1 = arith.constant 0 : i32
    return %c0_i32, %c0_i32_0 : i32, i32
  }
  func.func @transform_17(%arg0: i32) -> (i32, i32) {
    %c0_i32 = arith.constant 0 : i32
    %c0_i32_0 = arith.constant 0 : i32
    return %arg0, %c0_i32 : i32, i32
  }
  func.func @transform_18(%arg0: i32) -> (i32, i32) {
    %c0_i32 = arith.constant 0 : i32
    %c0_i32_0 = arith.constant 0 : i32
    return %arg0, %c0_i32 : i32, i32
  }
  func.func @transform_19(%arg0: i32) -> (i32, i32) {
    %c0_i32 = arith.constant 0 : i32
    %c0_i32_0 = arith.constant 0 : i32
    return %arg0, %c0_i32 : i32, i32
  }
  func.func @transform_20(%arg0: i32) -> (i32, i32) {
    %c0_i32 = arith.constant 0 : i32
    %c0_i32_0 = arith.constant 0 : i32
    return %arg0, %c0_i32 : i32, i32
  }
  func.func @transform_21(%arg0: i32) -> (i32, i32) {
    %c0_i32 = arith.constant 0 : i32
    %c0_i32_0 = arith.constant 0 : i32
    return %arg0, %c0_i32 : i32, i32
  }
}

</mosaic_0001>

<llo_original>
// kernel: tpu_custom_call.1
$region0: #{tpu_custom_call.1}
  #allocation0 [shape = 'u32[]', space=smem, size = 0x4, offset = 0x4, fixed_abs, tag = 'smem constant byte address 0x4 - core index']
  #allocation1 [shape = 'u32[144,128]{1,0:T(1,128)}', space=vmem, size = 0x12000, scoped, tag = 'internal scratch']
  %s0 = inlined_call_operand.vmem [shape: f32[300,32], index: 0, kind: input, shape index: {}]
  %s1 = inlined_call_operand.vmem [shape: bf16[32,128], index: 1, kind: input, shape index: {}]
  %s2 = inlined_call_operand.vmem [shape: f32[1,128], index: 2, kind: input, shape index: {}]
  %s3 = inlined_call_operand.vmem [shape: bf16[128,64], index: 3, kind: input, shape index: {}]
  %s4 = inlined_call_operand.vmem [shape: f32[1,64], index: 4, kind: input, shape index: {}]
  %s5 = inlined_call_operand.vmem [shape: bf16[64,32], index: 5, kind: input, shape index: {}]
  %s6 = inlined_call_operand.vmem [shape: f32[1,32], index: 6, kind: input, shape index: {}]
  %s7 = inlined_call_operand.vmem [shape: bf16[32,16], index: 7, kind: input, shape index: {}]
  %s8 = inlined_call_operand.vmem [shape: f32[1,16], index: 8, kind: input, shape index: {}]
  %s9 = inlined_call_operand.vmem [shape: bf16[16,32], index: 9, kind: input, shape index: {}]
  %s10 = inlined_call_operand.vmem [shape: f32[1,32], index: 10, kind: input, shape index: {}]
  %s11 = inlined_call_operand.vmem [shape: bf16[32,64], index: 11, kind: input, shape index: {}]
  %s12 = inlined_call_operand.vmem [shape: f32[1,64], index: 12, kind: input, shape index: {}]
  %s13 = inlined_call_operand.vmem [shape: bf16[64,128], index: 13, kind: input, shape index: {}]
  %s14 = inlined_call_operand.vmem [shape: f32[1,128], index: 14, kind: input, shape index: {}]
  %s15 = inlined_call_operand.vmem [shape: bf16[128,32], index: 15, kind: input, shape index: {}]
  %s16 = inlined_call_operand.vmem [shape: f32[1,32], index: 16, kind: input, shape index: {}]
  %s17 = inlined_call_operand.vmem [shape: f32[300,32], index: 17, kind: output, shape index: {0}]
  %s18 = inlined_call_operand.hbm [shape: f32[300,128], index: 18, kind: output, shape index: {1}]
  %s19 = inlined_call_operand.vmem [shape: f32[300,64], index: 19, kind: output, shape index: {2}]
  %s20 = inlined_call_operand.vmem [shape: f32[300,32], index: 20, kind: output, shape index: {3}]
  %s21 = inlined_call_operand.vmem [shape: f32[300,16], index: 21, kind: output, shape index: {4}]
  %22 = xla_tuple %s17, %s18, %s19, %s20, %s21
  %s23 = sld [smem:[#allocation0]]
  $region325: #{tpu_custom_call.1} parent=0
    _
  %s25 = ssub.s32 1, %s23
  %s26 = scalar_select 0, %s25, %s23
  $region1: #{tpu_custom_call.1} parent=0
    #allocation2 [shape = 'u8[163840]{0}', space=vmem, size = 0x28000, scoped, tag = 'output window, operand 0']
    #allocation3 [shape = 'u8[163840]{0}', space=vmem, size = 0x28000, scoped, tag = 'output window, operand 1']
    #allocation4 [shape = 's32[2]{0}', space=sflag, size = 0x8, scoped, tag = 'scoped memory for tpu_custom_call.1']
    #allocation5 [shape = 'u8[163840]{0}', space=vmem, size = 0x28000, scoped, tag = 'output window, operand 2']
    #allocation6 [shape = 'u8[163840]{0}', space=vmem, size = 0x28000, scoped, tag = 'output window, operand 3']
    #allocation7 [shape = 'u8[163840]{0}', space=vmem, size = 0x28000, scoped, tag = 'output window, operand 4']
    %27 = vsyncpa [#allocation4], 0
    %s28 = scalar_lea.sflag [#allocation4], 1
    %29 = vsyncpa %s28, 0
    loop: start=0, step=1, limit=4
    $region2: #{tpu_custom_call.1} parent=1 // loop_pre_header
      _
    $region3: #{tpu_custom_call.1} parent=1 // loop_header
      %s31 = sphi 0, %s35
      %p32 = scmp.ge.s32.totalorder %s31, 4
      %s41 = sphi 0, %s43
      %s44 = sphi 0, %s41
      %s45 = sphi 0, %s44
      %s61 = sphi 0, %s45
      %s65 = sphi 0, %s65
      %s67 = sphi 0, %s65
      %s68 = sphi 0, %s67
      %s82 = sphi 0, %s68
      %s86 = sphi 0, %s86
      %s88 = sphi 0, %s86
      %s89 = sphi 0, %s88
      %s103 = sphi 0, %s89
      %s107 = sphi 0, %s107
      %s109 = sphi 0, %s107
      %s110 = sphi 0, %s109
      %s124 = sphi 0, %s110
      %s128 = sphi 0, %s128
      %s130 = sphi 0, %s128
      %s131 = sphi 0, %s130
      %s145 = sphi 0, %s131
      %s149 = sphi 0, %s149
      %s151 = sphi 0, %s149
      %s152 = sphi 0, %s151
      %s166 = sphi 0, %s152
      %s170 = sphi 0, %s170
      %s172 = sphi 0, %s170
      %s173 = sphi 0, %s172
      %s187 = sphi 0, %s173
      %s191 = sphi 0, %s191
      %s193 = sphi 0, %s191
      %s194 = sphi 0, %s193
      %s208 = sphi 0, %s194
      %s212 = sphi 0, %s212
      %s214 = sphi 0, %s212
      %s215 = sphi 0, %s214
      %s229 = sphi 0, %s215
      %s233 = sphi 0, %s233
      %s235 = sphi 0, %s233
      %s236 = sphi 0, %s235
      %s250 = sphi 0, %s236
      %s254 = sphi 0, %s254
      %s256 = sphi 0, %s254
      %s257 = sphi 0, %s256
      %s271 = sphi 0, %s257
      %s275 = sphi 0, %s275
      %s277 = sphi 0, %s275
      %s278 = sphi 0, %s277
      %s292 = sphi 0, %s278
      %s296 = sphi 0, %s296
      %s298 = sphi 0, %s296
      %s299 = sphi 0, %s298
      %s313 = sphi 0, %s299
      %s317 = sphi 0, %s317
      %s319 = sphi 0, %s317
      %s320 = sphi 0, %s319
      %s334 = sphi 0, %s320
      %s338 = sphi 0, %s338
      %s340 = sphi 0, %s338
      %s341 = sphi 0, %s340
      %s355 = sphi 0, %s341
      %s359 = sphi 0, %s359
      %s361 = sphi 0, %s359
      %s362 = sphi 0, %s361
      %s376 = sphi 0, %s362
      %s380 = sphi 0, %s380
      %s382 = sphi 0, %s380
      %s383 = sphi 0, %s382
      %s397 = sphi 0, %s383
      %s403 = sphi 0, %s405
      %s406 = sphi 0, %s403
      %s407 = sphi 0, %s406
      %s423 = sphi 0, %s407
      %s429 = sphi 0, %s431
      %s432 = sphi 0, %s429
      %s433 = sphi 0, %s432
      %s449 = sphi 0, %s433
      %s455 = sphi 0, %s457
      %s458 = sphi 0, %s455
      %s459 = sphi 0, %s458
      %s475 = sphi 0, %s459
      %s481 = sphi 0, %s483
      %s484 = sphi 0, %s481
      %s485 = sphi 0, %s484
      %s501 = sphi 0, %s485
      %s507 = sphi 0, %s509
      %s510 = sphi 0, %s507
      %s511 = sphi 0, %s510
      %s527 = sphi 0, %s511
    $region4: #{tpu_custom_call.1} parent=1 // loop_header_branch
      %34 = sbr.rel (%p32) target = $region8
    $region5: #{tpu_custom_call.1} parent=1 // loop_body
      %s36 = ssub.s32 %s31, 1
      %s37 = ssub.s32 %s31, 2
      %s38 = sadd.s32 %s31, 1
      %s39 = ssub.s32 %s31, %s38
      %p40 = scmp.eq.s32.totalorder %s39, 0
      %s42 = sadd.s32 %s41, 1
      %s43 = scalar_select %p40, %s41, %s42
      %p46 = pneg %p40
      %p47 = scmp.eq.s32.totalorder %s31, 1
      %p48 = por %p46, %p47
      %p49 = scmp.ne.s32.totalorder %s41, %s44
      %p50 = scmp.eq.s32.totalorder %s31, 0
      %p51 = por %p49, %p50
      %p52 = scmp.ne.s32.totalorder %s41, %s44
      %p53 = scmp.eq.s32.totalorder %s36, 1
      %p54 = por %p52, %p53
      %p55 = scmp.ne.s32.totalorder %s44, %s45
      %p56 = scmp.eq.s32.totalorder %s36, 0
      %p57 = por %p55, %p56
      %p58 = scmp.ne.s32.totalorder %s44, %s45
      %p59 = scmp.eq.s32.totalorder %s37, 1
      %p60 = por %p58, %p59
      %p62 = scmp.ne.s32.totalorder %s45, %s61
      %p63 = scmp.eq.s32.totalorder %s37, 0
      %p64 = por %p62, %p63
      %s66 = sadd.s32 %s65, 1
      %p69 = scmp.eq.s32.totalorder %s31, 1
      %p70 = scmp.ne.s32.totalorder %s65, %s67
      %p71 = scmp.eq.s32.totalorder %s31, 0
      %p72 = por %p70, %p71
      %p73 = scmp.ne.s32.totalorder %s65, %s67
      %p74 = scmp.eq.s32.totalorder %s36, 1
      %p75 = por %p73, %p74
      %p76 = scmp.ne.s32.totalorder %s67, %s68
      %p77 = scmp.eq.s32.totalorder %s36, 0
      %p78 = por %p76, %p77
      %p79 = scmp.ne.s32.totalorder %s67, %s68
      %p80 = scmp.eq.s32.totalorder %s37, 1
      %p81 = por %p79, %p80
      %p83 = scmp.ne.s32.totalorder %s68, %s82
      %p84 = scmp.eq.s32.totalorder %s37, 0
      %p85 = por %p83, %p84
      %s87 = sadd.s32 %s86, 1
      %p90 = scmp.eq.s32.totalorder %s31, 1
      %p91 = scmp.ne.s32.totalorder %s86, %s88
      %p92 = scmp.eq.s32.totalorder %s31, 0
      %p93 = por %p91, %p92
      %p94 = scmp.ne.s32.totalorder %s86, %s88
      %p95 = scmp.eq.s32.totalorder %s36, 1
      %p96 = por %p94, %p95
      %p97 = scmp.ne.s32.totalorder %s88, %s89
      %p98 = scmp.eq.s32.totalorder %s36, 0
      %p99 = por %p97, %p98
      %p100 = scmp.ne.s32.totalorder %s88, %s89
      %p101 = scmp.eq.s32.totalorder %s37, 1
      %p102 = por %p100, %p101
      %p104 = scmp.ne.s32.totalorder %s89, %s103
      %p105 = scmp.eq.s32.totalorder %s37, 0
      %p106 = por %p104, %p105
      %s108 = sadd.s32 %s107, 1
      %p111 = scmp.eq.s32.totalorder %s31, 1
      %p112 = scmp.ne.s32.totalorder %s107, %s109
      %p113 = scmp.eq.s32.totalorder %s31, 0
      %p114 = por %p112, %p113
      %p115 = scmp.ne.s32.totalorder %s107, %s109
      %p116 = scmp.eq.s32.totalorder %s36, 1
      %p117 = por %p115, %p116
      %p118 = scmp.ne.s32.totalorder %s109, %s110
      %p119 = scmp.eq.s32.totalorder %s36, 0
      %p120 = por %p118, %p119
      %p121 = scmp.ne.s32.totalorder %s109, %s110
      %p122 = scmp.eq.s32.totalorder %s37, 1
      %p123 = por %p121, %p122
      %p125 = scmp.ne.s32.totalorder %s110, %s124
      %p126 = scmp.eq.s32.totalorder %s37, 0
      %p127 = por %p125, %p126
      %s129 = sadd.s32 %s128, 1
      %p132 = scmp.eq.s32.totalorder %s31, 1
      %p133 = scmp.ne.s32.totalorder %s128, %s130
      %p134 = scmp.eq.s32.totalorder %s31, 0
      %p135 = por %p133, %p134
      %p136 = scmp.ne.s32.totalorder %s128, %s130
      %p137 = scmp.eq.s32.totalorder %s36, 1
      %p138 = por %p136, %p137
      %p139 = scmp.ne.s32.totalorder %s130, %s131
      %p140 = scmp.eq.s32.totalorder %s36, 0
      %p141 = por %p139, %p140
      %p142 = scmp.ne.s32.totalorder %s130, %s131
      %p143 = scmp.eq.s32.totalorder %s37, 1
      %p144 = por %p142, %p143
      %p146 = scmp.ne.s32.totalorder %s131, %s145
      %p147 = scmp.eq.s32.totalorder %s37, 0
      %p148 = por %p146, %p147
      %s150 = sadd.s32 %s149, 1
      %p153 = scmp.eq.s32.totalorder %s31, 1
      %p154 = scmp.ne.s32.totalorder %s149, %s151
      %p155 = scmp.eq.s32.totalorder %s31, 0
      %p156 = por %p154, %p155
      %p157 = scmp.ne.s32.totalorder %s149, %s151
      %p158 = scmp.eq.s32.totalorder %s36, 1
      %p159 = por %p157, %p158
      %p160 = scmp.ne.s32.totalorder %s151, %s152
      %p161 = scmp.eq.s32.totalorder %s36, 0
      %p162 = por %p160, %p161
      %p163 = scmp.ne.s32.totalorder %s151, %s152
      %p164 = scmp.eq.s32.totalorder %s37, 1
      %p165 = por %p163, %p164
      %p167 = scmp.ne.s32.totalorder %s152, %s166
      %p168 = scmp.eq.s32.totalorder %s37, 0
      %p169 = por %p167, %p168
      %s171 = sadd.s32 %s170, 1
      %p174 = scmp.eq.s32.totalorder %s31, 1
      %p175 = scmp.ne.s32.totalorder %s170, %s172
      %p176 = scmp.eq.s32.totalorder %s31, 0
      %p177 = por %p175, %p176
      %p178 = scmp.ne.s32.totalorder %s170, %s172
      %p179 = scmp.eq.s32.totalorder %s36, 1
      %p180 = por %p178, %p179
      %p181 = scmp.ne.s32.totalorder %s172, %s173
      %p182 = scmp.eq.s32.totalorder %s36, 0
      %p183 = por %p181, %p182
      %p184 = scmp.ne.s32.totalorder %s172, %s173
      %p185 = scmp.eq.s32.totalorder %s37, 1
      %p186 = por %p184, %p185
      %p188 = scmp.ne.s32.totalorder %s173, %s187
      %p189 = scmp.eq.s32.totalorder %s37, 0
      %p190 = por %p188, %p189
      %s192 = sadd.s32 %s191, 1
      %p195 = scmp.eq.s32.totalorder %s31, 1
      %p196 = scmp.ne.s32.totalorder %s191, %s193
      %p197 = scmp.eq.s32.totalorder %s31, 0
      %p198 = por %p196, %p197
      %p199 = scmp.ne.s32.totalorder %s191, %s193
      %p200 = scmp.eq.s32.totalorder %s36, 1
      %p201 = por %p199, %p200
      %p202 = scmp.ne.s32.totalorder %s193, %s194
      %p203 = scmp.eq.s32.totalorder %s36, 0
      %p204 = por %p202, %p203
      %p205 = scmp.ne.s32.totalorder %s193, %s194
      %p206 = scmp.eq.s32.totalorder %s37, 1
      %p207 = por %p205, %p206
      %p209 = scmp.ne.s32.totalorder %s194, %s208
      %p210 = scmp.eq.s32.totalorder %s37, 0
      %p211 = por %p209, %p210
      %s213 = sadd.s32 %s212, 1
      %p216 = scmp.eq.s32.totalorder %s31, 1
      %p217 = scmp.ne.s32.totalorder %s212, %s214
      %p218 = scmp.eq.s32.totalorder %s31, 0
      %p219 = por %p217, %p218
      %p220 = scmp.ne.s32.totalorder %s212, %s214
      %p221 = scmp.eq.s32.totalorder %s36, 1
      %p222 = por %p220, %p221
      %p223 = scmp.ne.s32.totalorder %s214, %s215
      %p224 = scmp.eq.s32.totalorder %s36, 0
      %p225 = por %p223, %p224
      %p226 = scmp.ne.s32.totalorder %s214, %s215
      %p227 = scmp.eq.s32.totalorder %s37, 1
      %p228 = por %p226, %p227
      %p230 = scmp.ne.s32.totalorder %s215, %s229
      %p231 = scmp.eq.s32.totalorder %s37, 0
      %p232 = por %p230, %p231
      %s234 = sadd.s32 %s233, 1
      %p237 = scmp.eq.s32.totalorder %s31, 1
      %p238 = scmp.ne.s32.totalorder %s233, %s235
      %p239 = scmp.eq.s32.totalorder %s31, 0
      %p240 = por %p238, %p239
      %p241 = scmp.ne.s32.totalorder %s233, %s235
      %p242 = scmp.eq.s32.totalorder %s36, 1
      %p243 = por %p241, %p242
      %p244 = scmp.ne.s32.totalorder %s235, %s236
      %p245 = scmp.eq.s32.totalorder %s36, 0
      %p246 = por %p244, %p245
      %p247 = scmp.ne.s32.totalorder %s235, %s236
      %p248 = scmp.eq.s32.totalorder %s37, 1
      %p249 = por %p247, %p248
      %p251 = scmp.ne.s32.totalorder %s236, %s250
      %p252 = scmp.eq.s32.totalorder %s37, 0
      %p253 = por %p251, %p252
      %s255 = sadd.s32 %s254, 1
      %p258 = scmp.eq.s32.totalorder %s31, 1
      %p259 = scmp.ne.s32.totalorder %s254, %s256
      %p260 = scmp.eq.s32.totalorder %s31, 0
      %p261 = por %p259, %p260
      %p262 = scmp.ne.s32.totalorder %s254, %s256
      %p263 = scmp.eq.s32.totalorder %s36, 1
      %p264 = por %p262, %p263
      %p265 = scmp.ne.s32.totalorder %s256, %s257
      %p266 = scmp.eq.s32.totalorder %s36, 0
      %p267 = por %p265, %p266
      %p268 = scmp.ne.s32.totalorder %s256, %s257
      %p269 = scmp.eq.s32.totalorder %s37, 1
      %p270 = por %p268, %p269
      %p272 = scmp.ne.s32.totalorder %s257, %s271
      %p273 = scmp.eq.s32.totalorder %s37, 0
      %p274 = por %p272, %p273
      %s276 = sadd.s32 %s275, 1
      %p279 = scmp.eq.s32.totalorder %s31, 1
      %p280 = scmp.ne.s32.totalorder %s275, %s277
      %p281 = scmp.eq.s32.totalorder %s31, 0
      %p282 = por %p280, %p281
      %p283 = scmp.ne.s32.totalorder %s275, %s277
      %p284 = scmp.eq.s32.totalorder %s36, 1
      %p285 = por %p283, %p284
      %p286 = scmp.ne.s32.totalorder %s277, %s278
      %p287 = scmp.eq.s32.totalorder %s36, 0
      %p288 = por %p286, %p287
      %p289 = scmp.ne.s32.totalorder %s277, %s278
      %p290 = scmp.eq.s32.totalorder %s37, 1
      %p291 = por %p289, %p290
      %p293 = scmp.ne.s32.totalorder %s278, %s292
      %p294 = scmp.eq.s32.totalorder %s37, 0
      %p295 = por %p293, %p294
      %s297 = sadd.s32 %s296, 1
      %p300 = scmp.eq.s32.totalorder %s31, 1
      %p301 = scmp.ne.s32.totalorder %s296, %s298
      %p302 = scmp.eq.s32.totalorder %s31, 0
      %p303 = por %p301, %p302
      %p304 = scmp.ne.s32.totalorder %s296, %s298
      %p305 = scmp.eq.s32.totalorder %s36, 1
      %p306 = por %p304, %p305
      %p307 = scmp.ne.s32.totalorder %s298, %s299
      %p308 = scmp.eq.s32.totalorder %s36, 0
      %p309 = por %p307, %p308
      %p310 = scmp.ne.s32.totalorder %s298, %s299
      %p311 = scmp.eq.s32.totalorder %s37, 1
      %p312 = por %p310, %p311
      %p314 = scmp.ne.s32.totalorder %s299, %s313
      %p315 = scmp.eq.s32.totalorder %s37, 0
      %p316 = por %p314, %p315
      %s318 = sadd.s32 %s317, 1
      %p321 = scmp.eq.s32.totalorder %s31, 1
      %p322 = scmp.ne.s32.totalorder %s317, %s319
      %p323 = scmp.eq.s32.totalorder %s31, 0
      %p324 = por %p322, %p323
      %p325 = scmp.ne.s32.totalorder %s317, %s319
      %p326 = scmp.eq.s32.totalorder %s36, 1
      %p327 = por %p325, %p326
      %p328 = scmp.ne.s32.totalorder %s319, %s320
      %p329 = scmp.eq.s32.totalorder %s36, 0
      %p330 = por %p328, %p329
      %p331 = scmp.ne.s32.totalorder %s319, %s320
      %p332 = scmp.eq.s32.totalorder %s37, 1
      %p333 = por %p331, %p332
      %p335 = scmp.ne.s32.totalorder %s320, %s334
      %p336 = scmp.eq.s32.totalorder %s37, 0
      %p337 = por %p335, %p336
      %s339 = sadd.s32 %s338, 1
      %p342 = scmp.eq.s32.totalorder %s31, 1
      %p343 = scmp.ne.s32.totalorder %s338, %s340
      %p344 = scmp.eq.s32.totalorder %s31, 0
      %p345 = por %p343, %p344
      %p346 = scmp.ne.s32.totalorder %s338, %s340
      %p347 = scmp.eq.s32.totalorder %s36, 1
      %p348 = por %p346, %p347
      %p349 = scmp.ne.s32.totalorder %s340, %s341
      %p350 = scmp.eq.s32.totalorder %s36, 0
      %p351 = por %p349, %p350
      %p352 = scmp.ne.s32.totalorder %s340, %s341
      %p353 = scmp.eq.s32.totalorder %s37, 1
      %p354 = por %p352, %p353
      %p356 = scmp.ne.s32.totalorder %s341, %s355
      %p357 = scmp.eq.s32.totalorder %s37, 0
      %p358 = por %p356, %p357
      %s360 = sadd.s32 %s359, 1
      %p363 = scmp.eq.s32.totalorder %s31, 1
      %p364 = scmp.ne.s32.totalorder %s359, %s361
      %p365 = scmp.eq.s32.totalorder %s31, 0
      %p366 = por %p364, %p365
      %p367 = scmp.ne.s32.totalorder %s359, %s361
      %p368 = scmp.eq.s32.totalorder %s36, 1
      %p369 = por %p367, %p368
      %p370 = scmp.ne.s32.totalorder %s361, %s362
      %p371 = scmp.eq.s32.totalorder %s36, 0
      %p372 = por %p370, %p371
      %p373 = scmp.ne.s32.totalorder %s361, %s362
      %p374 = scmp.eq.s32.totalorder %s37, 1
      %p375 = por %p373, %p374
      %p377 = scmp.ne.s32.totalorder %s362, %s376
      %p378 = scmp.eq.s32.totalorder %s37, 0
      %p379 = por %p377, %p378
      %s381 = sadd.s32 %s380, 1
      %p384 = scmp.eq.s32.totalorder %s31, 1
      %p385 = scmp.ne.s32.totalorder %s380, %s382
      %p386 = scmp.eq.s32.totalorder %s31, 0
      %p387 = por %p385, %p386
      %p388 = scmp.ne.s32.totalorder %s380, %s382
      %p389 = scmp.eq.s32.totalorder %s36, 1
      %p390 = por %p388, %p389
      %p391 = scmp.ne.s32.totalorder %s382, %s383
      %p392 = scmp.eq.s32.totalorder %s36, 0
      %p393 = por %p391, %p392
      %p394 = scmp.ne.s32.totalorder %s382, %s383
      %p395 = scmp.eq.s32.totalorder %s37, 1
      %p396 = por %p394, %p395
      %p398 = scmp.ne.s32.totalorder %s383, %s397
      %p399 = scmp.eq.s32.totalorder %s37, 0
      %p400 = por %p398, %p399
      %s401 = ssub.s32 %s31, %s38
      %p402 = scmp.eq.s32.totalorder %s401, 0
      %s404 = sadd.s32 %s403, 1
      %s405 = scalar_select %p402, %s403, %s404
      %p408 = pneg %p402
      %p409 = scmp.eq.s32.totalorder %s31, 1
      %p410 = por %p408, %p409
      %p411 = scmp.ne.s32.totalorder %s403, %s406
      %p412 = scmp.eq.s32.totalorder %s31, 0
      %p413 = por %p411, %p412
      %p414 = scmp.ne.s32.totalorder %s403, %s406
      %p415 = scmp.eq.s32.totalorder %s36, 1
      %p416 = por %p414, %p415
      %p417 = scmp.ne.s32.totalorder %s406, %s407
      %p418 = scmp.eq.s32.totalorder %s36, 0
      %p419 = por %p417, %p418
      %p420 = scmp.ne.s32.totalorder %s406, %s407
      %p421 = scmp.eq.s32.totalorder %s37, 1
      %p422 = por %p420, %p421
      %p424 = scmp.ne.s32.totalorder %s407, %s423
      %p425 = scmp.eq.s32.totalorder %s37, 0
      %p426 = por %p424, %p425
      %s427 = ssub.s32 %s31, %s38
      %p428 = scmp.eq.s32.totalorder %s427, 0
      %s430 = sadd.s32 %s429, 1
      %s431 = scalar_select %p428, %s429, %s430
      %p434 = pneg %p428
      %p435 = scmp.eq.s32.totalorder %s31, 1
      %p436 = por %p434, %p435
      %p437 = scmp.ne.s32.totalorder %s429, %s432
      %p438 = scmp.eq.s32.totalorder %s31, 0
      %p439 = por %p437, %p438
      %p440 = scmp.ne.s32.totalorder %s429, %s432
      %p441 = scmp.eq.s32.totalorder %s36, 1
      %p442 = por %p440, %p441
      %p443 = scmp.ne.s32.totalorder %s432, %s433
      %p444 = scmp.eq.s32.totalorder %s36, 0
      %p445 = por %p443, %p444
      %p446 = scmp.ne.s32.totalorder %s432, %s433
      %p447 = scmp.eq.s32.totalorder %s37, 1
      %p448 = por %p446, %p447
      %p450 = scmp.ne.s32.totalorder %s433, %s449
      %p451 = scmp.eq.s32.totalorder %s37, 0
      %p452 = por %p450, %p451
      %s453 = ssub.s32 %s31, %s38
      %p454 = scmp.eq.s32.totalorder %s453, 0
      %s456 = sadd.s32 %s455, 1
      %s457 = scalar_select %p454, %s455, %s456
      %p460 = pneg %p454
      %p461 = scmp.eq.s32.totalorder %s31, 1
      %p462 = por %p460, %p461
      %p463 = scmp.ne.s32.totalorder %s455, %s458
      %p464 = scmp.eq.s32.totalorder %s31, 0
      %p465 = por %p463, %p464
      %p466 = scmp.ne.s32.totalorder %s455, %s458
      %p467 = scmp.eq.s32.totalorder %s36, 1
      %p468 = por %p466, %p467
      %p469 = scmp.ne.s32.totalorder %s458, %s459
      %p470 = scmp.eq.s32.totalorder %s36, 0
      %p471 = por %p469, %p470
      %p472 = scmp.ne.s32.totalorder %s458, %s459
      %p473 = scmp.eq.s32.totalorder %s37, 1
      %p474 = por %p472, %p473
      %p476 = scmp.ne.s32.totalorder %s459, %s475
      %p477 = scmp.eq.s32.totalorder %s37, 0
      %p478 = por %p476, %p477
      %s479 = ssub.s32 %s31, %s38
      %p480 = scmp.eq.s32.totalorder %s479, 0
      %s482 = sadd.s32 %s481, 1
      %s483 = scalar_select %p480, %s481, %s482
      %p486 = pneg %p480
      %p487 = scmp.eq.s32.totalorder %s31, 1
      %p488 = por %p486, %p487
      %p489 = scmp.ne.s32.totalorder %s481, %s484
      %p490 = scmp.eq.s32.totalorder %s31, 0
      %p491 = por %p489, %p490
      %p492 = scmp.ne.s32.totalorder %s481, %s484
      %p493 = scmp.eq.s32.totalorder %s36, 1
      %p494 = por %p492, %p493
      %p495 = scmp.ne.s32.totalorder %s484, %s485
      %p496 = scmp.eq.s32.totalorder %s36, 0
      %p497 = por %p495, %p496
      %p498 = scmp.ne.s32.totalorder %s484, %s485
      %p499 = scmp.eq.s32.totalorder %s37, 1
      %p500 = por %p498, %p499
      %p502 = scmp.ne.s32.totalorder %s485, %s501
      %p503 = scmp.eq.s32.totalorder %s37, 0
      %p504 = por %p502, %p503
      %s505 = ssub.s32 %s31, %s38
      %p506 = scmp.eq.s32.totalorder %s505, 0
      %s508 = sadd.s32 %s507, 1
      %s509 = scalar_select %p506, %s507, %s508
      %p512 = pneg %p506
      %p513 = scmp.eq.s32.totalorder %s31, 1
      %p514 = por %p512, %p513
      %p515 = scmp.ne.s32.totalorder %s507, %s510
      %p516 = scmp.eq.s32.totalorder %s31, 0
      %p517 = por %p515, %p516
      %p518 = scmp.ne.s32.totalorder %s507, %s510
      %p519 = scmp.eq.s32.totalorder %s36, 1
      %p520 = por %p518, %p519
      %p521 = scmp.ne.s32.totalorder %s510, %s511
      %p522 = scmp.eq.s32.totalorder %s36, 0
      %p523 = por %p521, %p522
      %p524 = scmp.ne.s32.totalorder %s510, %s511
      %p525 = scmp.eq.s32.totalorder %s37, 1
      %p526 = por %p524, %p525
      %p528 = scmp.ne.s32.totalorder %s511, %s527
      %p529 = scmp.eq.s32.totalorder %s37, 0
      %p530 = por %p528, %p529
      %p531 = scmp.le.s32.totalorder 1, %s31
      %p532 = scmp.lt.s32.totalorder %s31, 3
      %p533 = pnand %p531, %p532
      %p534 = pneg %p533
      // Predicated region
      $region9: #{tpu_custom_call.1} parent=5 // pred_check
        _
      $region10: #{tpu_custom_call.1} parent=5 // pred_check_branch
        %536 = sbr.rel (%p533) target = $region12
      $region11: #{tpu_custom_call.1} parent=5 // pred_region
        %s537 = ssub.s32 %s31, 1
        // Predicated region
        $region13: #{tpu_custom_call.1} parent=11 // pred_check
          %p538 = pneg %p78
        $region14: #{tpu_custom_call.1} parent=11 // pred_check_branch
          %540 = sbr.rel (%p538) target = $region16
        $region15: #{tpu_custom_call.1} parent=11 // pred_region
          _
        $region16: #{tpu_custom_call.1} parent=11 // pred_fallthru
          _
        // Predicated region
        $region17: #{tpu_custom_call.1} parent=11 // pred_check
          %p541 = pneg %p99
        $region18: #{tpu_custom_call.1} parent=11 // pred_check_branch
          %543 = sbr.rel (%p541) target = $region20
        $region19: #{tpu_custom_call.1} parent=11 // pred_region
          _
        $region20: #{tpu_custom_call.1} parent=11 // pred_fallthru
          _
        // Predicated region
        $region21: #{tpu_custom_call.1} parent=11 // pred_check
          %p544 = pneg %p120
        $region22: #{tpu_custom_call.1} parent=11 // pred_check_branch
          %546 = sbr.rel (%p544) target = $region24
        $region23: #{tpu_custom_call.1} parent=11 // pred_region
          _
        $region24: #{tpu_custom_call.1} parent=11 // pred_fallthru
          _
        // Predicated region
        $region25: #{tpu_custom_call.1} parent=11 // pred_check
          %p547 = pneg %p141
        $region26: #{tpu_custom_call.1} parent=11 // pred_check_branch
          %549 = sbr.rel (%p547) target = $region28
        $region27: #{tpu_custom_call.1} parent=11 // pred_region
          _
        $region28: #{tpu_custom_call.1} parent=11 // pred_fallthru
          _
        // Predicated region
        $region29: #{tpu_custom_call.1} parent=11 // pred_check
          %p550 = pneg %p162
        $region30: #{tpu_custom_call.1} parent=11 // pred_check_branch
          %552 = sbr.rel (%p550) target = $region32
        $region31: #{tpu_custom_call.1} parent=11 // pred_region
          _
        $region32: #{tpu_custom_call.1} parent=11 // pred_fallthru
          _
        // Predicated region
        $region33: #{tpu_custom_call.1} parent=11 // pred_check
          %p553 = pneg %p183
        $region34: #{tpu_custom_call.1} parent=11 // pred_check_branch
          %555 = sbr.rel (%p553) target = $region36
        $region35: #{tpu_custom_call.1} parent=11 // pred_region
          _
        $region36: #{tpu_custom_call.1} parent=11 // pred_fallthru
          _
        // Predicated region
        $region37: #{tpu_custom_call.1} parent=11 // pred_check
          %p556 = pneg %p204
        $region38: #{tpu_custom_call.1} parent=11 // pred_check_branch
          %558 = sbr.rel (%p556) target = $region40
        $region39: #{tpu_custom_call.1} parent=11 // pred_region
          _
        $region40: #{tpu_custom_call.1} parent=11 // pred_fallthru
          _
        // Predicated region
        $region41: #{tpu_custom_call.1} parent=11 // pred_check
          %p559 = pneg %p225
        $region42: #{tpu_custom_call.1} parent=11 // pred_check_branch
          %561 = sbr.rel (%p559) target = $region44
        $region43: #{tpu_custom_call.1} parent=11 // pred_region
          _
        $region44: #{tpu_custom_call.1} parent=11 // pred_fallthru
          _
        // Predicated region
        $region45: #{tpu_custom_call.1} parent=11 // pred_check
          %p562 = pneg %p246
        $region46: #{tpu_custom_call.1} parent=11 // pred_check_branch
          %564 = sbr.rel (%p562) target = $region48
        $region47: #{tpu_custom_call.1} parent=11 // pred_region
          _
        $region48: #{tpu_custom_call.1} parent=11 // pred_fallthru
          _
        // Predicated region
        $region49: #{tpu_custom_call.1} parent=11 // pred_check
          %p565 = pneg %p267
        $region50: #{tpu_custom_call.1} parent=11 // pred_check_branch
          %567 = sbr.rel (%p565) target = $region52
        $region51: #{tpu_custom_call.1} parent=11 // pred_region
          _
        $region52: #{tpu_custom_call.1} parent=11 // pred_fallthru
          _
        // Predicated region
        $region53: #{tpu_custom_call.1} parent=11 // pred_check
          %p568 = pneg %p288
        $region54: #{tpu_custom_call.1} parent=11 // pred_check_branch
          %570 = sbr.rel (%p568) target = $region56
        $region55: #{tpu_custom_call.1} parent=11 // pred_region
          _
        $region56: #{tpu_custom_call.1} parent=11 // pred_fallthru
          _
        // Predicated region
        $region57: #{tpu_custom_call.1} parent=11 // pred_check
          %p571 = pneg %p309
        $region58: #{tpu_custom_call.1} parent=11 // pred_check_branch
          %573 = sbr.rel (%p571) target = $region60
        $region59: #{tpu_custom_call.1} parent=11 // pred_region
          _
        $region60: #{tpu_custom_call.1} parent=11 // pred_fallthru
          _
        // Predicated region
        $region61: #{tpu_custom_call.1} parent=11 // pred_check
          %p574 = pneg %p330
        $region62: #{tpu_custom_call.1} parent=11 // pred_check_branch
          %576 = sbr.rel (%p574) target = $region64
        $region63: #{tpu_custom_call.1} parent=11 // pred_region
          _
        $region64: #{tpu_custom_call.1} parent=11 // pred_fallthru
          _
        // Predicated region
        $region65: #{tpu_custom_call.1} parent=11 // pred_check
          %p577 = pneg %p351
        $region66: #{tpu_custom_call.1} parent=11 // pred_check_branch
          %579 = sbr.rel (%p577) target = $region68
        $region67: #{tpu_custom_call.1} parent=11 // pred_region
          _
        $region68: #{tpu_custom_call.1} parent=11 // pred_fallthru
          _
        // Predicated region
        $region69: #{tpu_custom_call.1} parent=11 // pred_check
          %p580 = pneg %p372
        $region70: #{tpu_custom_call.1} parent=11 // pred_check_branch
          %582 = sbr.rel (%p580) target = $region72
        $region71: #{tpu_custom_call.1} parent=11 // pred_region
          _
        $region72: #{tpu_custom_call.1} parent=11 // pred_fallthru
          _
        // Predicated region
        $region73: #{tpu_custom_call.1} parent=11 // pred_check
          %p583 = pneg %p393
        $region74: #{tpu_custom_call.1} parent=11 // pred_check_branch
          %585 = sbr.rel (%p583) target = $region76
        $region75: #{tpu_custom_call.1} parent=11 // pred_region
          _
        $region76: #{tpu_custom_call.1} parent=11 // pred_fallthru
          _
      $region12: #{tpu_custom_call.1} parent=5 // pred_fallthru
        _
      %p586 = scmp.lt.s32.totalorder %s31, 2
      // Predicated region
      $region77: #{tpu_custom_call.1} parent=5 // pred_check
        %p587 = pneg %p586
      $region78: #{tpu_custom_call.1} parent=5 // pred_check_branch
        %589 = sbr.rel (%p587) target = $region80
      $region79: #{tpu_custom_call.1} parent=5 // pred_region
        // Predicated region
        $region81: #{tpu_custom_call.1} parent=79 // pred_check
          %p590 = pneg %p51
        $region82: #{tpu_custom_call.1} parent=79 // pred_check_branch
          %592 = sbr.rel (%p590) target = $region84
        $region83: #{tpu_custom_call.1} parent=79 // pred_region
          %s593 = smul.u32 20, %s31
          %s594 = ssub.s32 38, %s593
          %p595 = scmp.lt.s32.totalorder %s594, 20
          %s596 = scalar_select %p595, %s594, 20
          %s597 = smul.u32 128, %s596
          %p598 = scmp.lt.s32.totalorder %s593, 37
          %s599 = scalar_select %p598, %s593, 37
          %s600 = smul.addr %s599, 8
          %s601 = scalar_lea.vmem %s0, %s600
          %s602 = smul.u32 20, %s31
          %s603 = ssub.s32 38, %s602
          %p604 = scmp.lt.s32.totalorder %s603, 20
          %s605 = scalar_select %p604, %s603, 20
          %s606 = smul.u32 128, %s605
        $region84: #{tpu_custom_call.1} parent=79 // pred_fallthru
          _
      $region80: #{tpu_custom_call.1} parent=5 // pred_fallthru
        _
      %p607 = scmp.le.s32.totalorder 1, %s31
      %p608 = scmp.lt.s32.totalorder %s31, 3
      %p609 = pnand %p607, %p608
      %p610 = pneg %p609
      // Predicated region
      $region85: #{tpu_custom_call.1} parent=5 // pred_check
        _
      $region86: #{tpu_custom_call.1} parent=5 // pred_check_branch
        %612 = sbr.rel (%p609) target = $region88
      $region87: #{tpu_custom_call.1} parent=5 // pred_region
        %s613 = ssub.s32 %s31, 1
        %s614 = smul.u32 20, %s36
        %s615 = ssub.s32 38, %s614
        %p616 = scmp.lt.s32.totalorder %s615, 20
        %s617 = scalar_select %p616, %s615, 20
        %s618 = smul.u32 128, %s617
        %p619 = scmp.lt.s32.totalorder %s614, 37
        %s620 = scalar_select %p619, %s614, 37
        %s621 = smul.addr %s620, 8
        %s622 = scalar_lea.vmem %s0, %s621
        %p623 = pneg %p57
        %p624 = pneg %p54
        %p625 = pneg %p78
        %p626 = pneg %p75
        %p627 = pneg %p99
        %p628 = pneg %p96
        %p629 = pneg %p120
        %p630 = pneg %p117
        %p631 = pneg %p141
        %p632 = pneg %p138
        %p633 = pneg %p162
        %p634 = pneg %p159
        %p635 = pneg %p183
        %p636 = pneg %p180
        %p637 = pneg %p204
        %p638 = pneg %p201
        %p639 = pneg %p225
        %p640 = pneg %p222
        %p641 = pneg %p246
        %p642 = pneg %p243
        %p643 = pneg %p267
        %p644 = pneg %p264
        %p645 = pneg %p288
        %p646 = pneg %p285
        %p647 = pneg %p309
        %p648 = pneg %p306
        %p649 = pneg %p330
        %p650 = pneg %p327
        %p651 = pneg %p351
        %p652 = pneg %p348
        %p653 = pneg %p372
        %p654 = pneg %p369
        %p655 = pneg %p393
        %p656 = pneg %p390
        %p657 = pneg %p419
        %p658 = pneg %p416
        %s659 = sand.u32 %s406, 1
        %s660 = sand.u32 %s406, 1
        %s661 = smul.addr %s660, 160
        %s662 = scalar_lea.vmem [#allocation2], %s661
        %p663 = pneg %p445
        %p664 = pneg %p442
        %s665 = sand.u32 %s432, 1
        %s666 = scalar_lea.sflag [#allocation4], %s665
        %s667 = sand.u32 %s432, 1
        %s668 = smul.addr %s667, 160
        %s669 = scalar_lea.vmem [#allocation3], %s668
        %p670 = pneg %p471
        %p671 = pneg %p468
        %s672 = sand.u32 %s458, 1
        %s673 = sand.u32 %s458, 1
        %s674 = smul.addr %s673, 160
        %s675 = scalar_lea.vmem [#allocation5], %s674
        %p676 = pneg %p497
        %p677 = pneg %p494
        %s678 = sand.u32 %s484, 1
        %s679 = sand.u32 %s484, 1
        %s680 = smul.addr %s679, 160
        %s681 = scalar_lea.vmem [#allocation6], %s680
        %p682 = pneg %p523
        %p683 = pneg %p520
        %s684 = sand.u32 %s510, 1
        %s685 = sand.u32 %s510, 1
        %s686 = smul.addr %s685, 160
        %s687 = scalar_lea.vmem [#allocation7], %s686
        %s688 = smul.u32 20, %s36
        %s689 = ssub.s32 38, %s688
        %p690 = scmp.lt.s32.totalorder %s689, 20
        %s691 = scalar_select %p690, %s689, 20
        %s692 = smul.u32 128, %s691
        %p693 = scmp.lt.s32.totalorder %s688, 37
        %s694 = scalar_select %p693, %s688, 37
        %s695 = smul.addr %s694, 8
        %s696 = scalar_lea.vmem %s0, %s695
        %s697 = smul.u32 20, %s36
        %s698 = ssub.s32 38, %s697
        %p699 = scmp.lt.s32.totalorder %s698, 20
        %s700 = scalar_select %p699, %s698, 20
        %s701 = smul.u32 128, %s700
        %s702 = smul.u32 20, %s36
        %s703 = ssub.s32 38, %s702
        %p704 = scmp.lt.s32.totalorder %s703, 20
        %s705 = scalar_select %p704, %s703, 20
        %s706 = smul.u32 128, %s705
        %s707 = smul.u32 20, %s36
        %s708 = ssub.s32 38, %s707
        %p709 = scmp.lt.s32.totalorder %s708, 20
        %s710 = scalar_select %p709, %s708, 20
        %s711 = smul.u32 128, %s710
        %s712 = smul.u32 20, %s36
        %s713 = ssub.s32 38, %s712
        %p714 = scmp.lt.s32.totalorder %s713, 20
        %s715 = scalar_select %p714, %s713, 20
        %s716 = smul.u32 128, %s715
        %s717 = smul.u32 20, %s36
        %s718 = ssub.s32 38, %s717
        %p719 = scmp.lt.s32.totalorder %s718, 20
        %s720 = scalar_select %p719, %s718, 20
        %s721 = smul.u32 128, %s720
        %s722 = smul.u32 20, %s36
        %s723 = ssub.s32 38, %s722
        %p724 = scmp.lt.s32.totalorder %s723, 20
        %s725 = scalar_select %p724, %s723, 20
        %s726 = smul.u32 128, %s725
        %v728 = vld [vmem:[%s696] sm:$0xff]
        %v729 = vld [vmem:[%s696 + $0x8] sm:$0xff]
        %v730 = vld [vmem:[%s696 + $0x10] sm:$0xff]
        %v731 = vld [vmem:[%s696 + $0x18] sm:$0xff]
        %v732 = vld [vmem:[%s696 + $0x20] sm:$0xff]
        %v733 = vld [vmem:[%s696 + $0x28] sm:$0xff]
        %v734 = vld [vmem:[%s696 + $0x30] sm:$0xff]
        %v735 = vld [vmem:[%s696 + $0x38] sm:$0xff]
        %v736 = vld [vmem:[%s696 + $0x40] sm:$0xff]
        %v737 = vld [vmem:[%s696 + $0x48] sm:$0xff]
        %v738 = vld [vmem:[%s696 + $0x50] sm:$0xff]
        %v739 = vld [vmem:[%s696 + $0x58] sm:$0xff]
        %v740 = vld [vmem:[%s696 + $0x60] sm:$0xff]
        %v741 = vld [vmem:[%s696 + $0x68] sm:$0xff]
        %v742 = vld [vmem:[%s696 + $0x70] sm:$0xff]
        %v743 = vld [vmem:[%s696 + $0x78] sm:$0xff]
        %v744 = vld [vmem:[%s696 + $0x80] sm:$0xff]
        %v745 = vld [vmem:[%s696 + $0x88] sm:$0xff]
        %v746 = vld [vmem:[%s696 + $0x90] sm:$0xff]
        %v747 = vld [vmem:[%s696 + $0x98] sm:$0xff]
        %v748 = vpack.c.bf16 %v729, %v728
        %v749 = vpack.c.bf16 %v731, %v730
        %v750 = vpack.c.bf16 %v733, %v732
        %v751 = vpack.c.bf16 %v735, %v734
        %v752 = vpack.c.bf16 %v737, %v736
        %v753 = vpack.c.bf16 %v739, %v738
        %v754 = vpack.c.bf16 %v741, %v740
        %v755 = vpack.c.bf16 %v743, %v742
        %v756 = vpack.c.bf16 %v745, %v744
        %v757 = vpack.c.bf16 %v747, %v746
        %v758 = vld [vmem:[%s1] sm:$0xf]
        %v759 = vld [vmem:[%s1 + $0x4] sm:$0xf]
        %v760 = vld [vmem:[%s1 + $0x8] sm:$0xf]
        %v761 = vld [vmem:[%s1 + $0xc] sm:$0xf]
        %v762 = vld [vmem:[%s2] sm:$0x1]
        %v764 = vlaneseq
        %v765 = vshrl.u32 %v764, 7
        %v766 = vsub.s32 0, %v765
        %v767 = vrot.slane %v762, %v766
        %v773 = vunpack.c.l.b16 %v758
        %v774 = vunpack.c.l.b16 %v759
        %v775 = vunpack.c.l.b16 %v760
        %v776 = vunpack.c.l.b16 %v761
        %v777 = vpack.c.b16 %v774, %v773
        %v778 = vpack.c.b16 %v776, %v775
        %vm781 = vcmask 261120
        %v783 = vsel %vm781, %v748, 0
        %v786 = vsel %vm781, %v749, 0
        %v789 = vsel %vm781, %v750, 0
        %v792 = vsel %vm781, %v751, 0
        %v795 = vsel %vm781, %v752, 0
        %v798 = vsel %vm781, %v753, 0
        %v801 = vsel %vm781, %v754, 0
        %v804 = vsel %vm781, %v755, 0
        %v807 = vsel %vm781, %v756, 0
        %v810 = vsel %vm781, %v757, 0
        %812 = vmatprep.subr.bf16.mxu0 0
        %813 = vmatpush1.bf16.msra.mxu0 %v777
        %814 = vmatprep.subr.bf16.mxu0 0
        %815 = vmatpush1.bf16.msra.mxu0 %v778
        %816 = vmatprep.subr.bf16.mxu0 0
        %817 = vmatpush1.bf16.msra.mxu0 0
        %818 = vmatprep.subr.bf16.mxu0 0
        %819 = vmatpush1.bf16.msra.mxu0 0
        %820 = vmatprep.subr.bf16.mxu0 0
        %821 = vmatpush1.bf16.msra.mxu0 0
        %822 = vmatprep.subr.bf16.mxu0 0
        %823 = vmatpush1.bf16.msra.mxu0 0
        %824 = vmatprep.subr.bf16.mxu0 0
        %825 = vmatpush1.bf16.msra.mxu0 0
        %826 = vmatprep.subr.bf16.mxu0 0
        %827 = vmatpush1.bf16.msra.mxu0 0
        %828 = vmatprep.subr.bf16.mxu0 0
        %829 = vmatpush1.bf16.msra.mxu0 0
        %830 = vmatprep.subr.bf16.mxu0 0
        %831 = vmatpush1.bf16.msra.mxu0 0
        %832 = vmatprep.subr.bf16.mxu0 0
        %833 = vmatpush1.bf16.msra.mxu0 0
        %834 = vmatprep.subr.bf16.mxu0 0
        %835 = vmatpush1.bf16.msra.mxu0 0
        %836 = vmatprep.subr.bf16.mxu0 0
        %837 = vmatpush1.bf16.msra.mxu0 0
        %838 = vmatprep.subr.bf16.mxu0 0
        %839 = vmatpush1.bf16.msra.mxu0 0
        %840 = vmatprep.subr.bf16.mxu0 0
        %841 = vmatpush1.bf16.msra.mxu0 0
        %842 = vmatprep.subr.bf16.mxu0 0
        %843 = vmatpush1.bf16.msra.mxu0 0
        %844 = vmatprep.mubr.bf16.mxu0 0
        %845 = vmatmul.mubr.bf16.gmra.mrb[0].mxu0 %v783
        %v846 = vpop.f32.mrb[0].mxu0
        %v847 = vadd.f32 %v767, %v846
        %v848 = vpop.f32.mrb[0].mxu0
        %v849 = vpop.f32.mrb[0].mxu0
        %v850 = vadd.f32 %v767, %v849
        %v851 = vpop.f32.mrb[0].mxu0
        %852 = vmatprep.mubr.bf16.mxu0 0
        %853 = vmatmul.mubr.bf16.gmra.mrb[0].mxu0 %v786
        %v854 = vpop.f32.mrb[0].mxu0
        %v855 = vadd.f32 %v767, %v854
        %v856 = vpop.f32.mrb[0].mxu0
        %v857 = vpop.f32.mrb[0].mxu0
        %v858 = vadd.f32 %v767, %v857
        %v859 = vpop.f32.mrb[0].mxu0
        %860 = vmatprep.mubr.bf16.mxu0 0
        %861 = vmatmul.mubr.bf16.gmra.mrb[0].mxu0 %v789
        %v862 = vpop.f32.mrb[0].mxu0
        %v863 = vadd.f32 %v767, %v862
        %v864 = vpop.f32.mrb[0].mxu0
        %v865 = vpop.f32.mrb[0].mxu0
        %v866 = vadd.f32 %v767, %v865
        %v867 = vpop.f32.mrb[0].mxu0
        %868 = vmatprep.mubr.bf16.mxu0 0
        %869 = vmatmul.mubr.bf16.gmra.mrb[0].mxu0 %v792
        %v870 = vpop.f32.mrb[0].mxu0
        %v871 = vadd.f32 %v767, %v870
        %v872 = vpop.f32.mrb[0].mxu0
        %v873 = vpop.f32.mrb[0].mxu0
        %v874 = vadd.f32 %v767, %v873
        %v875 = vpop.f32.mrb[0].mxu0
        %876 = vmatprep.mubr.bf16.mxu0 0
        %877 = vmatmul.mubr.bf16.gmra.mrb[0].mxu0 %v795
        %v878 = vpop.f32.mrb[0].mxu0
        %v879 = vadd.f32 %v767, %v878
        %v880 = vpop.f32.mrb[0].mxu0
        %v881 = vpop.f32.mrb[0].mxu0
        %v882 = vadd.f32 %v767, %v881
        %v883 = vpop.f32.mrb[0].mxu0
        %884 = vmatprep.mubr.bf16.mxu0 0
        %885 = vmatmul.mubr.bf16.gmra.mrb[0].mxu0 %v798
        %v886 = vpop.f32.mrb[0].mxu0
        %v887 = vadd.f32 %v767, %v886
        %v888 = vpop.f32.mrb[0].mxu0
        %v889 = vpop.f32.mrb[0].mxu0
        %v890 = vadd.f32 %v767, %v889
        %v891 = vpop.f32.mrb[0].mxu0
        %892 = vmatprep.mubr.bf16.mxu0 0
        %893 = vmatmul.mubr.bf16.gmra.mrb[0].mxu0 %v801
        %v894 = vpop.f32.mrb[0].mxu0
        %v895 = vadd.f32 %v767, %v894
        %v896 = vpop.f32.mrb[0].mxu0
        %v897 = vpop.f32.mrb[0].mxu0
        %v898 = vadd.f32 %v767, %v897
        %v899 = vpop.f32.mrb[0].mxu0
        %900 = vmatprep.mubr.bf16.mxu0 0
        %901 = vmatmul.mubr.bf16.gmra.mrb[0].mxu0 %v804
        %v902 = vpop.f32.mrb[0].mxu0
        %v903 = vadd.f32 %v767, %v902
        %v904 = vpop.f32.mrb[0].mxu0
        %v905 = vpop.f32.mrb[0].mxu0
        %v906 = vadd.f32 %v767, %v905
        %v907 = vpop.f32.mrb[0].mxu0
        %908 = vmatprep.mubr.bf16.mxu0 0
        %909 = vmatmul.mubr.bf16.gmra.mrb[0].mxu0 %v807
        %v910 = vpop.f32.mrb[0].mxu0
        %v911 = vadd.f32 %v767, %v910
        %v912 = vpop.f32.mrb[0].mxu0
        %v913 = vpop.f32.mrb[0].mxu0
        %v914 = vadd.f32 %v767, %v913
        %v915 = vpop.f32.mrb[0].mxu0
        %916 = vmatprep.mubr.bf16.mxu0 0
        %917 = vmatmul.mubr.bf16.gmra.mrb[0].mxu0 %v810
        %v918 = vpop.f32.mrb[0].mxu0
        %v919 = vadd.f32 %v767, %v918
        %v920 = vpop.f32.mrb[0].mxu0
        %v921 = vpop.f32.mrb[0].mxu0
        %v922 = vadd.f32 %v767, %v921
        %v923 = vpop.f32.mrb[0].mxu0
        %924 = vdwg.mxu0
        %v925 = vmax.f32 %v847, 0.0
        %v926 = vmax.f32 %v850, 0.0
        %v927 = vmax.f32 %v855, 0.0
        %v928 = vmax.f32 %v858, 0.0
        %v929 = vmax.f32 %v863, 0.0
        %v930 = vmax.f32 %v866, 0.0
        %v931 = vmax.f32 %v871, 0.0
        %v932 = vmax.f32 %v874, 0.0
        %v933 = vmax.f32 %v879, 0.0
        %v934 = vmax.f32 %v882, 0.0
        %v935 = vmax.f32 %v887, 0.0
        %v936 = vmax.f32 %v890, 0.0
        %v937 = vmax.f32 %v895, 0.0
        %v938 = vmax.f32 %v898, 0.0
        %v939 = vmax.f32 %v903, 0.0
        %v940 = vmax.f32 %v906, 0.0
        %v941 = vmax.f32 %v911, 0.0
        %v942 = vmax.f32 %v914, 0.0
        %v943 = vmax.f32 %v919, 0.0
        %v944 = vmax.f32 %v922, 0.0
        %v945 = vpack.c.bf16 %v926, %v925
        %v946 = vpack.c.bf16 %v928, %v927
        %v947 = vpack.c.bf16 %v930, %v929
        %v948 = vpack.c.bf16 %v932, %v931
        %v949 = vpack.c.bf16 %v934, %v933
        %v950 = vpack.c.bf16 %v936, %v935
        %v951 = vpack.c.bf16 %v938, %v937
        %v952 = vpack.c.bf16 %v940, %v939
        %v953 = vpack.c.bf16 %v942, %v941
        %v954 = vpack.c.bf16 %v944, %v943
        %v955 = vld [vmem:[%s3] sm:$0xf]
        %v956 = vld [vmem:[%s3 + $0x4] sm:$0xf]
        %v957 = vld [vmem:[%s3 + $0x8] sm:$0xf]
        %v958 = vld [vmem:[%s3 + $0xc] sm:$0xf]
        %v959 = vld [vmem:[%s3 + $0x10] sm:$0xf]
        %v960 = vld [vmem:[%s3 + $0x14] sm:$0xf]
        %v961 = vld [vmem:[%s3 + $0x18] sm:$0xf]
        %v962 = vld [vmem:[%s3 + $0x1c] sm:$0xf]
        %v963 = vld [vmem:[%s3 + $0x20] sm:$0xf]
        %v964 = vld [vmem:[%s3 + $0x24] sm:$0xf]
        %v965 = vld [vmem:[%s3 + $0x28] sm:$0xf]
        %v966 = vld [vmem:[%s3 + $0x2c] sm:$0xf]
        %v967 = vld [vmem:[%s3 + $0x30] sm:$0xf]
        %v968 = vld [vmem:[%s3 + $0x34] sm:$0xf]
        %v969 = vld [vmem:[%s3 + $0x38] sm:$0xf]
        %v970 = vld [vmem:[%s3 + $0x3c] sm:$0xf]
        %v971 = vld [vmem:[%s4] sm:$0x1]
        %v973 = vlaneseq
        %v974 = vshrl.u32 %v973, 7
        %v975 = vsub.s32 0, %v974
        %v976 = vrot.slane %v971, %v975
        %v994 = vunpack.c.l.b16 %v955
        %v995 = vunpack.c.l.b16 %v956
        %v996 = vunpack.c.l.b16 %v957
        %v997 = vunpack.c.l.b16 %v958
        %v998 = vunpack.c.l.b16 %v959
        %v999 = vunpack.c.l.b16 %v960
        %v1000 = vunpack.c.l.b16 %v961
        %v1001 = vunpack.c.l.b16 %v962
        %v1002 = vunpack.c.l.b16 %v963
        %v1003 = vunpack.c.l.b16 %v964
        %v1004 = vunpack.c.l.b16 %v965
        %v1005 = vunpack.c.l.b16 %v966
        %v1006 = vunpack.c.l.b16 %v967
        %v1007 = vunpack.c.l.b16 %v968
        %v1008 = vunpack.c.l.b16 %v969
        %v1009 = vunpack.c.l.b16 %v970
        %v1010 = vpack.c.b16 %v995, %v994
        %v1011 = vpack.c.b16 %v997, %v996
        %v1012 = vpack.c.b16 %v999, %v998
        %v1013 = vpack.c.b16 %v1001, %v1000
        %v1014 = vpack.c.b16 %v1003, %v1002
        %v1015 = vpack.c.b16 %v1005, %v1004
        %v1016 = vpack.c.b16 %v1007, %v1006
        %v1017 = vpack.c.b16 %v1009, %v1008
        %1026 = vmatprep.subr.bf16.mxu0 0
        %1027 = vmatpush1.bf16.msra.mxu0 %v1010
        %1028 = vmatprep.subr.bf16.mxu0 0
        %1029 = vmatpush1.bf16.msra.mxu0 %v1011
        %1030 = vmatprep.subr.bf16.mxu0 0
        %1031 = vmatpush1.bf16.msra.mxu0 %v1012
        %1032 = vmatprep.subr.bf16.mxu0 0
        %1033 = vmatpush1.bf16.msra.mxu0 %v1013
        %1034 = vmatprep.subr.bf16.mxu0 0
        %1035 = vmatpush1.bf16.msra.mxu0 %v1014
        %1036 = vmatprep.subr.bf16.mxu0 0
        %1037 = vmatpush1.bf16.msra.mxu0 %v1015
        %1038 = vmatprep.subr.bf16.mxu0 0
        %1039 = vmatpush1.bf16.msra.mxu0 %v1016
        %1040 = vmatprep.subr.bf16.mxu0 0
        %1041 = vmatpush1.bf16.msra.mxu0 %v1017
        %1042 = vmatprep.subr.bf16.mxu0 0
        %1043 = vmatpush1.bf16.msra.mxu0 0
        %1044 = vmatprep.subr.bf16.mxu0 0
        %1045 = vmatpush1.bf16.msra.mxu0 0
        %1046 = vmatprep.subr.bf16.mxu0 0
        %1047 = vmatpush1.bf16.msra.mxu0 0
        %1048 = vmatprep.subr.bf16.mxu0 0
        %1049 = vmatpush1.bf16.msra.mxu0 0
        %1050 = vmatprep.subr.bf16.mxu0 0
        %1051 = vmatpush1.bf16.msra.mxu0 0
        %1052 = vmatprep.subr.bf16.mxu0 0
        %1053 = vmatpush1.bf16.msra.mxu0 0
        %1054 = vmatprep.subr.bf16.mxu0 0
        %1055 = vmatpush1.bf16.msra.mxu0 0
        %1056 = vmatprep.subr.bf16.mxu0 0
        %1057 = vmatpush1.bf16.msra.mxu0 0
        %1058 = vmatprep.mubr.bf16.mxu0 0
        %1059 = vmatmul.mubr.bf16.gmra.mrb[0].mxu0 %v945
        %v1060 = vpop.f32.mrb[0].mxu0
        %v1061 = vadd.f32 %v976, %v1060
        %v1062 = vpop.f32.mrb[0].mxu0
        %v1063 = vpop.f32.mrb[0].mxu0
        %v1064 = vadd.f32 %v976, %v1063
        %v1065 = vpop.f32.mrb[0].mxu0
        %1066 = vmatprep.mubr.bf16.mxu0 0
        %1067 = vmatmul.mubr.bf16.gmra.mrb[0].mxu0 %v946
        %v1068 = vpop.f32.mrb[0].mxu0
        %v1069 = vadd.f32 %v976, %v1068
        %v1070 = vpop.f32.mrb[0].mxu0
        %v1071 = vpop.f32.mrb[0].mxu0
        %v1072 = vadd.f32 %v976, %v1071
        %v1073 = vpop.f32.mrb[0].mxu0
        %1074 = vmatprep.mubr.bf16.mxu0 0
        %1075 = vmatmul.mubr.bf16.gmra.mrb[0].mxu0 %v947
        %v1076 = vpop.f32.mrb[0].mxu0
        %v1077 = vadd.f32 %v976, %v1076
        %v1078 = vpop.f32.mrb[0].mxu0
        %v1079 = vpop.f32.mrb[0].mxu0
        %v1080 = vadd.f32 %v976, %v1079
        %v1081 = vpop.f32.mrb[0].mxu0
        %1082 = vmatprep.mubr.bf16.mxu0 0
        %1083 = vmatmul.mubr.bf16.gmra.mrb[0].mxu0 %v948
        %v1084 = vpop.f32.mrb[0].mxu0
        %v1085 = vadd.f32 %v976, %v1084
        %v1086 = vpop.f32.mrb[0].mxu0
        %v1087 = vpop.f32.mrb[0].mxu0
        %v1088 = vadd.f32 %v976, %v1087
        %v1089 = vpop.f32.mrb[0].mxu0
        %1090 = vmatprep.mubr.bf16.mxu0 0
        %1091 = vmatmul.mubr.bf16.gmra.mrb[0].mxu0 %v949
        %v1092 = vpop.f32.mrb[0].mxu0
        %v1093 = vadd.f32 %v976, %v1092
        %v1094 = vpop.f32.mrb[0].mxu0
        %v1095 = vpop.f32.mrb[0].mxu0
        %v1096 = vadd.f32 %v976, %v1095
        %v1097 = vpop.f32.mrb[0].mxu0
        %1098 = vmatprep.mubr.bf16.mxu0 0
        %1099 = vmatmul.mubr.bf16.gmra.mrb[0].mxu0 %v950
        %v1100 = vpop.f32.mrb[0].mxu0
        %v1101 = vadd.f32 %v976, %v1100
        %v1102 = vpop.f32.mrb[0].mxu0
        %v1103 = vpop.f32.mrb[0].mxu0
        %v1104 = vadd.f32 %v976, %v1103
        %v1105 = vpop.f32.mrb[0].mxu0
        %1106 = vmatprep.mubr.bf16.mxu0 0
        %1107 = vmatmul.mubr.bf16.gmra.mrb[0].mxu0 %v951
        %v1108 = vpop.f32.mrb[0].mxu0
        %v1109 = vadd.f32 %v976, %v1108
        %v1110 = vpop.f32.mrb[0].mxu0
        %v1111 = vpop.f32.mrb[0].mxu0
        %v1112 = vadd.f32 %v976, %v1111
        %v1113 = vpop.f32.mrb[0].mxu0
        %1114 = vmatprep.mubr.bf16.mxu0 0
        %1115 = vmatmul.mubr.bf16.gmra.mrb[0].mxu0 %v952
        %v1116 = vpop.f32.mrb[0].mxu0
        %v1117 = vadd.f32 %v976, %v1116
        %v1118 = vpop.f32.mrb[0].mxu0
        %v1119 = vpop.f32.mrb[0].mxu0
        %v1120 = vadd.f32 %v976, %v1119
        %v1121 = vpop.f32.mrb[0].mxu0
        %1122 = vmatprep.mubr.bf16.mxu0 0
        %1123 = vmatmul.mubr.bf16.gmra.mrb[0].mxu0 %v953
        %v1124 = vpop.f32.mrb[0].mxu0
        %v1125 = vadd.f32 %v976, %v1124
        %v1126 = vpop.f32.mrb[0].mxu0
        %v1127 = vpop.f32.mrb[0].mxu0
        %v1128 = vadd.f32 %v976, %v1127
        %v1129 = vpop.f32.mrb[0].mxu0
        %1130 = vmatprep.mubr.bf16.mxu0 0
        %1131 = vmatmul.mubr.bf16.gmra.mrb[0].mxu0 %v954
        %v1132 = vpop.f32.mrb[0].mxu0
        %v1133 = vadd.f32 %v976, %v1132
        %v1134 = vpop.f32.mrb[0].mxu0
        %v1135 = vpop.f32.mrb[0].mxu0
        %v1136 = vadd.f32 %v976, %v1135
        %v1137 = vpop.f32.mrb[0].mxu0
        %1138 = vdwg.mxu0
        %v1139 = vmax.f32 %v1061, 0.0
        %v1140 = vmax.f32 %v1064, 0.0
        %v1141 = vmax.f32 %v1069, 0.0
        %v1142 = vmax.f32 %v1072, 0.0
        %v1143 = vmax.f32 %v1077, 0.0
        %v1144 = vmax.f32 %v1080, 0.0
        %v1145 = vmax.f32 %v1085, 0.0
        %v1146 = vmax.f32 %v1088, 0.0
        %v1147 = vmax.f32 %v1093, 0.0
        %v1148 = vmax.f32 %v1096, 0.0
        %v1149 = vmax.f32 %v1101, 0.0
        %v1150 = vmax.f32 %v1104, 0.0
        %v1151 = vmax.f32 %v1109, 0.0
        %v1152 = vmax.f32 %v1112, 0.0
        %v1153 = vmax.f32 %v1117, 0.0
        %v1154 = vmax.f32 %v1120, 0.0
        %v1155 = vmax.f32 %v1125, 0.0
        %v1156 = vmax.f32 %v1128, 0.0
        %v1157 = vmax.f32 %v1133, 0.0
        %v1158 = vmax.f32 %v1136, 0.0
        %v1159 = vpack.c.bf16 %v1140, %v1139
        %v1160 = vpack.c.bf16 %v1142, %v1141
        %v1161 = vpack.c.bf16 %v1144, %v1143
        %v1162 = vpack.c.bf16 %v1146, %v1145
        %v1163 = vpack.c.bf16 %v1148, %v1147
        %v1164 = vpack.c.bf16 %v1150, %v1149
        %v1165 = vpack.c.bf16 %v1152, %v1151
        %v1166 = vpack.c.bf16 %v1154, %v1153
        %v1167 = vpack.c.bf16 %v1156, %v1155
        %v1168 = vpack.c.bf16 %v1158, %v1157
        %v1169 = vld [vmem:[%s5] sm:$0xf]
        %v1170 = vld [vmem:[%s5 + $0x4] sm:$0xf]
        %v1171 = vld [vmem:[%s5 + $0x8] sm:$0xf]
        %v1172 = vld [vmem:[%s5 + $0xc] sm:$0xf]
        %v1173 = vld [vmem:[%s5 + $0x10] sm:$0xf]
        %v1174 = vld [vmem:[%s5 + $0x14] sm:$0xf]
        %v1175 = vld [vmem:[%s5 + $0x18] sm:$0xf]
        %v1176 = vld [vmem:[%s5 + $0x1c] sm:$0xf]
        %v1177 = vld [vmem:[%s6] sm:$0x1]
        %v1179 = vlaneseq
        %v1180 = vshrl.u32 %v1179, 7
        %v1181 = vsub.s32 0, %v1180
        %v1182 = vrot.slane %v1177, %v1181
        %v1192 = vunpack.c.l.b16 %v1169
        %v1193 = vunpack.c.l.b16 %v1170
        %v1194 = vunpack.c.l.b16 %v1171
        %v1195 = vunpack.c.l.b16 %v1172
        %v1196 = vunpack.c.l.b16 %v1173
        %v1197 = vunpack.c.l.b16 %v1174
        %v1198 = vunpack.c.l.b16 %v1175
        %v1199 = vunpack.c.l.b16 %v1176
        %v1200 = vpack.c.b16 %v1193, %v1192
        %v1201 = vpack.c.b16 %v1195, %v1194
        %v1202 = vpack.c.b16 %v1197, %v1196
        %v1203 = vpack.c.b16 %v1199, %v1198
        %vm1208 = vcmask 523264
        %v1210 = vsel %vm1208, %v1159, 0
        %v1213 = vsel %vm1208, %v1160, 0
        %v1216 = vsel %vm1208, %v1161, 0
        %v1219 = vsel %vm1208, %v1162, 0
        %v1222 = vsel %vm1208, %v1163, 0
        %v1225 = vsel %vm1208, %v1164, 0
        %v1228 = vsel %vm1208, %v1165, 0
        %v1231 = vsel %vm1208, %v1166, 0
        %v1234 = vsel %vm1208, %v1167, 0
        %v1237 = vsel %vm1208, %v1168, 0
        %1239 = vmatprep.subr.bf16.mxu0 0
        %1240 = vmatpush1.bf16.msra.mxu0 %v1200
        %1241 = vmatprep.subr.bf16.mxu0 0
        %1242 = vmatpush1.bf16.msra.mxu0 %v1201
        %1243 = vmatprep.subr.bf16.mxu0 0
        %1244 = vmatpush1.bf16.msra.mxu0 %v1202
        %1245 = vmatprep.subr.bf16.mxu0 0
        %1246 = vmatpush1.bf16.msra.mxu0 %v1203
        %1247 = vmatprep.subr.bf16.mxu0 0
        %1248 = vmatpush1.bf16.msra.mxu0 0
        %1249 = vmatprep.subr.bf16.mxu0 0
        %1250 = vmatpush1.bf16.msra.mxu0 0
        %1251 = vmatprep.subr.bf16.mxu0 0
        %1252 = vmatpush1.bf16.msra.mxu0 0
        %1253 = vmatprep.subr.bf16.mxu0 0
        %1254 = vmatpush1.bf16.msra.mxu0 0
        %1255 = vmatprep.subr.bf16.mxu0 0
        %1256 = vmatpush1.bf16.msra.mxu0 0
        %1257 = vmatprep.subr.bf16.mxu0 0
        %1258 = vmatpush1.bf16.msra.mxu0 0
        %1259 = vmatprep.subr.bf16.mxu0 0
        %1260 = vmatpush1.bf16.msra.mxu0 0
        %1261 = vmatprep.subr.bf16.mxu0 0
        %1262 = vmatpush1.bf16.msra.mxu0 0
        %1263 = vmatprep.subr.bf16.mxu0 0
        %1264 = vmatpush1.bf16.msra.mxu0 0
        %1265 = vmatprep.subr.bf16.mxu0 0
        %1266 = vmatpush1.bf16.msra.mxu0 0
        %1267 = vmatprep.subr.bf16.mxu0 0
        %1268 = vmatpush1.bf16.msra.mxu0 0
        %1269 = vmatprep.subr.bf16.mxu0 0
        %1270 = vmatpush1.bf16.msra.mxu0 0
        %1271 = vmatprep.mubr.bf16.mxu0 0
        %1272 = vmatmul.mubr.bf16.gmra.mrb[0].mxu0 %v1210
        %v1273 = vpop.f32.mrb[0].mxu0
        %v1274 = vadd.f32 %v1182, %v1273
        %v1275 = vpop.f32.mrb[0].mxu0
        %v1276 = vpop.f32.mrb[0].mxu0
        %v1277 = vadd.f32 %v1182, %v1276
        %v1278 = vpop.f32.mrb[0].mxu0
        %1279 = vmatprep.mubr.bf16.mxu0 0
        %1280 = vmatmul.mubr.bf16.gmra.mrb[0].mxu0 %v1213
        %v1281 = vpop.f32.mrb[0].mxu0
        %v1282 = vadd.f32 %v1182, %v1281
        %v1283 = vpop.f32.mrb[0].mxu0
        %v1284 = vpop.f32.mrb[0].mxu0
        %v1285 = vadd.f32 %v1182, %v1284
        %v1286 = vpop.f32.mrb[0].mxu0
        %1287 = vmatprep.mubr.bf16.mxu0 0
        %1288 = vmatmul.mubr.bf16.gmra.mrb[0].mxu0 %v1216
        %v1289 = vpop.f32.mrb[0].mxu0
        %v1290 = vadd.f32 %v1182, %v1289
        %v1291 = vpop.f32.mrb[0].mxu0
        %v1292 = vpop.f32.mrb[0].mxu0
        %v1293 = vadd.f32 %v1182, %v1292
        %v1294 = vpop.f32.mrb[0].mxu0
        %1295 = vmatprep.mubr.bf16.mxu0 0
        %1296 = vmatmul.mubr.bf16.gmra.mrb[0].mxu0 %v1219
        %v1297 = vpop.f32.mrb[0].mxu0
        %v1298 = vadd.f32 %v1182, %v1297
        %v1299 = vpop.f32.mrb[0].mxu0
        %v1300 = vpop.f32.mrb[0].mxu0
        %v1301 = vadd.f32 %v1182, %v1300
        %v1302 = vpop.f32.mrb[0].mxu0
        %1303 = vmatprep.mubr.bf16.mxu0 0
        %1304 = vmatmul.mubr.bf16.gmra.mrb[0].mxu0 %v1222
        %v1305 = vpop.f32.mrb[0].mxu0
        %v1306 = vadd.f32 %v1182, %v1305
        %v1307 = vpop.f32.mrb[0].mxu0
        %v1308 = vpop.f32.mrb[0].mxu0
        %v1309 = vadd.f32 %v1182, %v1308
        %v1310 = vpop.f32.mrb[0].mxu0
        %1311 = vmatprep.mubr.bf16.mxu0 0
        %1312 = vmatmul.mubr.bf16.gmra.mrb[0].mxu0 %v1225
        %v1313 = vpop.f32.mrb[0].mxu0
        %v1314 = vadd.f32 %v1182, %v1313
        %v1315 = vpop.f32.mrb[0].mxu0
        %v1316 = vpop.f32.mrb[0].mxu0
        %v1317 = vadd.f32 %v1182, %v1316
        %v1318 = vpop.f32.mrb[0].mxu0
        %1319 = vmatprep.mubr.bf16.mxu0 0
        %1320 = vmatmul.mubr.bf16.gmra.mrb[0].mxu0 %v1228
        %v1321 = vpop.f32.mrb[0].mxu0
        %v1322 = vadd.f32 %v1182, %v1321
        %v1323 = vpop.f32.mrb[0].mxu0
        %v1324 = vpop.f32.mrb[0].mxu0
        %v1325 = vadd.f32 %v1182, %v1324
        %v1326 = vpop.f32.mrb[0].mxu0
        %1327 = vmatprep.mubr.bf16.mxu0 0
        %1328 = vmatmul.mubr.bf16.gmra.mrb[0].mxu0 %v1231
        %v1329 = vpop.f32.mrb[0].mxu0
        %v1330 = vadd.f32 %v1182, %v1329
        %v1331 = vpop.f32.mrb[0].mxu0
        %v1332 = vpop.f32.mrb[0].mxu0
        %v1333 = vadd.f32 %v1182, %v1332
        %v1334 = vpop.f32.mrb[0].mxu0
        %1335 = vmatprep.mubr.bf16.mxu0 0
        %1336 = vmatmul.mubr.bf16.gmra.mrb[0].mxu0 %v1234
        %v1337 = vpop.f32.mrb[0].mxu0
        %v1338 = vadd.f32 %v1182, %v1337
        %v1339 = vpop.f32.mrb[0].mxu0
        %v1340 = vpop.f32.mrb[0].mxu0
        %v1341 = vadd.f32 %v1182, %v1340
        %v1342 = vpop.f32.mrb[0].mxu0
        %1343 = vmatprep.mubr.bf16.mxu0 0
        %1344 = vmatmul.mubr.bf16.gmra.mrb[0].mxu0 %v1237
        %v1345 = vpop.f32.mrb[0].mxu0
        %v1346 = vadd.f32 %v1182, %v1345
        %v1347 = vpop.f32.mrb[0].mxu0
        %v1348 = vpop.f32.mrb[0].mxu0
        %v1349 = vadd.f32 %v1182, %v1348
        %v1350 = vpop.f32.mrb[0].mxu0
        %1351 = vdwg.mxu0
        %v1352 = vmax.f32 %v1274, 0.0
        %v1353 = vmax.f32 %v1277, 0.0
        %v1354 = vmax.f32 %v1282, 0.0
        %v1355 = vmax.f32 %v1285, 0.0
        %v1356 = vmax.f32 %v1290, 0.0
        %v1357 = vmax.f32 %v1293, 0.0
        %v1358 = vmax.f32 %v1298, 0.0
        %v1359 = vmax.f32 %v1301, 0.0
        %v1360 = vmax.f32 %v1306, 0.0
        %v1361 = vmax.f32 %v1309, 0.0
        %v1362 = vmax.f32 %v1314, 0.0
        %v1363 = vmax.f32 %v1317, 0.0
        %v1364 = vmax.f32 %v1322, 0.0
        %v1365 = vmax.f32 %v1325, 0.0
        %v1366 = vmax.f32 %v1330, 0.0
        %v1367 = vmax.f32 %v1333, 0.0
        %v1368 = vmax.f32 %v1338, 0.0
        %v1369 = vmax.f32 %v1341, 0.0
        %v1370 = vmax.f32 %v1346, 0.0
        %v1371 = vmax.f32 %v1349, 0.0
        %v1372 = vpack.c.bf16 %v1353, %v1352
        %v1373 = vpack.c.bf16 %v1355, %v1354
        %v1374 = vpack.c.bf16 %v1357, %v1356
        %v1375 = vpack.c.bf16 %v1359, %v1358
        %v1376 = vpack.c.bf16 %v1361, %v1360
        %v1377 = vpack.c.bf16 %v1363, %v1362
        %v1378 = vpack.c.bf16 %v1365, %v1364
        %v1379 = vpack.c.bf16 %v1367, %v1366
        %v1380 = vpack.c.bf16 %v1369, %v1368
        %v1381 = vpack.c.bf16 %v1371, %v1370
        %v1382 = vld [vmem:[%s7] sm:$0xf]
        %v1383 = vld [vmem:[%s7 + $0x4] sm:$0xf]
        %v1384 = vld [vmem:[%s7 + $0x8] sm:$0xf]
        %v1385 = vld [vmem:[%s7 + $0xc] sm:$0xf]
        %v1386 = vld [vmem:[%s8] sm:$0x1]
        %v1388 = vlaneseq
        %v1389 = vshrl.u32 %v1388, 7
        %v1390 = vsub.s32 0, %v1389
        %v1391 = vrot.slane %v1386, %v1390
        %v1397 = vunpack.c.l.b16 %v1382
        %v1398 = vunpack.c.l.b16 %v1383
        %v1399 = vunpack.c.l.b16 %v1384
        %v1400 = vunpack.c.l.b16 %v1385
        %v1401 = vpack.c.b16 %v1398, %v1397
        %v1402 = vpack.c.b16 %v1400, %v1399
        %v1406 = vsel %vm781, %v1372, 0
        %v1409 = vsel %vm781, %v1373, 0
        %v1412 = vsel %vm781, %v1374, 0
        %v1415 = vsel %vm781, %v1375, 0
        %v1418 = vsel %vm781, %v1376, 0
        %v1421 = vsel %vm781, %v1377, 0
        %v1424 = vsel %vm781, %v1378, 0
        %v1427 = vsel %vm781, %v1379, 0
        %v1430 = vsel %vm781, %v1380, 0
        %v1433 = vsel %vm781, %v1381, 0
        %1435 = vmatprep.subr.bf16.mxu0 0
        %1436 = vmatpush1.bf16.msra.mxu0 %v1401
        %1437 = vmatprep.subr.bf16.mxu0 0
        %1438 = vmatpush1.bf16.msra.mxu0 %v1402
        %1439 = vmatprep.subr.bf16.mxu0 0
        %1440 = vmatpush1.bf16.msra.mxu0 0
        %1441 = vmatprep.subr.bf16.mxu0 0
        %1442 = vmatpush1.bf16.msra.mxu0 0
        %1443 = vmatprep.subr.bf16.mxu0 0
        %1444 = vmatpush1.bf16.msra.mxu0 0
        %1445 = vmatprep.subr.bf16.mxu0 0
        %1446 = vmatpush1.bf16.msra.mxu0 0
        %1447 = vmatprep.subr.bf16.mxu0 0
        %1448 = vmatpush1.bf16.msra.mxu0 0
        %1449 = vmatprep.subr.bf16.mxu0 0
        %1450 = vmatpush1.bf16.msra.mxu0 0
        %1451 = vmatprep.subr.bf16.mxu0 0
        %1452 = vmatpush1.bf16.msra.mxu0 0
        %1453 = vmatprep.subr.bf16.mxu0 0
        %1454 = vmatpush1.bf16.msra.mxu0 0
        %1455 = vmatprep.subr.bf16.mxu0 0
        %1456 = vmatpush1.bf16.msra.mxu0 0
        %1457 = vmatprep.subr.bf16.mxu0 0
        %1458 = vmatpush1.bf16.msra.mxu0 0
        %1459 = vmatprep.subr.bf16.mxu0 0
        %1460 = vmatpush1.bf16.msra.mxu0 0
        %1461 = vmatprep.subr.bf16.mxu0 0
        %1462 = vmatpush1.bf16.msra.mxu0 0
        %1463 = vmatprep.subr.bf16.mxu0 0
        %1464 = vmatpush1.bf16.msra.mxu0 0
        %1465 = vmatprep.subr.bf16.mxu0 0
        %1466 = vmatpush1.bf16.msra.mxu0 0
        %1467 = vmatprep.mubr.bf16.mxu0 0
        %1468 = vmatmul.mubr.bf16.gmra.mrb[0].mxu0 %v1406
        %v1469 = vpop.f32.mrb[0].mxu0
        %v1470 = vadd.f32 %v1391, %v1469
        %v1471 = vpop.f32.mrb[0].mxu0
        %v1472 = vpop.f32.mrb[0].mxu0
        %v1473 = vadd.f32 %v1391, %v1472
        %v1474 = vpop.f32.mrb[0].mxu0
        %1475 = vmatprep.mubr.bf16.mxu0 0
        %1476 = vmatmul.mubr.bf16.gmra.mrb[0].mxu0 %v1409
        %v1477 = vpop.f32.mrb[0].mxu0
        %v1478 = vadd.f32 %v1391, %v1477
        %v1479 = vpop.f32.mrb[0].mxu0
        %v1480 = vpop.f32.mrb[0].mxu0
        %v1481 = vadd.f32 %v1391, %v1480
        %v1482 = vpop.f32.mrb[0].mxu0
        %1483 = vmatprep.mubr.bf16.mxu0 0
        %1484 = vmatmul.mubr.bf16.gmra.mrb[0].mxu0 %v1412
        %v1485 = vpop.f32.mrb[0].mxu0
        %v1486 = vadd.f32 %v1391, %v1485
        %v1487 = vpop.f32.mrb[0].mxu0
        %v1488 = vpop.f32.mrb[0].mxu0
        %v1489 = vadd.f32 %v1391, %v1488
        %v1490 = vpop.f32.mrb[0].mxu0
        %1491 = vmatprep.mubr.bf16.mxu0 0
        %1492 = vmatmul.mubr.bf16.gmra.mrb[0].mxu0 %v1415
        %v1493 = vpop.f32.mrb[0].mxu0
        %v1494 = vadd.f32 %v1391, %v1493
        %v1495 = vpop.f32.mrb[0].mxu0
        %v1496 = vpop.f32.mrb[0].mxu0
        %v1497 = vadd.f32 %v1391, %v1496
        %v1498 = vpop.f32.mrb[0].mxu0
        %1499 = vmatprep.mubr.bf16.mxu0 0
        %1500 = vmatmul.mubr.bf16.gmra.mrb[0].mxu0 %v1418
        %v1501 = vpop.f32.mrb[0].mxu0
        %v1502 = vadd.f32 %v1391, %v1501
        %v1503 = vpop.f32.mrb[0].mxu0
        %v1504 = vpop.f32.mrb[0].mxu0
        %v1505 = vadd.f32 %v1391, %v1504
        %v1506 = vpop.f32.mrb[0].mxu0
        %1507 = vmatprep.mubr.bf16.mxu0 0
        %1508 = vmatmul.mubr.bf16.gmra.mrb[0].mxu0 %v1421
        %v1509 = vpop.f32.mrb[0].mxu0
        %v1510 = vadd.f32 %v1391, %v1509
        %v1511 = vpop.f32.mrb[0].mxu0
        %v1512 = vpop.f32.mrb[0].mxu0
        %v1513 = vadd.f32 %v1391, %v1512
        %v1514 = vpop.f32.mrb[0].mxu0
        %1515 = vmatprep.mubr.bf16.mxu0 0
        %1516 = vmatmul.mubr.bf16.gmra.mrb[0].mxu0 %v1424
        %v1517 = vpop.f32.mrb[0].mxu0
        %v1518 = vadd.f32 %v1391, %v1517
        %v1519 = vpop.f32.mrb[0].mxu0
        %v1520 = vpop.f32.mrb[0].mxu0
        %v1521 = vadd.f32 %v1391, %v1520
        %v1522 = vpop.f32.mrb[0].mxu0
        %1523 = vmatprep.mubr.bf16.mxu0 0
        %1524 = vmatmul.mubr.bf16.gmra.mrb[0].mxu0 %v1427
        %v1525 = vpop.f32.mrb[0].mxu0
        %v1526 = vadd.f32 %v1391, %v1525
        %v1527 = vpop.f32.mrb[0].mxu0
        %v1528 = vpop.f32.mrb[0].mxu0
        %v1529 = vadd.f32 %v1391, %v1528
        %v1530 = vpop.f32.mrb[0].mxu0
        %1531 = vmatprep.mubr.bf16.mxu0 0
        %1532 = vmatmul.mubr.bf16.gmra.mrb[0].mxu0 %v1430
        %v1533 = vpop.f32.mrb[0].mxu0
        %v1534 = vadd.f32 %v1391, %v1533
        %v1535 = vpop.f32.mrb[0].mxu0
        %v1536 = vpop.f32.mrb[0].mxu0
        %v1537 = vadd.f32 %v1391, %v1536
        %v1538 = vpop.f32.mrb[0].mxu0
        %1539 = vmatprep.mubr.bf16.mxu0 0
        %1540 = vmatmul.mubr.bf16.gmra.mrb[0].mxu0 %v1433
        %v1541 = vpop.f32.mrb[0].mxu0
        %v1542 = vadd.f32 %v1391, %v1541
        %v1543 = vpop.f32.mrb[0].mxu0
        %v1544 = vpop.f32.mrb[0].mxu0
        %v1545 = vadd.f32 %v1391, %v1544
        %v1546 = vpop.f32.mrb[0].mxu0
        %1547 = vdwg.mxu0
        %v1548 = vpack.c.bf16 %v1473, %v1470
        %v1549 = vpack.c.bf16 %v1481, %v1478
        %v1550 = vpack.c.bf16 %v1489, %v1486
        %v1551 = vpack.c.bf16 %v1497, %v1494
        %v1552 = vpack.c.bf16 %v1505, %v1502
        %v1553 = vpack.c.bf16 %v1513, %v1510
        %v1554 = vpack.c.bf16 %v1521, %v1518
        %v1555 = vpack.c.bf16 %v1529, %v1526
        %v1556 = vpack.c.bf16 %v1537, %v1534
        %v1557 = vpack.c.bf16 %v1545, %v1542
        %v1558 = vld [vmem:[%s9] sm:$0xf]
        %v1559 = vld [vmem:[%s9 + $0x4] sm:$0xf]
        %v1560 = vld [vmem:[%s10] sm:$0x1]
        %v1562 = vlaneseq
        %v1563 = vshrl.u32 %v1562, 7
        %v1564 = vsub.s32 0, %v1563
        %v1565 = vrot.slane %v1560, %v1564
        %v1569 = vunpack.c.l.b16 %v1558
        %v1570 = vunpack.c.l.b16 %v1559
        %v1571 = vpack.c.b16 %v1570, %v1569
        %vm1573 = vcmask 130048
        %v1575 = vsel %vm1573, %v1548, 0
        %v1578 = vsel %vm1573, %v1549, 0
        %v1581 = vsel %vm1573, %v1550, 0
        %v1584 = vsel %vm1573, %v1551, 0
        %v1587 = vsel %vm1573, %v1552, 0
        %v1590 = vsel %vm1573, %v1553, 0
        %v1593 = vsel %vm1573, %v1554, 0
        %v1596 = vsel %vm1573, %v1555, 0
        %v1599 = vsel %vm1573, %v1556, 0
        %v1602 = vsel %vm1573, %v1557, 0
        %1604 = vmatprep.subr.bf16.mxu0 0
        %1605 = vmatpush1.bf16.msra.mxu0 %v1571
        %1606 = vmatprep.subr.bf16.mxu0 0
        %1607 = vmatpush1.bf16.msra.mxu0 0
        %1608 = vmatprep.subr.bf16.mxu0 0
        %1609 = vmatpush1.bf16.msra.mxu0 0
        %1610 = vmatprep.subr.bf16.mxu0 0
        %1611 = vmatpush1.bf16.msra.mxu0 0
        %1612 = vmatprep.subr.bf16.mxu0 0
        %1613 = vmatpush1.bf16.msra.mxu0 0
        %1614 = vmatprep.subr.bf16.mxu0 0
        %1615 = vmatpush1.bf16.msra.mxu0 0
        %1616 = vmatprep.subr.bf16.mxu0 0
        %1617 = vmatpush1.bf16.msra.mxu0 0
        %1618 = vmatprep.subr.bf16.mxu0 0
        %1619 = vmatpush1.bf16.msra.mxu0 0
        %1620 = vmatprep.subr.bf16.mxu0 0
        %1621 = vmatpush1.bf16.msra.mxu0 0
        %1622 = vmatprep.subr.bf16.mxu0 0
        %1623 = vmatpush1.bf16.msra.mxu0 0
        %1624 = vmatprep.subr.bf16.mxu0 0
        %1625 = vmatpush1.bf16.msra.mxu0 0
        %1626 = vmatprep.subr.bf16.mxu0 0
        %1627 = vmatpush1.bf16.msra.mxu0 0
        %1628 = vmatprep.subr.bf16.mxu0 0
        %1629 = vmatpush1.bf16.msra.mxu0 0
        %1630 = vmatprep.subr.bf16.mxu0 0
        %1631 = vmatpush1.bf16.msra.mxu0 0
        %1632 = vmatprep.subr.bf16.mxu0 0
        %1633 = vmatpush1.bf16.msra.mxu0 0
        %1634 = vmatprep.subr.bf16.mxu0 0
        %1635 = vmatpush1.bf16.msra.mxu0 0
        %1636 = vmatprep.mubr.bf16.mxu0 0
        %1637 = vmatmul.mubr.bf16.gmra.mrb[0].mxu0 %v1575
        %v1638 = vpop.f32.mrb[0].mxu0
        %v1639 = vadd.f32 %v1565, %v1638
        %v1640 = vpop.f32.mrb[0].mxu0
        %v1641 = vpop.f32.mrb[0].mxu0
        %v1642 = vadd.f32 %v1565, %v1641
        %v1643 = vpop.f32.mrb[0].mxu0
        %1644 = vmatprep.mubr.bf16.mxu0 0
        %1645 = vmatmul.mubr.bf16.gmra.mrb[0].mxu0 %v1578
        %v1646 = vpop.f32.mrb[0].mxu0
        %v1647 = vadd.f32 %v1565, %v1646
        %v1648 = vpop.f32.mrb[0].mxu0
        %v1649 = vpop.f32.mrb[0].mxu0
        %v1650 = vadd.f32 %v1565, %v1649
        %v1651 = vpop.f32.mrb[0].mxu0
        %1652 = vmatprep.mubr.bf16.mxu0 0
        %1653 = vmatmul.mubr.bf16.gmra.mrb[0].mxu0 %v1581
        %v1654 = vpop.f32.mrb[0].mxu0
        %v1655 = vadd.f32 %v1565, %v1654
        %v1656 = vpop.f32.mrb[0].mxu0
        %v1657 = vpop.f32.mrb[0].mxu0
        %v1658 = vadd.f32 %v1565, %v1657
        %v1659 = vpop.f32.mrb[0].mxu0
        %1660 = vmatprep.mubr.bf16.mxu0 0
        %1661 = vmatmul.mubr.bf16.gmra.mrb[0].mxu0 %v1584
        %v1662 = vpop.f32.mrb[0].mxu0
        %v1663 = vadd.f32 %v1565, %v1662
        %v1664 = vpop.f32.mrb[0].mxu0
        %v1665 = vpop.f32.mrb[0].mxu0
        %v1666 = vadd.f32 %v1565, %v1665
        %v1667 = vpop.f32.mrb[0].mxu0
        %1668 = vmatprep.mubr.bf16.mxu0 0
        %1669 = vmatmul.mubr.bf16.gmra.mrb[0].mxu0 %v1587
        %v1670 = vpop.f32.mrb[0].mxu0
        %v1671 = vadd.f32 %v1565, %v1670
        %v1672 = vpop.f32.mrb[0].mxu0
        %v1673 = vpop.f32.mrb[0].mxu0
        %v1674 = vadd.f32 %v1565, %v1673
        %v1675 = vpop.f32.mrb[0].mxu0
        %1676 = vmatprep.mubr.bf16.mxu0 0
        %1677 = vmatmul.mubr.bf16.gmra.mrb[0].mxu0 %v1590
        %v1678 = vpop.f32.mrb[0].mxu0
        %v1679 = vadd.f32 %v1565, %v1678
        %v1680 = vpop.f32.mrb[0].mxu0
        %v1681 = vpop.f32.mrb[0].mxu0
        %v1682 = vadd.f32 %v1565, %v1681
        %v1683 = vpop.f32.mrb[0].mxu0
        %1684 = vmatprep.mubr.bf16.mxu0 0
        %1685 = vmatmul.mubr.bf16.gmra.mrb[0].mxu0 %v1593
        %v1686 = vpop.f32.mrb[0].mxu0
        %v1687 = vadd.f32 %v1565, %v1686
        %v1688 = vpop.f32.mrb[0].mxu0
        %v1689 = vpop.f32.mrb[0].mxu0
        %v1690 = vadd.f32 %v1565, %v1689
        %v1691 = vpop.f32.mrb[0].mxu0
        %1692 = vmatprep.mubr.bf16.mxu0 0
        %1693 = vmatmul.mubr.bf16.gmra.mrb[0].mxu0 %v1596
        %v1694 = vpop.f32.mrb[0].mxu0
        %v1695 = vadd.f32 %v1565, %v1694
        %v1696 = vpop.f32.mrb[0].mxu0
        %v1697 = vpop.f32.mrb[0].mxu0
        %v1698 = vadd.f32 %v1565, %v1697
        %v1699 = vpop.f32.mrb[0].mxu0
        %1700 = vmatprep.mubr.bf16.mxu0 0
        %1701 = vmatmul.mubr.bf16.gmra.mrb[0].mxu0 %v1599
        %v1702 = vpop.f32.mrb[0].mxu0
        %v1703 = vadd.f32 %v1565, %v1702
        %v1704 = vpop.f32.mrb[0].mxu0
        %v1705 = vpop.f32.mrb[0].mxu0
        %v1706 = vadd.f32 %v1565, %v1705
        %v1707 = vpop.f32.mrb[0].mxu0
        %1708 = vmatprep.mubr.bf16.mxu0 0
        %1709 = vmatmul.mubr.bf16.gmra.mrb[0].mxu0 %v1602
        %v1710 = vpop.f32.mrb[0].mxu0
        %v1711 = vadd.f32 %v1565, %v1710
        %v1712 = vpop.f32.mrb[0].mxu0
        %v1713 = vpop.f32.mrb[0].mxu0
        %v1714 = vadd.f32 %v1565, %v1713
        %v1715 = vpop.f32.mrb[0].mxu0
        %1716 = vdwg.mxu0
        %v1717 = vmax.f32 %v1639, 0.0
        %v1718 = vmax.f32 %v1642, 0.0
        %v1719 = vmax.f32 %v1647, 0.0
        %v1720 = vmax.f32 %v1650, 0.0
        %v1721 = vmax.f32 %v1655, 0.0
        %v1722 = vmax.f32 %v1658, 0.0
        %v1723 = vmax.f32 %v1663, 0.0
        %v1724 = vmax.f32 %v1666, 0.0
        %v1725 = vmax.f32 %v1671, 0.0
        %v1726 = vmax.f32 %v1674, 0.0
        %v1727 = vmax.f32 %v1679, 0.0
        %v1728 = vmax.f32 %v1682, 0.0
        %v1729 = vmax.f32 %v1687, 0.0
        %v1730 = vmax.f32 %v1690, 0.0
        %v1731 = vmax.f32 %v1695, 0.0
        %v1732 = vmax.f32 %v1698, 0.0
        %v1733 = vmax.f32 %v1703, 0.0
        %v1734 = vmax.f32 %v1706, 0.0
        %v1735 = vmax.f32 %v1711, 0.0
        %v1736 = vmax.f32 %v1714, 0.0
        %v1737 = vpack.c.bf16 %v1718, %v1717
        %v1738 = vpack.c.bf16 %v1720, %v1719
        %v1739 = vpack.c.bf16 %v1722, %v1721
        %v1740 = vpack.c.bf16 %v1724, %v1723
        %v1741 = vpack.c.bf16 %v1726, %v1725
        %v1742 = vpack.c.bf16 %v1728, %v1727
        %v1743 = vpack.c.bf16 %v1730, %v1729
        %v1744 = vpack.c.bf16 %v1732, %v1731
        %v1745 = vpack.c.bf16 %v1734, %v1733
        %v1746 = vpack.c.bf16 %v1736, %v1735
        %v1747 = vld [vmem:[%s11] sm:$0xf]
        %v1748 = vld [vmem:[%s11 + $0x4] sm:$0xf]
        %v1749 = vld [vmem:[%s11 + $0x8] sm:$0xf]
        %v1750 = vld [vmem:[%s11 + $0xc] sm:$0xf]
        %v1751 = vld [vmem:[%s12] sm:$0x1]
        %v1753 = vlaneseq
        %v1754 = vshrl.u32 %v1753, 7
        %v1755 = vsub.s32 0, %v1754
        %v1756 = vrot.slane %v1751, %v1755
        %v1762 = vunpack.c.l.b16 %v1747
        %v1763 = vunpack.c.l.b16 %v1748
        %v1764 = vunpack.c.l.b16 %v1749
        %v1765 = vunpack.c.l.b16 %v1750
        %v1766 = vpack.c.b16 %v1763, %v1762
        %v1767 = vpack.c.b16 %v1765, %v1764
        %v1771 = vsel %vm781, %v1737, 0
        %v1774 = vsel %vm781, %v1738, 0
        %v1777 = vsel %vm781, %v1739, 0
        %v1780 = vsel %vm781, %v1740, 0
        %v1783 = vsel %vm781, %v1741, 0
        %v1786 = vsel %vm781, %v1742, 0
        %v1789 = vsel %vm781, %v1743, 0
        %v1792 = vsel %vm781, %v1744, 0
        %v1795 = vsel %vm781, %v1745, 0
        %v1798 = vsel %vm781, %v1746, 0
        %1800 = vmatprep.subr.bf16.mxu0 0
        %1801 = vmatpush1.bf16.msra.mxu0 %v1766
        %1802 = vmatprep.subr.bf16.mxu0 0
        %1803 = vmatpush1.bf16.msra.mxu0 %v1767
        %1804 = vmatprep.subr.bf16.mxu0 0
        %1805 = vmatpush1.bf16.msra.mxu0 0
        %1806 = vmatprep.subr.bf16.mxu0 0
        %1807 = vmatpush1.bf16.msra.mxu0 0
        %1808 = vmatprep.subr.bf16.mxu0 0
        %1809 = vmatpush1.bf16.msra.mxu0 0
        %1810 = vmatprep.subr.bf16.mxu0 0
        %1811 = vmatpush1.bf16.msra.mxu0 0
        %1812 = vmatprep.subr.bf16.mxu0 0
        %1813 = vmatpush1.bf16.msra.mxu0 0
        %1814 = vmatprep.subr.bf16.mxu0 0
        %1815 = vmatpush1.bf16.msra.mxu0 0
        %1816 = vmatprep.subr.bf16.mxu0 0
        %1817 = vmatpush1.bf16.msra.mxu0 0
        %1818 = vmatprep.subr.bf16.mxu0 0
        %1819 = vmatpush1.bf16.msra.mxu0 0
        %1820 = vmatprep.subr.bf16.mxu0 0
        %1821 = vmatpush1.bf16.msra.mxu0 0
        %1822 = vmatprep.subr.bf16.mxu0 0
        %1823 = vmatpush1.bf16.msra.mxu0 0
        %1824 = vmatprep.subr.bf16.mxu0 0
        %1825 = vmatpush1.bf16.msra.mxu0 0
        %1826 = vmatprep.subr.bf16.mxu0 0
        %1827 = vmatpush1.bf16.msra.mxu0 0
        %1828 = vmatprep.subr.bf16.mxu0 0
        %1829 = vmatpush1.bf16.msra.mxu0 0
        %1830 = vmatprep.subr.bf16.mxu0 0
        %1831 = vmatpush1.bf16.msra.mxu0 0
        %1832 = vmatprep.mubr.bf16.mxu0 0
        %1833 = vmatmul.mubr.bf16.gmra.mrb[0].mxu0 %v1771
        %v1834 = vpop.f32.mrb[0].mxu0
        %v1835 = vadd.f32 %v1756, %v1834
        %v1836 = vpop.f32.mrb[0].mxu0
        %v1837 = vpop.f32.mrb[0].mxu0
        %v1838 = vadd.f32 %v1756, %v1837
        %v1839 = vpop.f32.mrb[0].mxu0
        %1840 = vmatprep.mubr.bf16.mxu0 0
        %1841 = vmatmul.mubr.bf16.gmra.mrb[0].mxu0 %v1774
        %v1842 = vpop.f32.mrb[0].mxu0
        %v1843 = vadd.f32 %v1756, %v1842
        %v1844 = vpop.f32.mrb[0].mxu0
        %v1845 = vpop.f32.mrb[0].mxu0
        %v1846 = vadd.f32 %v1756, %v1845
        %v1847 = vpop.f32.mrb[0].mxu0
        %1848 = vmatprep.mubr.bf16.mxu0 0
        %1849 = vmatmul.mubr.bf16.gmra.mrb[0].mxu0 %v1777
        %v1850 = vpop.f32.mrb[0].mxu0
        %v1851 = vadd.f32 %v1756, %v1850
        %v1852 = vpop.f32.mrb[0].mxu0
        %v1853 = vpop.f32.mrb[0].mxu0
        %v1854 = vadd.f32 %v1756, %v1853
        %v1855 = vpop.f32.mrb[0].mxu0
        %1856 = vmatprep.mubr.bf16.mxu0 0
        %1857 = vmatmul.mubr.bf16.gmra.mrb[0].mxu0 %v1780
        %v1858 = vpop.f32.mrb[0].mxu0
        %v1859 = vadd.f32 %v1756, %v1858
        %v1860 = vpop.f32.mrb[0].mxu0
        %v1861 = vpop.f32.mrb[0].mxu0
        %v1862 = vadd.f32 %v1756, %v1861
        %v1863 = vpop.f32.mrb[0].mxu0
        %1864 = vmatprep.mubr.bf16.mxu0 0
        %1865 = vmatmul.mubr.bf16.gmra.mrb[0].mxu0 %v1783
        %v1866 = vpop.f32.mrb[0].mxu0
        %v1867 = vadd.f32 %v1756, %v1866
        %v1868 = vpop.f32.mrb[0].mxu0
        %v1869 = vpop.f32.mrb[0].mxu0
        %v1870 = vadd.f32 %v1756, %v1869
        %v1871 = vpop.f32.mrb[0].mxu0
        %1872 = vmatprep.mubr.bf16.mxu0 0
        %1873 = vmatmul.mubr.bf16.gmra.mrb[0].mxu0 %v1786
        %v1874 = vpop.f32.mrb[0].mxu0
        %v1875 = vadd.f32 %v1756, %v1874
        %v1876 = vpop.f32.mrb[0].mxu0
        %v1877 = vpop.f32.mrb[0].mxu0
        %v1878 = vadd.f32 %v1756, %v1877
        %v1879 = vpop.f32.mrb[0].mxu0
        %1880 = vmatprep.mubr.bf16.mxu0 0
        %1881 = vmatmul.mubr.bf16.gmra.mrb[0].mxu0 %v1789
        %v1882 = vpop.f32.mrb[0].mxu0
        %v1883 = vadd.f32 %v1756, %v1882
        %v1884 = vpop.f32.mrb[0].mxu0
        %v1885 = vpop.f32.mrb[0].mxu0
        %v1886 = vadd.f32 %v1756, %v1885
        %v1887 = vpop.f32.mrb[0].mxu0
        %1888 = vmatprep.mubr.bf16.mxu0 0
        %1889 = vmatmul.mubr.bf16.gmra.mrb[0].mxu0 %v1792
        %v1890 = vpop.f32.mrb[0].mxu0
        %v1891 = vadd.f32 %v1756, %v1890
        %v1892 = vpop.f32.mrb[0].mxu0
        %v1893 = vpop.f32.mrb[0].mxu0
        %v1894 = vadd.f32 %v1756, %v1893
        %v1895 = vpop.f32.mrb[0].mxu0
        %1896 = vmatprep.mubr.bf16.mxu0 0
        %1897 = vmatmul.mubr.bf16.gmra.mrb[0].mxu0 %v1795
        %v1898 = vpop.f32.mrb[0].mxu0
        %v1899 = vadd.f32 %v1756, %v1898
        %v1900 = vpop.f32.mrb[0].mxu0
        %v1901 = vpop.f32.mrb[0].mxu0
        %v1902 = vadd.f32 %v1756, %v1901
        %v1903 = vpop.f32.mrb[0].mxu0
        %1904 = vmatprep.mubr.bf16.mxu0 0
        %1905 = vmatmul.mubr.bf16.gmra.mrb[0].mxu0 %v1798
        %v1906 = vpop.f32.mrb[0].mxu0
        %v1907 = vadd.f32 %v1756, %v1906
        %v1908 = vpop.f32.mrb[0].mxu0
        %v1909 = vpop.f32.mrb[0].mxu0
        %v1910 = vadd.f32 %v1756, %v1909
        %v1911 = vpop.f32.mrb[0].mxu0
        %1912 = vdwg.mxu0
        %v1913 = vmax.f32 %v1835, 0.0
        %v1914 = vmax.f32 %v1838, 0.0
        %v1915 = vmax.f32 %v1843, 0.0
        %v1916 = vmax.f32 %v1846, 0.0
        %v1917 = vmax.f32 %v1851, 0.0
        %v1918 = vmax.f32 %v1854, 0.0
        %v1919 = vmax.f32 %v1859, 0.0
        %v1920 = vmax.f32 %v1862, 0.0
        %v1921 = vmax.f32 %v1867, 0.0
        %v1922 = vmax.f32 %v1870, 0.0
        %v1923 = vmax.f32 %v1875, 0.0
        %v1924 = vmax.f32 %v1878, 0.0
        %v1925 = vmax.f32 %v1883, 0.0
        %v1926 = vmax.f32 %v1886, 0.0
        %v1927 = vmax.f32 %v1891, 0.0
        %v1928 = vmax.f32 %v1894, 0.0
        %v1929 = vmax.f32 %v1899, 0.0
        %v1930 = vmax.f32 %v1902, 0.0
        %v1931 = vmax.f32 %v1907, 0.0
        %v1932 = vmax.f32 %v1910, 0.0
        %v1933 = vpack.c.bf16 %v1914, %v1913
        %v1934 = vpack.c.bf16 %v1916, %v1915
        %v1935 = vpack.c.bf16 %v1918, %v1917
        %v1936 = vpack.c.bf16 %v1920, %v1919
        %v1937 = vpack.c.bf16 %v1922, %v1921
        %v1938 = vpack.c.bf16 %v1924, %v1923
        %v1939 = vpack.c.bf16 %v1926, %v1925
        %v1940 = vpack.c.bf16 %v1928, %v1927
        %v1941 = vpack.c.bf16 %v1930, %v1929
        %v1942 = vpack.c.bf16 %v1932, %v1931
        %v1943 = vld [vmem:[%s13] sm:$0xf]
        %v1944 = vld [vmem:[%s13 + $0x4] sm:$0xf]
        %v1945 = vld [vmem:[%s13 + $0x8] sm:$0xf]
        %v1946 = vld [vmem:[%s13 + $0xc] sm:$0xf]
        %v1947 = vld [vmem:[%s13 + $0x10] sm:$0xf]
        %v1948 = vld [vmem:[%s13 + $0x14] sm:$0xf]
        %v1949 = vld [vmem:[%s13 + $0x18] sm:$0xf]
        %v1950 = vld [vmem:[%s13 + $0x1c] sm:$0xf]
        %v1951 = vld [vmem:[%s14] sm:$0x1]
        %v1953 = vlaneseq
        %v1954 = vshrl.u32 %v1953, 7
        %v1955 = vsub.s32 0, %v1954
        %v1956 = vrot.slane %v1951, %v1955
        %v1966 = vunpack.c.l.b16 %v1943
        %v1967 = vunpack.c.l.b16 %v1944
        %v1968 = vunpack.c.l.b16 %v1945
        %v1969 = vunpack.c.l.b16 %v1946
        %v1970 = vunpack.c.l.b16 %v1947
        %v1971 = vunpack.c.l.b16 %v1948
        %v1972 = vunpack.c.l.b16 %v1949
        %v1973 = vunpack.c.l.b16 %v1950
        %v1974 = vpack.c.b16 %v1967, %v1966
        %v1975 = vpack.c.b16 %v1969, %v1968
        %v1976 = vpack.c.b16 %v1971, %v1970
        %v1977 = vpack.c.b16 %v1973, %v1972
        %v1983 = vsel %vm1208, %v1933, 0
        %v1986 = vsel %vm1208, %v1934, 0
        %v1989 = vsel %vm1208, %v1935, 0
        %v1992 = vsel %vm1208, %v1936, 0
        %v1995 = vsel %vm1208, %v1937, 0
        %v1998 = vsel %vm1208, %v1938, 0
        %v2001 = vsel %vm1208, %v1939, 0
        %v2004 = vsel %vm1208, %v1940, 0
        %v2007 = vsel %vm1208, %v1941, 0
        %v2010 = vsel %vm1208, %v1942, 0
        %2012 = vmatprep.subr.bf16.mxu0 0
        %2013 = vmatpush1.bf16.msra.mxu0 %v1974
        %2014 = vmatprep.subr.bf16.mxu0 0
        %2015 = vmatpush1.bf16.msra.mxu0 %v1975
        %2016 = vmatprep.subr.bf16.mxu0 0
        %2017 = vmatpush1.bf16.msra.mxu0 %v1976
        %2018 = vmatprep.subr.bf16.mxu0 0
        %2019 = vmatpush1.bf16.msra.mxu0 %v1977
        %2020 = vmatprep.subr.bf16.mxu0 0
        %2021 = vmatpush1.bf16.msra.mxu0 0
        %2022 = vmatprep.subr.bf16.mxu0 0
        %2023 = vmatpush1.bf16.msra.mxu0 0
        %2024 = vmatprep.subr.bf16.mxu0 0
        %2025 = vmatpush1.bf16.msra.mxu0 0
        %2026 = vmatprep.subr.bf16.mxu0 0
        %2027 = vmatpush1.bf16.msra.mxu0 0
        %2028 = vmatprep.subr.bf16.mxu0 0
        %2029 = vmatpush1.bf16.msra.mxu0 0
        %2030 = vmatprep.subr.bf16.mxu0 0
        %2031 = vmatpush1.bf16.msra.mxu0 0
        %2032 = vmatprep.subr.bf16.mxu0 0
        %2033 = vmatpush1.bf16.msra.mxu0 0
        %2034 = vmatprep.subr.bf16.mxu0 0
        %2035 = vmatpush1.bf16.msra.mxu0 0
        %2036 = vmatprep.subr.bf16.mxu0 0
        %2037 = vmatpush1.bf16.msra.mxu0 0
        %2038 = vmatprep.subr.bf16.mxu0 0
        %2039 = vmatpush1.bf16.msra.mxu0 0
        %2040 = vmatprep.subr.bf16.mxu0 0
        %2041 = vmatpush1.bf16.msra.mxu0 0
        %2042 = vmatprep.subr.bf16.mxu0 0
        %2043 = vmatpush1.bf16.msra.mxu0 0
        %2044 = vmatprep.mubr.bf16.mxu0 0
        %2045 = vmatmul.mubr.bf16.gmra.mrb[0].mxu0 %v1983
        %v2046 = vpop.f32.mrb[0].mxu0
        %v2047 = vadd.f32 %v1956, %v2046
        %v2048 = vpop.f32.mrb[0].mxu0
        %v2049 = vpop.f32.mrb[0].mxu0
        %v2050 = vadd.f32 %v1956, %v2049
        %v2051 = vpop.f32.mrb[0].mxu0
        %2052 = vmatprep.mubr.bf16.mxu0 0
        %2053 = vmatmul.mubr.bf16.gmra.mrb[0].mxu0 %v1986
        %v2054 = vpop.f32.mrb[0].mxu0
        %v2055 = vadd.f32 %v1956, %v2054
        %v2056 = vpop.f32.mrb[0].mxu0
        %v2057 = vpop.f32.mrb[0].mxu0
        %v2058 = vadd.f32 %v1956, %v2057
        %v2059 = vpop.f32.mrb[0].mxu0
        %2060 = vmatprep.mubr.bf16.mxu0 0
        %2061 = vmatmul.mubr.bf16.gmra.mrb[0].mxu0 %v1989
        %v2062 = vpop.f32.mrb[0].mxu0
        %v2063 = vadd.f32 %v1956, %v2062
        %v2064 = vpop.f32.mrb[0].mxu0
        %v2065 = vpop.f32.mrb[0].mxu0
        %v2066 = vadd.f32 %v1956, %v2065
        %v2067 = vpop.f32.mrb[0].mxu0
        %2068 = vmatprep.mubr.bf16.mxu0 0
        %2069 = vmatmul.mubr.bf16.gmra.mrb[0].mxu0 %v1992
        %v2070 = vpop.f32.mrb[0].mxu0
        %v2071 = vadd.f32 %v1956, %v2070
        %v2072 = vpop.f32.mrb[0].mxu0
        %v2073 = vpop.f32.mrb[0].mxu0
        %v2074 = vadd.f32 %v1956, %v2073
        %v2075 = vpop.f32.mrb[0].mxu0
        %2076 = vmatprep.mubr.bf16.mxu0 0
        %2077 = vmatmul.mubr.bf16.gmra.mrb[0].mxu0 %v1995
        %v2078 = vpop.f32.mrb[0].mxu0
        %v2079 = vadd.f32 %v1956, %v2078
        %v2080 = vpop.f32.mrb[0].mxu0
        %v2081 = vpop.f32.mrb[0].mxu0
        %v2082 = vadd.f32 %v1956, %v2081
        %v2083 = vpop.f32.mrb[0].mxu0
        %2084 = vmatprep.mubr.bf16.mxu0 0
        %2085 = vmatmul.mubr.bf16.gmra.mrb[0].mxu0 %v1998
        %v2086 = vpop.f32.mrb[0].mxu0
        %v2087 = vadd.f32 %v1956, %v2086
        %v2088 = vpop.f32.mrb[0].mxu0
        %v2089 = vpop.f32.mrb[0].mxu0
        %v2090 = vadd.f32 %v1956, %v2089
        %v2091 = vpop.f32.mrb[0].mxu0
        %2092 = vmatprep.mubr.bf16.mxu0 0
        %2093 = vmatmul.mubr.bf16.gmra.mrb[0].mxu0 %v2001
        %v2094 = vpop.f32.mrb[0].mxu0
        %v2095 = vadd.f32 %v1956, %v2094
        %v2096 = vpop.f32.mrb[0].mxu0
        %v2097 = vpop.f32.mrb[0].mxu0
        %v2098 = vadd.f32 %v1956, %v2097
        %v2099 = vpop.f32.mrb[0].mxu0
        %2100 = vmatprep.mubr.bf16.mxu0 0
        %2101 = vmatmul.mubr.bf16.gmra.mrb[0].mxu0 %v2004
        %v2102 = vpop.f32.mrb[0].mxu0
        %v2103 = vadd.f32 %v1956, %v2102
        %v2104 = vpop.f32.mrb[0].mxu0
        %v2105 = vpop.f32.mrb[0].mxu0
        %v2106 = vadd.f32 %v1956, %v2105
        %v2107 = vpop.f32.mrb[0].mxu0
        %2108 = vmatprep.mubr.bf16.mxu0 0
        %2109 = vmatmul.mubr.bf16.gmra.mrb[0].mxu0 %v2007
        %v2110 = vpop.f32.mrb[0].mxu0
        %v2111 = vadd.f32 %v1956, %v2110
        %v2112 = vpop.f32.mrb[0].mxu0
        %v2113 = vpop.f32.mrb[0].mxu0
        %v2114 = vadd.f32 %v1956, %v2113
        %v2115 = vpop.f32.mrb[0].mxu0
        %2116 = vmatprep.mubr.bf16.mxu0 0
        %2117 = vmatmul.mubr.bf16.gmra.mrb[0].mxu0 %v2010
        %v2118 = vpop.f32.mrb[0].mxu0
        %v2119 = vadd.f32 %v1956, %v2118
        %v2120 = vpop.f32.mrb[0].mxu0
        %v2121 = vpop.f32.mrb[0].mxu0
        %v2122 = vadd.f32 %v1956, %v2121
        %v2123 = vpop.f32.mrb[0].mxu0
        %2124 = vdwg.mxu0
        %v2125 = vmax.f32 %v2047, 0.0
        %v2126 = vmax.f32 %v2050, 0.0
        %v2127 = vmax.f32 %v2055, 0.0
        %v2128 = vmax.f32 %v2058, 0.0
        %v2129 = vmax.f32 %v2063, 0.0
        %v2130 = vmax.f32 %v2066, 0.0
        %v2131 = vmax.f32 %v2071, 0.0
        %v2132 = vmax.f32 %v2074, 0.0
        %v2133 = vmax.f32 %v2079, 0.0
        %v2134 = vmax.f32 %v2082, 0.0
        %v2135 = vmax.f32 %v2087, 0.0
        %v2136 = vmax.f32 %v2090, 0.0
        %v2137 = vmax.f32 %v2095, 0.0
        %v2138 = vmax.f32 %v2098, 0.0
        %v2139 = vmax.f32 %v2103, 0.0
        %v2140 = vmax.f32 %v2106, 0.0
        %v2141 = vmax.f32 %v2111, 0.0
        %v2142 = vmax.f32 %v2114, 0.0
        %v2143 = vmax.f32 %v2119, 0.0
        %v2144 = vmax.f32 %v2122, 0.0
        %v2145 = vpack.c.bf16 %v2126, %v2125
        %v2146 = vpack.c.bf16 %v2128, %v2127
        %v2147 = vpack.c.bf16 %v2130, %v2129
        %v2148 = vpack.c.bf16 %v2132, %v2131
        %v2149 = vpack.c.bf16 %v2134, %v2133
        %v2150 = vpack.c.bf16 %v2136, %v2135
        %v2151 = vpack.c.bf16 %v2138, %v2137
        %v2152 = vpack.c.bf16 %v2140, %v2139
        %v2153 = vpack.c.bf16 %v2142, %v2141
        %v2154 = vpack.c.bf16 %v2144, %v2143
        %v2155 = vld [vmem:[%s15] sm:$0xf]
        %v2156 = vld [vmem:[%s15 + $0x4] sm:$0xf]
        %v2157 = vld [vmem:[%s15 + $0x8] sm:$0xf]
        %v2158 = vld [vmem:[%s15 + $0xc] sm:$0xf]
        %v2159 = vld [vmem:[%s15 + $0x10] sm:$0xf]
        %v2160 = vld [vmem:[%s15 + $0x14] sm:$0xf]
        %v2161 = vld [vmem:[%s15 + $0x18] sm:$0xf]
        %v2162 = vld [vmem:[%s15 + $0x1c] sm:$0xf]
        %v2163 = vld [vmem:[%s15 + $0x20] sm:$0xf]
        %v2164 = vld [vmem:[%s15 + $0x24] sm:$0xf]
        %v2165 = vld [vmem:[%s15 + $0x28] sm:$0xf]
        %v2166 = vld [vmem:[%s15 + $0x2c] sm:$0xf]
        %v2167 = vld [vmem:[%s15 + $0x30] sm:$0xf]
        %v2168 = vld [vmem:[%s15 + $0x34] sm:$0xf]
        %v2169 = vld [vmem:[%s15 + $0x38] sm:$0xf]
        %v2170 = vld [vmem:[%s15 + $0x3c] sm:$0xf]
        %v2171 = vld [vmem:[%s16] sm:$0x1]
        %v2173 = vlaneseq
        %v2174 = vshrl.u32 %v2173, 7
        %v2175 = vsub.s32 0, %v2174
        %v2176 = vrot.slane %v2171, %v2175
        %v2194 = vunpack.c.l.b16 %v2155
        %v2195 = vunpack.c.l.b16 %v2156
        %v2196 = vunpack.c.l.b16 %v2157
        %v2197 = vunpack.c.l.b16 %v2158
        %v2198 = vunpack.c.l.b16 %v2159
        %v2199 = vunpack.c.l.b16 %v2160
        %v2200 = vunpack.c.l.b16 %v2161
        %v2201 = vunpack.c.l.b16 %v2162
        %v2202 = vunpack.c.l.b16 %v2163
        %v2203 = vunpack.c.l.b16 %v2164
        %v2204 = vunpack.c.l.b16 %v2165
        %v2205 = vunpack.c.l.b16 %v2166
        %v2206 = vunpack.c.l.b16 %v2167
        %v2207 = vunpack.c.l.b16 %v2168
        %v2208 = vunpack.c.l.b16 %v2169
        %v2209 = vunpack.c.l.b16 %v2170
        %v2210 = vpack.c.b16 %v2195, %v2194
        %v2211 = vpack.c.b16 %v2197, %v2196
        %v2212 = vpack.c.b16 %v2199, %v2198
        %v2213 = vpack.c.b16 %v2201, %v2200
        %v2214 = vpack.c.b16 %v2203, %v2202
        %v2215 = vpack.c.b16 %v2205, %v2204
        %v2216 = vpack.c.b16 %v2207, %v2206
        %v2217 = vpack.c.b16 %v2209, %v2208
        %2226 = vmatprep.subr.bf16.mxu0 0
        %2227 = vmatpush1.bf16.msra.mxu0 %v2210
        %2228 = vmatprep.subr.bf16.mxu0 0
        %2229 = vmatpush1.bf16.msra.mxu0 %v2211
        %2230 = vmatprep.subr.bf16.mxu0 0
        %2231 = vmatpush1.bf16.msra.mxu0 %v2212
        %2232 = vmatprep.subr.bf16.mxu0 0
        %2233 = vmatpush1.bf16.msra.mxu0 %v2213
        %2234 = vmatprep.subr.bf16.mxu0 0
        %2235 = vmatpush1.bf16.msra.mxu0 %v2214
        %2236 = vmatprep.subr.bf16.mxu0 0
        %2237 = vmatpush1.bf16.msra.mxu0 %v2215
        %2238 = vmatprep.subr.bf16.mxu0 0
        %2239 = vmatpush1.bf16.msra.mxu0 %v2216
        %2240 = vmatprep.subr.bf16.mxu0 0
        %2241 = vmatpush1.bf16.msra.mxu0 %v2217
        %2242 = vmatprep.subr.bf16.mxu0 0
        %2243 = vmatpush1.bf16.msra.mxu0 0
        %2244 = vmatprep.subr.bf16.mxu0 0
        %2245 = vmatpush1.bf16.msra.mxu0 0
        %2246 = vmatprep.subr.bf16.mxu0 0
        %2247 = vmatpush1.bf16.msra.mxu0 0
        %2248 = vmatprep.subr.bf16.mxu0 0
        %2249 = vmatpush1.bf16.msra.mxu0 0
        %2250 = vmatprep.subr.bf16.mxu0 0
        %2251 = vmatpush1.bf16.msra.mxu0 0
        %2252 = vmatprep.subr.bf16.mxu0 0
        %2253 = vmatpush1.bf16.msra.mxu0 0
        %2254 = vmatprep.subr.bf16.mxu0 0
        %2255 = vmatpush1.bf16.msra.mxu0 0
        %2256 = vmatprep.subr.bf16.mxu0 0
        %2257 = vmatpush1.bf16.msra.mxu0 0
        %2258 = vmatprep.mubr.bf16.mxu0 0
        %2259 = vmatmul.mubr.bf16.gmra.mrb[0].mxu0 %v2145
        %v2260 = vpop.f32.mrb[0].mxu0
        %v2261 = vadd.f32 %v2176, %v2260
        %v2262 = vpop.f32.mrb[0].mxu0
        %v2263 = vpop.f32.mrb[0].mxu0
        %v2264 = vadd.f32 %v2176, %v2263
        %v2265 = vpop.f32.mrb[0].mxu0
        %2266 = vmatprep.mubr.bf16.mxu0 0
        %2267 = vmatmul.mubr.bf16.gmra.mrb[0].mxu0 %v2146
        %v2268 = vpop.f32.mrb[0].mxu0
        %v2269 = vadd.f32 %v2176, %v2268
        %v2270 = vpop.f32.mrb[0].mxu0
        %v2271 = vpop.f32.mrb[0].mxu0
        %v2272 = vadd.f32 %v2176, %v2271
        %v2273 = vpop.f32.mrb[0].mxu0
        %2274 = vmatprep.mubr.bf16.mxu0 0
        %2275 = vmatmul.mubr.bf16.gmra.mrb[0].mxu0 %v2147
        %v2276 = vpop.f32.mrb[0].mxu0
        %v2277 = vadd.f32 %v2176, %v2276
        %v2278 = vpop.f32.mrb[0].mxu0
        %v2279 = vpop.f32.mrb[0].mxu0
        %v2280 = vadd.f32 %v2176, %v2279
        %v2281 = vpop.f32.mrb[0].mxu0
        %2282 = vmatprep.mubr.bf16.mxu0 0
        %2283 = vmatmul.mubr.bf16.gmra.mrb[0].mxu0 %v2148
        %v2284 = vpop.f32.mrb[0].mxu0
        %v2285 = vadd.f32 %v2176, %v2284
        %v2286 = vpop.f32.mrb[0].mxu0
        %v2287 = vpop.f32.mrb[0].mxu0
        %v2288 = vadd.f32 %v2176, %v2287
        %v2289 = vpop.f32.mrb[0].mxu0
        %2290 = vmatprep.mubr.bf16.mxu0 0
        %2291 = vmatmul.mubr.bf16.gmra.mrb[0].mxu0 %v2149
        %v2292 = vpop.f32.mrb[0].mxu0
        %v2293 = vadd.f32 %v2176, %v2292
        %v2294 = vpop.f32.mrb[0].mxu0
        %v2295 = vpop.f32.mrb[0].mxu0
        %v2296 = vadd.f32 %v2176, %v2295
        %v2297 = vpop.f32.mrb[0].mxu0
        %2298 = vmatprep.mubr.bf16.mxu0 0
        %2299 = vmatmul.mubr.bf16.gmra.mrb[0].mxu0 %v2150
        %v2300 = vpop.f32.mrb[0].mxu0
        %v2301 = vadd.f32 %v2176, %v2300
        %v2302 = vpop.f32.mrb[0].mxu0
        %v2303 = vpop.f32.mrb[0].mxu0
        %v2304 = vadd.f32 %v2176, %v2303
        %v2305 = vpop.f32.mrb[0].mxu0
        %2306 = vmatprep.mubr.bf16.mxu0 0
        %2307 = vmatmul.mubr.bf16.gmra.mrb[0].mxu0 %v2151
        %v2308 = vpop.f32.mrb[0].mxu0
        %v2309 = vadd.f32 %v2176, %v2308
        %v2310 = vpop.f32.mrb[0].mxu0
        %v2311 = vpop.f32.mrb[0].mxu0
        %v2312 = vadd.f32 %v2176, %v2311
        %v2313 = vpop.f32.mrb[0].mxu0
        %2314 = vmatprep.mubr.bf16.mxu0 0
        %2315 = vmatmul.mubr.bf16.gmra.mrb[0].mxu0 %v2152
        %v2316 = vpop.f32.mrb[0].mxu0
        %v2317 = vadd.f32 %v2176, %v2316
        %v2318 = vpop.f32.mrb[0].mxu0
        %v2319 = vpop.f32.mrb[0].mxu0
        %v2320 = vadd.f32 %v2176, %v2319
        %v2321 = vpop.f32.mrb[0].mxu0
        %2322 = vmatprep.mubr.bf16.mxu0 0
        %2323 = vmatmul.mubr.bf16.gmra.mrb[0].mxu0 %v2153
        %v2324 = vpop.f32.mrb[0].mxu0
        %v2325 = vadd.f32 %v2176, %v2324
        %v2326 = vpop.f32.mrb[0].mxu0
        %v2327 = vpop.f32.mrb[0].mxu0
        %v2328 = vadd.f32 %v2176, %v2327
        %v2329 = vpop.f32.mrb[0].mxu0
        %2330 = vmatprep.mubr.bf16.mxu0 0
        %2331 = vmatmul.mubr.bf16.gmra.mrb[0].mxu0 %v2154
        %v2332 = vpop.f32.mrb[0].mxu0
        %v2333 = vadd.f32 %v2176, %v2332
        %v2334 = vpop.f32.mrb[0].mxu0
        %v2335 = vpop.f32.mrb[0].mxu0
        %v2336 = vadd.f32 %v2176, %v2335
        %v2337 = vpop.f32.mrb[0].mxu0
        %2338 = vdwg.mxu0
        %2339 = vst [vmem:[%s669] sm:$0xff] %v925
        %2340 = vst [vmem:[%s669 + $0x8] sm:$0xff] %v926
        %2341 = vst [vmem:[%s669 + $0x10] sm:$0xff] %v927
        %2342 = vst [vmem:[%s669 + $0x18] sm:$0xff] %v928
        %2343 = vst [vmem:[%s669 + $0x20] sm:$0xff] %v929
        %2344 = vst [vmem:[%s669 + $0x28] sm:$0xff] %v930
        %2345 = vst [vmem:[%s669 + $0x30] sm:$0xff] %v931
        %2346 = vst [vmem:[%s669 + $0x38] sm:$0xff] %v932
        %2347 = vst [vmem:[%s669 + $0x40] sm:$0xff] %v933
        %2348 = vst [vmem:[%s669 + $0x48] sm:$0xff] %v934
        %2349 = vst [vmem:[%s669 + $0x50] sm:$0xff] %v935
        %2350 = vst [vmem:[%s669 + $0x58] sm:$0xff] %v936
        %2351 = vst [vmem:[%s669 + $0x60] sm:$0xff] %v937
        %2352 = vst [vmem:[%s669 + $0x68] sm:$0xff] %v938
        %2353 = vst [vmem:[%s669 + $0x70] sm:$0xff] %v939
        %2354 = vst [vmem:[%s669 + $0x78] sm:$0xff] %v940
        %2355 = vst [vmem:[%s669 + $0x80] sm:$0xff] %v941
        %2356 = vst [vmem:[%s669 + $0x88] sm:$0xff] %v942
        %2357 = vst [vmem:[%s669 + $0x90] sm:$0xff] %v943
        %2358 = vst [vmem:[%s669 + $0x98] sm:$0xff] %v944
        %2359 = vst.msk [vmem:[%s675] sm:$0xff] %vm1208, %v1139
        %2360 = vst.msk [vmem:[%s675 + $0x8] sm:$0xff] %vm1208, %v1140
        %2361 = vst.msk [vmem:[%s675 + $0x10] sm:$0xff] %vm1208, %v1141
        %2362 = vst.msk [vmem:[%s675 + $0x18] sm:$0xff] %vm1208, %v1142
        %2363 = vst.msk [vmem:[%s675 + $0x20] sm:$0xff] %vm1208, %v1143
        %2364 = vst.msk [vmem:[%s675 + $0x28] sm:$0xff] %vm1208, %v1144
        %2365 = vst.msk [vmem:[%s675 + $0x30] sm:$0xff] %vm1208, %v1145
        %2366 = vst.msk [vmem:[%s675 + $0x38] sm:$0xff] %vm1208, %v1146
        %2367 = vst.msk [vmem:[%s675 + $0x40] sm:$0xff] %vm1208, %v1147
        %2368 = vst.msk [vmem:[%s675 + $0x48] sm:$0xff] %vm1208, %v1148
        %2369 = vst.msk [vmem:[%s675 + $0x50] sm:$0xff] %vm1208, %v1149
        %2370 = vst.msk [vmem:[%s675 + $0x58] sm:$0xff] %vm1208, %v1150
        %2371 = vst.msk [vmem:[%s675 + $0x60] sm:$0xff] %vm1208, %v1151
        %2372 = vst.msk [vmem:[%s675 + $0x68] sm:$0xff] %vm1208, %v1152
        %2373 = vst.msk [vmem:[%s675 + $0x70] sm:$0xff] %vm1208, %v1153
        %2374 = vst.msk [vmem:[%s675 + $0x78] sm:$0xff] %vm1208, %v1154
        %2375 = vst.msk [vmem:[%s675 + $0x80] sm:$0xff] %vm1208, %v1155
        %2376 = vst.msk [vmem:[%s675 + $0x88] sm:$0xff] %vm1208, %v1156
        %2377 = vst.msk [vmem:[%s675 + $0x90] sm:$0xff] %vm1208, %v1157
        %2378 = vst.msk [vmem:[%s675 + $0x98] sm:$0xff] %vm1208, %v1158
        %2379 = vst.msk [vmem:[%s681] sm:$0xff] %vm781, %v1352
        %2380 = vst.msk [vmem:[%s681 + $0x8] sm:$0xff] %vm781, %v1353
        %2381 = vst.msk [vmem:[%s681 + $0x10] sm:$0xff] %vm781, %v1354
        %2382 = vst.msk [vmem:[%s681 + $0x18] sm:$0xff] %vm781, %v1355
        %2383 = vst.msk [vmem:[%s681 + $0x20] sm:$0xff] %vm781, %v1356
        %2384 = vst.msk [vmem:[%s681 + $0x28] sm:$0xff] %vm781, %v1357
        %2385 = vst.msk [vmem:[%s681 + $0x30] sm:$0xff] %vm781, %v1358
        %2386 = vst.msk [vmem:[%s681 + $0x38] sm:$0xff] %vm781, %v1359
        %2387 = vst.msk [vmem:[%s681 + $0x40] sm:$0xff] %vm781, %v1360
        %2388 = vst.msk [vmem:[%s681 + $0x48] sm:$0xff] %vm781, %v1361
        %2389 = vst.msk [vmem:[%s681 + $0x50] sm:$0xff] %vm781, %v1362
        %2390 = vst.msk [vmem:[%s681 + $0x58] sm:$0xff] %vm781, %v1363
        %2391 = vst.msk [vmem:[%s681 + $0x60] sm:$0xff] %vm781, %v1364
        %2392 = vst.msk [vmem:[%s681 + $0x68] sm:$0xff] %vm781, %v1365
        %2393 = vst.msk [vmem:[%s681 + $0x70] sm:$0xff] %vm781, %v1366
        %2394 = vst.msk [vmem:[%s681 + $0x78] sm:$0xff] %vm781, %v1367
        %2395 = vst.msk [vmem:[%s681 + $0x80] sm:$0xff] %vm781, %v1368
        %2396 = vst.msk [vmem:[%s681 + $0x88] sm:$0xff] %vm781, %v1369
        %2397 = vst.msk [vmem:[%s681 + $0x90] sm:$0xff] %vm781, %v1370
        %2398 = vst.msk [vmem:[%s681 + $0x98] sm:$0xff] %vm781, %v1371
        %2399 = vst.msk [vmem:[%s687] sm:$0xff] %vm1573, %v1470
        %2400 = vst.msk [vmem:[%s687 + $0x8] sm:$0xff] %vm1573, %v1473
        %2401 = vst.msk [vmem:[%s687 + $0x10] sm:$0xff] %vm1573, %v1478
        %2402 = vst.msk [vmem:[%s687 + $0x18] sm:$0xff] %vm1573, %v1481
        %2403 = vst.msk [vmem:[%s687 + $0x20] sm:$0xff] %vm1573, %v1486
        %2404 = vst.msk [vmem:[%s687 + $0x28] sm:$0xff] %vm1573, %v1489
        %2405 = vst.msk [vmem:[%s687 + $0x30] sm:$0xff] %vm1573, %v1494
        %2406 = vst.msk [vmem:[%s687 + $0x38] sm:$0xff] %vm1573, %v1497
        %2407 = vst.msk [vmem:[%s687 + $0x40] sm:$0xff] %vm1573, %v1502
        %2408 = vst.msk [vmem:[%s687 + $0x48] sm:$0xff] %vm1573, %v1505
        %2409 = vst.msk [vmem:[%s687 + $0x50] sm:$0xff] %vm1573, %v1510
        %2410 = vst.msk [vmem:[%s687 + $0x58] sm:$0xff] %vm1573, %v1513
        %2411 = vst.msk [vmem:[%s687 + $0x60] sm:$0xff] %vm1573, %v1518
        %2412 = vst.msk [vmem:[%s687 + $0x68] sm:$0xff] %vm1573, %v1521
        %2413 = vst.msk [vmem:[%s687 + $0x70] sm:$0xff] %vm1573, %v1526
        %2414 = vst.msk [vmem:[%s687 + $0x78] sm:$0xff] %vm1573, %v1529
        %2415 = vst.msk [vmem:[%s687 + $0x80] sm:$0xff] %vm1573, %v1534
        %2416 = vst.msk [vmem:[%s687 + $0x88] sm:$0xff] %vm1573, %v1537
        %2417 = vst.msk [vmem:[%s687 + $0x90] sm:$0xff] %vm1573, %v1542
        %2418 = vst.msk [vmem:[%s687 + $0x98] sm:$0xff] %vm1573, %v1545
        %2419 = vst.msk [vmem:[%s662] sm:$0xff] %vm781, %v2261
        %2420 = vst.msk [vmem:[%s662 + $0x8] sm:$0xff] %vm781, %v2264
        %2421 = vst.msk [vmem:[%s662 + $0x10] sm:$0xff] %vm781, %v2269
        %2422 = vst.msk [vmem:[%s662 + $0x18] sm:$0xff] %vm781, %v2272
        %2423 = vst.msk [vmem:[%s662 + $0x20] sm:$0xff] %vm781, %v2277
        %2424 = vst.msk [vmem:[%s662 + $0x28] sm:$0xff] %vm781, %v2280
        %2425 = vst.msk [vmem:[%s662 + $0x30] sm:$0xff] %vm781, %v2285
        %2426 = vst.msk [vmem:[%s662 + $0x38] sm:$0xff] %vm781, %v2288
        %2427 = vst.msk [vmem:[%s662 + $0x40] sm:$0xff] %vm781, %v2293
        %2428 = vst.msk [vmem:[%s662 + $0x48] sm:$0xff] %vm781, %v2296
        %2429 = vst.msk [vmem:[%s662 + $0x50] sm:$0xff] %vm781, %v2301
        %2430 = vst.msk [vmem:[%s662 + $0x58] sm:$0xff] %vm781, %v2304
        %2431 = vst.msk [vmem:[%s662 + $0x60] sm:$0xff] %vm781, %v2309
        %2432 = vst.msk [vmem:[%s662 + $0x68] sm:$0xff] %vm781, %v2312
        %2433 = vst.msk [vmem:[%s662 + $0x70] sm:$0xff] %vm781, %v2317
        %2434 = vst.msk [vmem:[%s662 + $0x78] sm:$0xff] %vm781, %v2320
        %2435 = vst.msk [vmem:[%s662 + $0x80] sm:$0xff] %vm781, %v2325
        %2436 = vst.msk [vmem:[%s662 + $0x88] sm:$0xff] %vm781, %v2328
        %2437 = vst.msk [vmem:[%s662 + $0x90] sm:$0xff] %vm781, %v2333
        %2438 = vst.msk [vmem:[%s662 + $0x98] sm:$0xff] %vm781, %v2336
        %s2439 = sand.u32 %s406, 1
        %s2440 = sand.u32 %s406, 1
        %s2441 = smul.addr %s2440, 160
        %s2442 = scalar_lea.vmem [#allocation2], %s2441
        %s2443 = sand.u32 %s432, 1
        %s2444 = scalar_lea.sflag [#allocation4], %s2443
        %s2445 = sand.u32 %s432, 1
        %s2446 = smul.addr %s2445, 160
        %s2447 = scalar_lea.vmem [#allocation3], %s2446
        %s2448 = sand.u32 %s458, 1
        %s2449 = sand.u32 %s458, 1
        %s2450 = smul.addr %s2449, 160
        %s2451 = scalar_lea.vmem [#allocation5], %s2450
        %s2452 = sand.u32 %s484, 1
        %s2453 = sand.u32 %s484, 1
        %s2454 = smul.addr %s2453, 160
        %s2455 = scalar_lea.vmem [#allocation6], %s2454
        %s2456 = sand.u32 %s510, 1
        %s2457 = sand.u32 %s510, 1
        %s2458 = smul.addr %s2457, 160
        %s2459 = scalar_lea.vmem [#allocation7], %s2458
        // Predicated region
        $region89: #{tpu_custom_call.1} parent=87 // pred_check
          %p2460 = pneg %p416
        $region90: #{tpu_custom_call.1} parent=87 // pred_check_branch
          %2462 = sbr.rel (%p2460) target = $region92
        $region91: #{tpu_custom_call.1} parent=87 // pred_region
          %s2463 = smul.u32 20, %s36
          %s2464 = ssub.s32 38, %s2463
          %p2465 = scmp.lt.s32.totalorder %s2464, 20
          %s2466 = scalar_select %p2465, %s2464, 20
          %s2467 = smul.u32 128, %s2466
          %p2468 = scmp.ne.s32.totalorder 0, %s2467
          %s2469 = smul.addr %s2463, 8
          %s2470 = scalar_lea.vmem %s17, %s2469
          // Predicated region
          $region93: #{tpu_custom_call.1} parent=91 // pred_check
            %p2471 = pneg %p2468
          $region94: #{tpu_custom_call.1} parent=91 // pred_check_branch
            %2473 = sbr.rel (%p2471) target = $region96
          $region95: #{tpu_custom_call.1} parent=91 // pred_region
            // Predicated region
            $region97: #{tpu_custom_call.1} parent=95 // pred_check
              _
            $region98: #{tpu_custom_call.1} parent=95 // pred_check_branch
              %2475 = sbr.rel (0) target = $region100
            $region99: #{tpu_custom_call.1} parent=95 // pred_region
              // Predicated region
              $region119: #{tpu_custom_call.1} parent=99 // pred_check
                _
              $region120: #{tpu_custom_call.1} parent=99 // pred_check_branch
                %2563 = sbr.rel (0) target = $region122
              $region121: #{tpu_custom_call.1} parent=99 // pred_region
                %s2564 = sdiv.u32.pop %s2466, 20
                %s2565 = srem.u32.pop %s2466, 20
                // While loop
                $region123: #{tpu_custom_call.1} parent=121 // loop_pre_header
                  _
                $region124: #{tpu_custom_call.1} parent=121 // loop_header
                  %s2567 = sphi 0, %s2569
                  %p2568 = scmp.ge.s32.totalorder %s2567, %s2564
                  %s2572 = sphi 0, %s2617
                  %s2573 = sphi %s2442, %s2620
                  %s2574 = sphi %s2470, %s2621
                $region125: #{tpu_custom_call.1} parent=121 // loop_header_branch
                  %2571 = sbr.rel (%p2568) target = $region129
                $region126: #{tpu_custom_call.1} parent=121 // loop_body
                  %v2575 = vld [vmem:[%s2573] sm:$0xff]
                  %2576 = vst [vmem:[%s2574] sm:$0xff] %v2575
                  %v2577 = vld [vmem:[%s2573 + $0x8] sm:$0xff]
                  %2578 = vst [vmem:[%s2574 + $0x8] sm:$0xff] %v2577
                  %v2579 = vld [vmem:[%s2573 + $0x10] sm:$0xff]
                  %2580 = vst [vmem:[%s2574 + $0x10] sm:$0xff] %v2579
                  %v2581 = vld [vmem:[%s2573 + $0x18] sm:$0xff]
                  %2582 = vst [vmem:[%s2574 + $0x18] sm:$0xff] %v2581
                  %v2583 = vld [vmem:[%s2573 + $0x20] sm:$0xff]
                  %2584 = vst [vmem:[%s2574 + $0x20] sm:$0xff] %v2583
                  %v2585 = vld [vmem:[%s2573 + $0x28] sm:$0xff]
                  %2586 = vst [vmem:[%s2574 + $0x28] sm:$0xff] %v2585
                  %v2587 = vld [vmem:[%s2573 + $0x30] sm:$0xff]
                  %2588 = vst [vmem:[%s2574 + $0x30] sm:$0xff] %v2587
                  %v2589 = vld [vmem:[%s2573 + $0x38] sm:$0xff]
                  %2590 = vst [vmem:[%s2574 + $0x38] sm:$0xff] %v2589
                  %v2591 = vld [vmem:[%s2573 + $0x40] sm:$0xff]
                  %2592 = vst [vmem:[%s2574 + $0x40] sm:$0xff] %v2591
                  %v2593 = vld [vmem:[%s2573 + $0x48] sm:$0xff]
                  %2594 = vst [vmem:[%s2574 + $0x48] sm:$0xff] %v2593
                  %v2595 = vld [vmem:[%s2573 + $0x50] sm:$0xff]
                  %2596 = vst [vmem:[%s2574 + $0x50] sm:$0xff] %v2595
                  %v2597 = vld [vmem:[%s2573 + $0x58] sm:$0xff]
                  %2598 = vst [vmem:[%s2574 + $0x58] sm:$0xff] %v2597
                  %v2599 = vld [vmem:[%s2573 + $0x60] sm:$0xff]
                  %2600 = vst [vmem:[%s2574 + $0x60] sm:$0xff] %v2599
                  %v2601 = vld [vmem:[%s2573 + $0x68] sm:$0xff]
                  %2602 = vst [vmem:[%s2574 + $0x68] sm:$0xff] %v2601
                  %v2603 = vld [vmem:[%s2573 + $0x70] sm:$0xff]
                  %2604 = vst [vmem:[%s2574 + $0x70] sm:$0xff] %v2603
                  %v2605 = vld [vmem:[%s2573 + $0x78] sm:$0xff]
                  %2606 = vst [vmem:[%s2574 + $0x78] sm:$0xff] %v2605
                  %v2607 = vld [vmem:[%s2573 + $0x80] sm:$0xff]
                  %2608 = vst [vmem:[%s2574 + $0x80] sm:$0xff] %v2607
                  %v2609 = vld [vmem:[%s2573 + $0x88] sm:$0xff]
                  %2610 = vst [vmem:[%s2574 + $0x88] sm:$0xff] %v2609
                  %v2611 = vld [vmem:[%s2573 + $0x90] sm:$0xff]
                  %2612 = vst [vmem:[%s2574 + $0x90] sm:$0xff] %v2611
                  %v2613 = vld [vmem:[%s2573 + $0x98] sm:$0xff]
                  %2614 = vst [vmem:[%s2574 + $0x98] sm:$0xff] %v2613
                  %s2615 = sadd.s32 1, %s2572
                  %p2616 = scmp.ge.s32.totalorder %s2615, %s2564
                  %s2617 = scalar_select %p2616, 0, %s2615
                  %s2618 = smul.u32 %s2617, 160
                  %s2619 = smul.u32 %s2617, 160
                  %s2620 = scalar_lea.vmem %s2442, %s2618 [#allocation2]
                  %s2621 = scalar_lea.vmem %s2470, %s2619
                $region127: #{tpu_custom_call.1} parent=121 // loop_footer
                  %s2569 = sadd.s32 %s2567, 1
                $region128: #{tpu_custom_call.1} parent=121 // loop_footer_branch
                  %2566 = sbr.rel target = $region124
                $region129: #{tpu_custom_call.1} parent=121 // loop_exit
                  _
                %s2622 = sdiv.u32.pop %s2466, 20
                %s2623 = srem.u32.pop %s2466, 20
                %s2624 = smul.u32 %s2622, 20
                %s2625 = smul.u32 8, %s2624
                %s2626 = scalar_lea.vmem %s2442, %s2625 [#allocation2]
                %s2627 = smul.u32 8, %s2624
                %s2628 = scalar_lea.vmem %s2470, %s2627
                // While loop
                $region130: #{tpu_custom_call.1} parent=121 // loop_pre_header
                  _
                $region131: #{tpu_custom_call.1} parent=121 // loop_header
                  %s2630 = sphi 0, %s2632
                  %p2631 = scmp.ge.s32.totalorder %s2630, %s2623
                  %s2635 = sphi 0, %s2642
                  %s2636 = sphi %s2626, %s2645
                  %s2637 = sphi %s2628, %s2646
                $region132: #{tpu_custom_call.1} parent=121 // loop_header_branch
                  %2634 = sbr.rel (%p2631) target = $region136
                $region133: #{tpu_custom_call.1} parent=121 // loop_body
                  %v2638 = vld [vmem:[%s2636] sm:$0xff]
                  %2639 = vst [vmem:[%s2637] sm:$0xff] %v2638
                  %s2640 = sadd.s32 1, %s2635
                  %p2641 = scmp.ge.s32.totalorder %s2640, %s2623
                  %s2642 = scalar_select %p2641, 0, %s2640
                  %s2643 = smul.u32 %s2642, 8
                  %s2644 = smul.u32 %s2642, 8
                  %s2645 = scalar_lea.vmem %s2626, %s2643 [#allocation2]
                  %s2646 = scalar_lea.vmem %s2628, %s2644
                $region134: #{tpu_custom_call.1} parent=121 // loop_footer
                  %s2632 = sadd.s32 %s2630, 1
                $region135: #{tpu_custom_call.1} parent=121 // loop_footer_branch
                  %2629 = sbr.rel target = $region131
                $region136: #{tpu_custom_call.1} parent=121 // loop_exit
                  _
              $region122: #{tpu_custom_call.1} parent=99 // pred_fallthru
                _
              // Predicated region
              $region137: #{tpu_custom_call.1} parent=99 // pred_check
                _
              $region138: #{tpu_custom_call.1} parent=99 // pred_check_branch
                %2648 = sbr.rel target = $region140
              $region139: #{tpu_custom_call.1} parent=99 // pred_region
                _
              $region140: #{tpu_custom_call.1} parent=99 // pred_fallthru
                _
            $region100: #{tpu_custom_call.1} parent=95 // pred_fallthru
              _
            // Predicated region
            $region101: #{tpu_custom_call.1} parent=95 // pred_check
              _
            $region102: #{tpu_custom_call.1} parent=95 // pred_check_branch
              %2477 = sbr.rel target = $region104
            $region103: #{tpu_custom_call.1} parent=95 // pred_region
              %s2479 = sdiv.u32.pop %s2466, 20
              %s2480 = srem.u32.pop %s2466, 20
              // While loop
              $region105: #{tpu_custom_call.1} parent=103 // loop_pre_header
                _
              $region106: #{tpu_custom_call.1} parent=103 // loop_header
                %s2482 = sphi 0, %s2484
                %p2483 = scmp.ge.s32.totalorder %s2482, %s2479
                %s2487 = sphi 0, %s2532
                %s2488 = sphi %s2442, %s2535
                %s2489 = sphi %s2470, %s2536
              $region107: #{tpu_custom_call.1} parent=103 // loop_header_branch
                %2486 = sbr.rel (%p2483) target = $region111
              $region108: #{tpu_custom_call.1} parent=103 // loop_body
                %v2490 = vld [vmem:[%s2488] sm:$0xff]
                %2491 = vst [vmem:[%s2489] sm:$0xff] %v2490
                %v2492 = vld [vmem:[%s2488 + $0x8] sm:$0xff]
                %2493 = vst [vmem:[%s2489 + $0x8] sm:$0xff] %v2492
                %v2494 = vld [vmem:[%s2488 + $0x10] sm:$0xff]
                %2495 = vst [vmem:[%s2489 + $0x10] sm:$0xff] %v2494
                %v2496 = vld [vmem:[%s2488 + $0x18] sm:$0xff]
                %2497 = vst [vmem:[%s2489 + $0x18] sm:$0xff] %v2496
                %v2498 = vld [vmem:[%s2488 + $0x20] sm:$0xff]
                %2499 = vst [vmem:[%s2489 + $0x20] sm:$0xff] %v2498
                %v2500 = vld [vmem:[%s2488 + $0x28] sm:$0xff]
                %2501 = vst [vmem:[%s2489 + $0x28] sm:$0xff] %v2500
                %v2502 = vld [vmem:[%s2488 + $0x30] sm:$0xff]
                %2503 = vst [vmem:[%s2489 + $0x30] sm:$0xff] %v2502
                %v2504 = vld [vmem:[%s2488 + $0x38] sm:$0xff]
                %2505 = vst [vmem:[%s2489 + $0x38] sm:$0xff] %v2504
                %v2506 = vld [vmem:[%s2488 + $0x40] sm:$0xff]
                %2507 = vst [vmem:[%s2489 + $0x40] sm:$0xff] %v2506
                %v2508 = vld [vmem:[%s2488 + $0x48] sm:$0xff]
                %2509 = vst [vmem:[%s2489 + $0x48] sm:$0xff] %v2508
                %v2510 = vld [vmem:[%s2488 + $0x50] sm:$0xff]
                %2511 = vst [vmem:[%s2489 + $0x50] sm:$0xff] %v2510
                %v2512 = vld [vmem:[%s2488 + $0x58] sm:$0xff]
                %2513 = vst [vmem:[%s2489 + $0x58] sm:$0xff] %v2512
                %v2514 = vld [vmem:[%s2488 + $0x60] sm:$0xff]
                %2515 = vst [vmem:[%s2489 + $0x60] sm:$0xff] %v2514
                %v2516 = vld [vmem:[%s2488 + $0x68] sm:$0xff]
                %2517 = vst [vmem:[%s2489 + $0x68] sm:$0xff] %v2516
                %v2518 = vld [vmem:[%s2488 + $0x70] sm:$0xff]
                %2519 = vst [vmem:[%s2489 + $0x70] sm:$0xff] %v2518
                %v2520 = vld [vmem:[%s2488 + $0x78] sm:$0xff]
                %2521 = vst [vmem:[%s2489 + $0x78] sm:$0xff] %v2520
                %v2522 = vld [vmem:[%s2488 + $0x80] sm:$0xff]
                %2523 = vst [vmem:[%s2489 + $0x80] sm:$0xff] %v2522
                %v2524 = vld [vmem:[%s2488 + $0x88] sm:$0xff]
                %2525 = vst [vmem:[%s2489 + $0x88] sm:$0xff] %v2524
                %v2526 = vld [vmem:[%s2488 + $0x90] sm:$0xff]
                %2527 = vst [vmem:[%s2489 + $0x90] sm:$0xff] %v2526
                %v2528 = vld [vmem:[%s2488 + $0x98] sm:$0xff]
                %2529 = vst [vmem:[%s2489 + $0x98] sm:$0xff] %v2528
                %s2530 = sadd.s32 1, %s2487
                %p2531 = scmp.ge.s32.totalorder %s2530, %s2479
                %s2532 = scalar_select %p2531, 0, %s2530
                %s2533 = smul.u32 %s2532, 160
                %s2534 = smul.u32 %s2532, 160
                %s2535 = scalar_lea.vmem %s2442, %s2533 [#allocation2]
                %s2536 = scalar_lea.vmem %s2470, %s2534
              $region109: #{tpu_custom_call.1} parent=103 // loop_footer
                %s2484 = sadd.s32 %s2482, 1
              $region110: #{tpu_custom_call.1} parent=103 // loop_footer_branch
                %2481 = sbr.rel target = $region106
              $region111: #{tpu_custom_call.1} parent=103 // loop_exit
                _
              %s2537 = sdiv.u32.pop %s2466, 20
              %s2538 = srem.u32.pop %s2466, 20
              %s2539 = smul.u32 %s2537, 20
              %s2540 = smul.u32 8, %s2539
              %s2541 = scalar_lea.vmem %s2442, %s2540 [#allocation2]
              %s2542 = smul.u32 8, %s2539
              %s2543 = scalar_lea.vmem %s2470, %s2542
              // While loop
              $region112: #{tpu_custom_call.1} parent=103 // loop_pre_header
                _
              $region113: #{tpu_custom_call.1} parent=103 // loop_header
                %s2545 = sphi 0, %s2547
                %p2546 = scmp.ge.s32.totalorder %s2545, %s2538
                %s2550 = sphi 0, %s2557
                %s2551 = sphi %s2541, %s2560
                %s2552 = sphi %s2543, %s2561
              $region114: #{tpu_custom_call.1} parent=103 // loop_header_branch
                %2549 = sbr.rel (%p2546) target = $region118
              $region115: #{tpu_custom_call.1} parent=103 // loop_body
                %v2553 = vld [vmem:[%s2551] sm:$0xff]
                %2554 = vst [vmem:[%s2552] sm:$0xff] %v2553
                %s2555 = sadd.s32 1, %s2550
                %p2556 = scmp.ge.s32.totalorder %s2555, %s2538
                %s2557 = scalar_select %p2556, 0, %s2555
                %s2558 = smul.u32 %s2557, 8
                %s2559 = smul.u32 %s2557, 8
                %s2560 = scalar_lea.vmem %s2541, %s2558 [#allocation2]
                %s2561 = scalar_lea.vmem %s2543, %s2559
              $region116: #{tpu_custom_call.1} parent=103 // loop_footer
                %s2547 = sadd.s32 %s2545, 1
              $region117: #{tpu_custom_call.1} parent=103 // loop_footer_branch
                %2544 = sbr.rel target = $region113
              $region118: #{tpu_custom_call.1} parent=103 // loop_exit
                _
            $region104: #{tpu_custom_call.1} parent=95 // pred_fallthru
              _
          $region96: #{tpu_custom_call.1} parent=91 // pred_fallthru
            _
          %2649 = vnop
        $region92: #{tpu_custom_call.1} parent=87 // pred_fallthru
          _
        // Predicated region
        $region141: #{tpu_custom_call.1} parent=87 // pred_check
          %p2650 = pneg %p442
        $region142: #{tpu_custom_call.1} parent=87 // pred_check_branch
          %2652 = sbr.rel (%p2650) target = $region144
        $region143: #{tpu_custom_call.1} parent=87 // pred_region
          %s2653 = smul.u32 20, %s36
          %s2654 = ssub.s32 38, %s2653
          %p2655 = scmp.lt.s32.totalorder %s2654, 20
          %s2656 = scalar_select %p2655, %s2654, 20
          %s2657 = smul.u32 128, %s2656
          %s2659 = ssub.s32 2560, %s2657
          %2660 = vsyncadd %s2444, %s2659
          %p2661 = scmp.ne.s32.totalorder 0, %s2657
          %s2662 = smul.addr %s2653, 128
          %s2663 = scalar_lea.hbm %s18, %s2662
          %s2664 = smul.u32 8, %s2656
          %s2665 = sshll.u32 %s2447, 4
          %s2666 = int_to_ptr.vmem [resolvable:$true] %s2665
          %s2667 = sshll.u32 %s2664, 4
          %2671 = dma.vmem_to_hbm [thread:$0]  (%p2661), %s2666, %s2667, %s2663, %s2444, 128, 128, 8
        $region144: #{tpu_custom_call.1} parent=87 // pred_fallthru
          _
        // Predicated region
        $region145: #{tpu_custom_call.1} parent=87 // pred_check
          %p2672 = pneg %p468
        $region146: #{tpu_custom_call.1} parent=87 // pred_check_branch
          %2674 = sbr.rel (%p2672) target = $region148
        $region147: #{tpu_custom_call.1} parent=87 // pred_region
          %s2675 = smul.u32 20, %s36
          %s2676 = ssub.s32 38, %s2675
          %p2677 = scmp.lt.s32.totalorder %s2676, 20
          %s2678 = scalar_select %p2677, %s2676, 20
          %s2679 = smul.u32 128, %s2678
          %p2680 = scmp.ne.s32.totalorder 0, %s2679
          %s2681 = smul.addr %s2675, 8
          %s2682 = scalar_lea.vmem %s19, %s2681
          // Predicated region
          $region149: #{tpu_custom_call.1} parent=147 // pred_check
            %p2683 = pneg %p2680
          $region150: #{tpu_custom_call.1} parent=147 // pred_check_branch
            %2685 = sbr.rel (%p2683) target = $region152
          $region151: #{tpu_custom_call.1} parent=147 // pred_region
            // Predicated region
            $region153: #{tpu_custom_call.1} parent=151 // pred_check
              _
            $region154: #{tpu_custom_call.1} parent=151 // pred_check_branch
              %2687 = sbr.rel (0) target = $region156
            $region155: #{tpu_custom_call.1} parent=151 // pred_region
              // Predicated region
              $region175: #{tpu_custom_call.1} parent=155 // pred_check
                _
              $region176: #{tpu_custom_call.1} parent=155 // pred_check_branch
                %2775 = sbr.rel (0) target = $region178
              $region177: #{tpu_custom_call.1} parent=155 // pred_region
                %s2776 = sdiv.u32.pop %s2678, 20
                %s2777 = srem.u32.pop %s2678, 20
                // While loop
                $region179: #{tpu_custom_call.1} parent=177 // loop_pre_header
                  _
                $region180: #{tpu_custom_call.1} parent=177 // loop_header
                  %s2779 = sphi 0, %s2781
                  %p2780 = scmp.ge.s32.totalorder %s2779, %s2776
                  %s2784 = sphi 0, %s2829
                  %s2785 = sphi %s2451, %s2832
                  %s2786 = sphi %s2682, %s2833
                $region181: #{tpu_custom_call.1} parent=177 // loop_header_branch
                  %2783 = sbr.rel (%p2780) target = $region185
                $region182: #{tpu_custom_call.1} parent=177 // loop_body
                  %v2787 = vld [vmem:[%s2785] sm:$0xff]
                  %2788 = vst [vmem:[%s2786] sm:$0xff] %v2787
                  %v2789 = vld [vmem:[%s2785 + $0x8] sm:$0xff]
                  %2790 = vst [vmem:[%s2786 + $0x8] sm:$0xff] %v2789
                  %v2791 = vld [vmem:[%s2785 + $0x10] sm:$0xff]
                  %2792 = vst [vmem:[%s2786 + $0x10] sm:$0xff] %v2791
                  %v2793 = vld [vmem:[%s2785 + $0x18] sm:$0xff]
                  %2794 = vst [vmem:[%s2786 + $0x18] sm:$0xff] %v2793
                  %v2795 = vld [vmem:[%s2785 + $0x20] sm:$0xff]
                  %2796 = vst [vmem:[%s2786 + $0x20] sm:$0xff] %v2795
                  %v2797 = vld [vmem:[%s2785 + $0x28] sm:$0xff]
                  %2798 = vst [vmem:[%s2786 + $0x28] sm:$0xff] %v2797
                  %v2799 = vld [vmem:[%s2785 + $0x30] sm:$0xff]
                  %2800 = vst [vmem:[%s2786 + $0x30] sm:$0xff] %v2799
                  %v2801 = vld [vmem:[%s2785 + $0x38] sm:$0xff]
                  %2802 = vst [vmem:[%s2786 + $0x38] sm:$0xff] %v2801
                  %v2803 = vld [vmem:[%s2785 + $0x40] sm:$0xff]
                  %2804 = vst [vmem:[%s2786 + $0x40] sm:$0xff] %v2803
                  %v2805 = vld [vmem:[%s2785 + $0x48] sm:$0xff]
                  %2806 = vst [vmem:[%s2786 + $0x48] sm:$0xff] %v2805
                  %v2807 = vld [vmem:[%s2785 + $0x50] sm:$0xff]
                  %2808 = vst [vmem:[%s2786 + $0x50] sm:$0xff] %v2807
                  %v2809 = vld [vmem:[%s2785 + $0x58] sm:$0xff]
                  %2810 = vst [vmem:[%s2786 + $0x58] sm:$0xff] %v2809
                  %v2811 = vld [vmem:[%s2785 + $0x60] sm:$0xff]
                  %2812 = vst [vmem:[%s2786 + $0x60] sm:$0xff] %v2811
                  %v2813 = vld [vmem:[%s2785 + $0x68] sm:$0xff]
                  %2814 = vst [vmem:[%s2786 + $0x68] sm:$0xff] %v2813
                  %v2815 = vld [vmem:[%s2785 + $0x70] sm:$0xff]
                  %2816 = vst [vmem:[%s2786 + $0x70] sm:$0xff] %v2815
                  %v2817 = vld [vmem:[%s2785 + $0x78] sm:$0xff]
                  %2818 = vst [vmem:[%s2786 + $0x78] sm:$0xff] %v2817
                  %v2819 = vld [vmem:[%s2785 + $0x80] sm:$0xff]
                  %2820 = vst [vmem:[%s2786 + $0x80] sm:$0xff] %v2819
                  %v2821 = vld [vmem:[%s2785 + $0x88] sm:$0xff]
                  %2822 = vst [vmem:[%s2786 + $0x88] sm:$0xff] %v2821
                  %v2823 = vld [vmem:[%s2785 + $0x90] sm:$0xff]
                  %2824 = vst [vmem:[%s2786 + $0x90] sm:$0xff] %v2823
                  %v2825 = vld [vmem:[%s2785 + $0x98] sm:$0xff]
                  %2826 = vst [vmem:[%s2786 + $0x98] sm:$0xff] %v2825
                  %s2827 = sadd.s32 1, %s2784
                  %p2828 = scmp.ge.s32.totalorder %s2827, %s2776
                  %s2829 = scalar_select %p2828, 0, %s2827
                  %s2830 = smul.u32 %s2829, 160
                  %s2831 = smul.u32 %s2829, 160
                  %s2832 = scalar_lea.vmem %s2451, %s2830 [#allocation5]
                  %s2833 = scalar_lea.vmem %s2682, %s2831
                $region183: #{tpu_custom_call.1} parent=177 // loop_footer
                  %s2781 = sadd.s32 %s2779, 1
                $region184: #{tpu_custom_call.1} parent=177 // loop_footer_branch
                  %2778 = sbr.rel target = $region180
                $region185: #{tpu_custom_call.1} parent=177 // loop_exit
                  _
                %s2834 = sdiv.u32.pop %s2678, 20
                %s2835 = srem.u32.pop %s2678, 20
                %s2836 = smul.u32 %s2834, 20
                %s2837 = smul.u32 8, %s2836
                %s2838 = scalar_lea.vmem %s2451, %s2837 [#allocation5]
                %s2839 = smul.u32 8, %s2836
                %s2840 = scalar_lea.vmem %s2682, %s2839
                // While loop
                $region186: #{tpu_custom_call.1} parent=177 // loop_pre_header
                  _
                $region187: #{tpu_custom_call.1} parent=177 // loop_header
                  %s2842 = sphi 0, %s2844
                  %p2843 = scmp.ge.s32.totalorder %s2842, %s2835
                  %s2847 = sphi 0, %s2854
                  %s2848 = sphi %s2838, %s2857
                  %s2849 = sphi %s2840, %s2858
                $region188: #{tpu_custom_call.1} parent=177 // loop_header_branch
                  %2846 = sbr.rel (%p2843) target = $region192
                $region189: #{tpu_custom_call.1} parent=177 // loop_body
                  %v2850 = vld [vmem:[%s2848] sm:$0xff]
                  %2851 = vst [vmem:[%s2849] sm:$0xff] %v2850
                  %s2852 = sadd.s32 1, %s2847
                  %p2853 = scmp.ge.s32.totalorder %s2852, %s2835
                  %s2854 = scalar_select %p2853, 0, %s2852
                  %s2855 = smul.u32 %s2854, 8
                  %s2856 = smul.u32 %s2854, 8
                  %s2857 = scalar_lea.vmem %s2838, %s2855 [#allocation5]
                  %s2858 = scalar_lea.vmem %s2840, %s2856
                $region190: #{tpu_custom_call.1} parent=177 // loop_footer
                  %s2844 = sadd.s32 %s2842, 1
                $region191: #{tpu_custom_call.1} parent=177 // loop_footer_branch
                  %2841 = sbr.rel target = $region187
                $region192: #{tpu_custom_call.1} parent=177 // loop_exit
                  _
              $region178: #{tpu_custom_call.1} parent=155 // pred_fallthru
                _
              // Predicated region
              $region193: #{tpu_custom_call.1} parent=155 // pred_check
                _
              $region194: #{tpu_custom_call.1} parent=155 // pred_check_branch
                %2860 = sbr.rel target = $region196
              $region195: #{tpu_custom_call.1} parent=155 // pred_region
                _
              $region196: #{tpu_custom_call.1} parent=155 // pred_fallthru
                _
            $region156: #{tpu_custom_call.1} parent=151 // pred_fallthru
              _
            // Predicated region
            $region157: #{tpu_custom_call.1} parent=151 // pred_check
              _
            $region158: #{tpu_custom_call.1} parent=151 // pred_check_branch
              %2689 = sbr.rel target = $region160
            $region159: #{tpu_custom_call.1} parent=151 // pred_region
              %s2691 = sdiv.u32.pop %s2678, 20
              %s2692 = srem.u32.pop %s2678, 20
              // While loop
              $region161: #{tpu_custom_call.1} parent=159 // loop_pre_header
                _
              $region162: #{tpu_custom_call.1} parent=159 // loop_header
                %s2694 = sphi 0, %s2696
                %p2695 = scmp.ge.s32.totalorder %s2694, %s2691
                %s2699 = sphi 0, %s2744
                %s2700 = sphi %s2451, %s2747
                %s2701 = sphi %s2682, %s2748
              $region163: #{tpu_custom_call.1} parent=159 // loop_header_branch
                %2698 = sbr.rel (%p2695) target = $region167
              $region164: #{tpu_custom_call.1} parent=159 // loop_body
                %v2702 = vld [vmem:[%s2700] sm:$0xff]
                %2703 = vst [vmem:[%s2701] sm:$0xff] %v2702
                %v2704 = vld [vmem:[%s2700 + $0x8] sm:$0xff]
                %2705 = vst [vmem:[%s2701 + $0x8] sm:$0xff] %v2704
                %v2706 = vld [vmem:[%s2700 + $0x10] sm:$0xff]
                %2707 = vst [vmem:[%s2701 + $0x10] sm:$0xff] %v2706
                %v2708 = vld [vmem:[%s2700 + $0x18] sm:$0xff]
                %2709 = vst [vmem:[%s2701 + $0x18] sm:$0xff] %v2708
                %v2710 = vld [vmem:[%s2700 + $0x20] sm:$0xff]
                %2711 = vst [vmem:[%s2701 + $0x20] sm:$0xff] %v2710
                %v2712 = vld [vmem:[%s2700 + $0x28] sm:$0xff]
                %2713 = vst [vmem:[%s2701 + $0x28] sm:$0xff] %v2712
                %v2714 = vld [vmem:[%s2700 + $0x30] sm:$0xff]
                %2715 = vst [vmem:[%s2701 + $0x30] sm:$0xff] %v2714
                %v2716 = vld [vmem:[%s2700 + $0x38] sm:$0xff]
                %2717 = vst [vmem:[%s2701 + $0x38] sm:$0xff] %v2716
                %v2718 = vld [vmem:[%s2700 + $0x40] sm:$0xff]
                %2719 = vst [vmem:[%s2701 + $0x40] sm:$0xff] %v2718
                %v2720 = vld [vmem:[%s2700 + $0x48] sm:$0xff]
                %2721 = vst [vmem:[%s2701 + $0x48] sm:$0xff] %v2720
                %v2722 = vld [vmem:[%s2700 + $0x50] sm:$0xff]
                %2723 = vst [vmem:[%s2701 + $0x50] sm:$0xff] %v2722
                %v2724 = vld [vmem:[%s2700 + $0x58] sm:$0xff]
                %2725 = vst [vmem:[%s2701 + $0x58] sm:$0xff] %v2724
                %v2726 = vld [vmem:[%s2700 + $0x60] sm:$0xff]
                %2727 = vst [vmem:[%s2701 + $0x60] sm:$0xff] %v2726
                %v2728 = vld [vmem:[%s2700 + $0x68] sm:$0xff]
                %2729 = vst [vmem:[%s2701 + $0x68] sm:$0xff] %v2728
                %v2730 = vld [vmem:[%s2700 + $0x70] sm:$0xff]
                %2731 = vst [vmem:[%s2701 + $0x70] sm:$0xff] %v2730
                %v2732 = vld [vmem:[%s2700 + $0x78] sm:$0xff]
                %2733 = vst [vmem:[%s2701 + $0x78] sm:$0xff] %v2732
                %v2734 = vld [vmem:[%s2700 + $0x80] sm:$0xff]
                %2735 = vst [vmem:[%s2701 + $0x80] sm:$0xff] %v2734
                %v2736 = vld [vmem:[%s2700 + $0x88] sm:$0xff]
                %2737 = vst [vmem:[%s2701 + $0x88] sm:$0xff] %v2736
                %v2738 = vld [vmem:[%s2700 + $0x90] sm:$0xff]
                %2739 = vst [vmem:[%s2701 + $0x90] sm:$0xff] %v2738
                %v2740 = vld [vmem:[%s2700 + $0x98] sm:$0xff]
                %2741 = vst [vmem:[%s2701 + $0x98] sm:$0xff] %v2740
                %s2742 = sadd.s32 1, %s2699
                %p2743 = scmp.ge.s32.totalorder %s2742, %s2691
                %s2744 = scalar_select %p2743, 0, %s2742
                %s2745 = smul.u32 %s2744, 160
                %s2746 = smul.u32 %s2744, 160
                %s2747 = scalar_lea.vmem %s2451, %s2745 [#allocation5]
                %s2748 = scalar_lea.vmem %s2682, %s2746
              $region165: #{tpu_custom_call.1} parent=159 // loop_footer
                %s2696 = sadd.s32 %s2694, 1
              $region166: #{tpu_custom_call.1} parent=159 // loop_footer_branch
                %2693 = sbr.rel target = $region162
              $region167: #{tpu_custom_call.1} parent=159 // loop_exit
                _
              %s2749 = sdiv.u32.pop %s2678, 20
              %s2750 = srem.u32.pop %s2678, 20
              %s2751 = smul.u32 %s2749, 20
              %s2752 = smul.u32 8, %s2751
              %s2753 = scalar_lea.vmem %s2451, %s2752 [#allocation5]
              %s2754 = smul.u32 8, %s2751
              %s2755 = scalar_lea.vmem %s2682, %s2754
              // While loop
              $region168: #{tpu_custom_call.1} parent=159 // loop_pre_header
                _
              $region169: #{tpu_custom_call.1} parent=159 // loop_header
                %s2757 = sphi 0, %s2759
                %p2758 = scmp.ge.s32.totalorder %s2757, %s2750
                %s2762 = sphi 0, %s2769
                %s2763 = sphi %s2753, %s2772
                %s2764 = sphi %s2755, %s2773
              $region170: #{tpu_custom_call.1} parent=159 // loop_header_branch
                %2761 = sbr.rel (%p2758) target = $region174
              $region171: #{tpu_custom_call.1} parent=159 // loop_body
                %v2765 = vld [vmem:[%s2763] sm:$0xff]
                %2766 = vst [vmem:[%s2764] sm:$0xff] %v2765
                %s2767 = sadd.s32 1, %s2762
                %p2768 = scmp.ge.s32.totalorder %s2767, %s2750
                %s2769 = scalar_select %p2768, 0, %s2767
                %s2770 = smul.u32 %s2769, 8
                %s2771 = smul.u32 %s2769, 8
                %s2772 = scalar_lea.vmem %s2753, %s2770 [#allocation5]
                %s2773 = scalar_lea.vmem %s2755, %s2771
              $region172: #{tpu_custom_call.1} parent=159 // loop_footer
                %s2759 = sadd.s32 %s2757, 1
              $region173: #{tpu_custom_call.1} parent=159 // loop_footer_branch
                %2756 = sbr.rel target = $region169
              $region174: #{tpu_custom_call.1} parent=159 // loop_exit
                _
            $region160: #{tpu_custom_call.1} parent=151 // pred_fallthru
              _
          $region152: #{tpu_custom_call.1} parent=147 // pred_fallthru
            _
          %2861 = vnop
        $region148: #{tpu_custom_call.1} parent=87 // pred_fallthru
          _
        // Predicated region
        $region197: #{tpu_custom_call.1} parent=87 // pred_check
          %p2862 = pneg %p494
        $region198: #{tpu_custom_call.1} parent=87 // pred_check_branch
          %2864 = sbr.rel (%p2862) target = $region200
        $region199: #{tpu_custom_call.1} parent=87 // pred_region
          %s2865 = smul.u32 20, %s36
          %s2866 = ssub.s32 38, %s2865
          %p2867 = scmp.lt.s32.totalorder %s2866, 20
          %s2868 = scalar_select %p2867, %s2866, 20
          %s2869 = smul.u32 128, %s2868
          %p2870 = scmp.ne.s32.totalorder 0, %s2869
          %s2871 = smul.addr %s2865, 8
          %s2872 = scalar_lea.vmem %s20, %s2871
          // Predicated region
          $region201: #{tpu_custom_call.1} parent=199 // pred_check
            %p2873 = pneg %p2870
          $region202: #{tpu_custom_call.1} parent=199 // pred_check_branch
            %2875 = sbr.rel (%p2873) target = $region204
          $region203: #{tpu_custom_call.1} parent=199 // pred_region
            // Predicated region
            $region205: #{tpu_custom_call.1} parent=203 // pred_check
              _
            $region206: #{tpu_custom_call.1} parent=203 // pred_check_branch
              %2877 = sbr.rel (0) target = $region208
            $region207: #{tpu_custom_call.1} parent=203 // pred_region
              // Predicated region
              $region227: #{tpu_custom_call.1} parent=207 // pred_check
                _
              $region228: #{tpu_custom_call.1} parent=207 // pred_check_branch
                %2965 = sbr.rel (0) target = $region230
              $region229: #{tpu_custom_call.1} parent=207 // pred_region
                %s2966 = sdiv.u32.pop %s2868, 20
                %s2967 = srem.u32.pop %s2868, 20
                // While loop
                $region231: #{tpu_custom_call.1} parent=229 // loop_pre_header
                  _
                $region232: #{tpu_custom_call.1} parent=229 // loop_header
                  %s2969 = sphi 0, %s2971
                  %p2970 = scmp.ge.s32.totalorder %s2969, %s2966
                  %s2974 = sphi 0, %s3019
                  %s2975 = sphi %s2455, %s3022
                  %s2976 = sphi %s2872, %s3023
                $region233: #{tpu_custom_call.1} parent=229 // loop_header_branch
                  %2973 = sbr.rel (%p2970) target = $region237
                $region234: #{tpu_custom_call.1} parent=229 // loop_body
                  %v2977 = vld [vmem:[%s2975] sm:$0xff]
                  %2978 = vst [vmem:[%s2976] sm:$0xff] %v2977
                  %v2979 = vld [vmem:[%s2975 + $0x8] sm:$0xff]
                  %2980 = vst [vmem:[%s2976 + $0x8] sm:$0xff] %v2979
                  %v2981 = vld [vmem:[%s2975 + $0x10] sm:$0xff]
                  %2982 = vst [vmem:[%s2976 + $0x10] sm:$0xff] %v2981
                  %v2983 = vld [vmem:[%s2975 + $0x18] sm:$0xff]
                  %2984 = vst [vmem:[%s2976 + $0x18] sm:$0xff] %v2983
                  %v2985 = vld [vmem:[%s2975 + $0x20] sm:$0xff]
                  %2986 = vst [vmem:[%s2976 + $0x20] sm:$0xff] %v2985
                  %v2987 = vld [vmem:[%s2975 + $0x28] sm:$0xff]
                  %2988 = vst [vmem:[%s2976 + $0x28] sm:$0xff] %v2987
                  %v2989 = vld [vmem:[%s2975 + $0x30] sm:$0xff]
                  %2990 = vst [vmem:[%s2976 + $0x30] sm:$0xff] %v2989
                  %v2991 = vld [vmem:[%s2975 + $0x38] sm:$0xff]
                  %2992 = vst [vmem:[%s2976 + $0x38] sm:$0xff] %v2991
                  %v2993 = vld [vmem:[%s2975 + $0x40] sm:$0xff]
                  %2994 = vst [vmem:[%s2976 + $0x40] sm:$0xff] %v2993
                  %v2995 = vld [vmem:[%s2975 + $0x48] sm:$0xff]
                  %2996 = vst [vmem:[%s2976 + $0x48] sm:$0xff] %v2995
                  %v2997 = vld [vmem:[%s2975 + $0x50] sm:$0xff]
                  %2998 = vst [vmem:[%s2976 + $0x50] sm:$0xff] %v2997
                  %v2999 = vld [vmem:[%s2975 + $0x58] sm:$0xff]
                  %3000 = vst [vmem:[%s2976 + $0x58] sm:$0xff] %v2999
                  %v3001 = vld [vmem:[%s2975 + $0x60] sm:$0xff]
                  %3002 = vst [vmem:[%s2976 + $0x60] sm:$0xff] %v3001
                  %v3003 = vld [vmem:[%s2975 + $0x68] sm:$0xff]
                  %3004 = vst [vmem:[%s2976 + $0x68] sm:$0xff] %v3003
                  %v3005 = vld [vmem:[%s2975 + $0x70] sm:$0xff]
                  %3006 = vst [vmem:[%s2976 + $0x70] sm:$0xff] %v3005
                  %v3007 = vld [vmem:[%s2975 + $0x78] sm:$0xff]
                  %3008 = vst [vmem:[%s2976 + $0x78] sm:$0xff] %v3007
                  %v3009 = vld [vmem:[%s2975 + $0x80] sm:$0xff]
                  %3010 = vst [vmem:[%s2976 + $0x80] sm:$0xff] %v3009
                  %v3011 = vld [vmem:[%s2975 + $0x88] sm:$0xff]
                  %3012 = vst [vmem:[%s2976 + $0x88] sm:$0xff] %v3011
                  %v3013 = vld [vmem:[%s2975 + $0x90] sm:$0xff]
                  %3014 = vst [vmem:[%s2976 + $0x90] sm:$0xff] %v3013
                  %v3015 = vld [vmem:[%s2975 + $0x98] sm:$0xff]
                  %3016 = vst [vmem:[%s2976 + $0x98] sm:$0xff] %v3015
                  %s3017 = sadd.s32 1, %s2974
                  %p3018 = scmp.ge.s32.totalorder %s3017, %s2966
                  %s3019 = scalar_select %p3018, 0, %s3017
                  %s3020 = smul.u32 %s3019, 160
                  %s3021 = smul.u32 %s3019, 160
                  %s3022 = scalar_lea.vmem %s2455, %s3020 [#allocation6]
                  %s3023 = scalar_lea.vmem %s2872, %s3021
                $region235: #{tpu_custom_call.1} parent=229 // loop_footer
                  %s2971 = sadd.s32 %s2969, 1
                $region236: #{tpu_custom_call.1} parent=229 // loop_footer_branch
                  %2968 = sbr.rel target = $region232
                $region237: #{tpu_custom_call.1} parent=229 // loop_exit
                  _
                %s3024 = sdiv.u32.pop %s2868, 20
                %s3025 = srem.u32.pop %s2868, 20
                %s3026 = smul.u32 %s3024, 20
                %s3027 = smul.u32 8, %s3026
                %s3028 = scalar_lea.vmem %s2455, %s3027 [#allocation6]
                %s3029 = smul.u32 8, %s3026
                %s3030 = scalar_lea.vmem %s2872, %s3029
                // While loop
                $region238: #{tpu_custom_call.1} parent=229 // loop_pre_header
                  _
                $region239: #{tpu_custom_call.1} parent=229 // loop_header
                  %s3032 = sphi 0, %s3034
                  %p3033 = scmp.ge.s32.totalorder %s3032, %s3025
                  %s3037 = sphi 0, %s3044
                  %s3038 = sphi %s3028, %s3047
                  %s3039 = sphi %s3030, %s3048
                $region240: #{tpu_custom_call.1} parent=229 // loop_header_branch
                  %3036 = sbr.rel (%p3033) target = $region244
                $region241: #{tpu_custom_call.1} parent=229 // loop_body
                  %v3040 = vld [vmem:[%s3038] sm:$0xff]
                  %3041 = vst [vmem:[%s3039] sm:$0xff] %v3040
                  %s3042 = sadd.s32 1, %s3037
                  %p3043 = scmp.ge.s32.totalorder %s3042, %s3025
                  %s3044 = scalar_select %p3043, 0, %s3042
                  %s3045 = smul.u32 %s3044, 8
                  %s3046 = smul.u32 %s3044, 8
                  %s3047 = scalar_lea.vmem %s3028, %s3045 [#allocation6]
                  %s3048 = scalar_lea.vmem %s3030, %s3046
                $region242: #{tpu_custom_call.1} parent=229 // loop_footer
                  %s3034 = sadd.s32 %s3032, 1
                $region243: #{tpu_custom_call.1} parent=229 // loop_footer_branch
                  %3031 = sbr.rel target = $region239
                $region244: #{tpu_custom_call.1} parent=229 // loop_exit
                  _
              $region230: #{tpu_custom_call.1} parent=207 // pred_fallthru
                _
              // Predicated region
              $region245: #{tpu_custom_call.1} parent=207 // pred_check
                _
              $region246: #{tpu_custom_call.1} parent=207 // pred_check_branch
                %3050 = sbr.rel target = $region248
              $region247: #{tpu_custom_call.1} parent=207 // pred_region
                _
              $region248: #{tpu_custom_call.1} parent=207 // pred_fallthru
                _
            $region208: #{tpu_custom_call.1} parent=203 // pred_fallthru
              _
            // Predicated region
            $region209: #{tpu_custom_call.1} parent=203 // pred_check
              _
            $region210: #{tpu_custom_call.1} parent=203 // pred_check_branch
              %2879 = sbr.rel target = $region212
            $region211: #{tpu_custom_call.1} parent=203 // pred_region
              %s2881 = sdiv.u32.pop %s2868, 20
              %s2882 = srem.u32.pop %s2868, 20
              // While loop
              $region213: #{tpu_custom_call.1} parent=211 // loop_pre_header
                _
              $region214: #{tpu_custom_call.1} parent=211 // loop_header
                %s2884 = sphi 0, %s2886
                %p2885 = scmp.ge.s32.totalorder %s2884, %s2881
                %s2889 = sphi 0, %s2934
                %s2890 = sphi %s2455, %s2937
                %s2891 = sphi %s2872, %s2938
              $region215: #{tpu_custom_call.1} parent=211 // loop_header_branch
                %2888 = sbr.rel (%p2885) target = $region219
              $region216: #{tpu_custom_call.1} parent=211 // loop_body
                %v2892 = vld [vmem:[%s2890] sm:$0xff]
                %2893 = vst [vmem:[%s2891] sm:$0xff] %v2892
                %v2894 = vld [vmem:[%s2890 + $0x8] sm:$0xff]
                %2895 = vst [vmem:[%s2891 + $0x8] sm:$0xff] %v2894
                %v2896 = vld [vmem:[%s2890 + $0x10] sm:$0xff]
                %2897 = vst [vmem:[%s2891 + $0x10] sm:$0xff] %v2896
                %v2898 = vld [vmem:[%s2890 + $0x18] sm:$0xff]
                %2899 = vst [vmem:[%s2891 + $0x18] sm:$0xff] %v2898
                %v2900 = vld [vmem:[%s2890 + $0x20] sm:$0xff]
                %2901 = vst [vmem:[%s2891 + $0x20] sm:$0xff] %v2900
                %v2902 = vld [vmem:[%s2890 + $0x28] sm:$0xff]
                %2903 = vst [vmem:[%s2891 + $0x28] sm:$0xff] %v2902
                %v2904 = vld [vmem:[%s2890 + $0x30] sm:$0xff]
                %2905 = vst [vmem:[%s2891 + $0x30] sm:$0xff] %v2904
                %v2906 = vld [vmem:[%s2890 + $0x38] sm:$0xff]
                %2907 = vst [vmem:[%s2891 + $0x38] sm:$0xff] %v2906
                %v2908 = vld [vmem:[%s2890 + $0x40] sm:$0xff]
                %2909 = vst [vmem:[%s2891 + $0x40] sm:$0xff] %v2908
                %v2910 = vld [vmem:[%s2890 + $0x48] sm:$0xff]
                %2911 = vst [vmem:[%s2891 + $0x48] sm:$0xff] %v2910
                %v2912 = vld [vmem:[%s2890 + $0x50] sm:$0xff]
                %2913 = vst [vmem:[%s2891 + $0x50] sm:$0xff] %v2912
                %v2914 = vld [vmem:[%s2890 + $0x58] sm:$0xff]
                %2915 = vst [vmem:[%s2891 + $0x58] sm:$0xff] %v2914
                %v2916 = vld [vmem:[%s2890 + $0x60] sm:$0xff]
                %2917 = vst [vmem:[%s2891 + $0x60] sm:$0xff] %v2916
                %v2918 = vld [vmem:[%s2890 + $0x68] sm:$0xff]
                %2919 = vst [vmem:[%s2891 + $0x68] sm:$0xff] %v2918
                %v2920 = vld [vmem:[%s2890 + $0x70] sm:$0xff]
                %2921 = vst [vmem:[%s2891 + $0x70] sm:$0xff] %v2920
                %v2922 = vld [vmem:[%s2890 + $0x78] sm:$0xff]
                %2923 = vst [vmem:[%s2891 + $0x78] sm:$0xff] %v2922
                %v2924 = vld [vmem:[%s2890 + $0x80] sm:$0xff]
                %2925 = vst [vmem:[%s2891 + $0x80] sm:$0xff] %v2924
                %v2926 = vld [vmem:[%s2890 + $0x88] sm:$0xff]
                %2927 = vst [vmem:[%s2891 + $0x88] sm:$0xff] %v2926
                %v2928 = vld [vmem:[%s2890 + $0x90] sm:$0xff]
                %2929 = vst [vmem:[%s2891 + $0x90] sm:$0xff] %v2928
                %v2930 = vld [vmem:[%s2890 + $0x98] sm:$0xff]
                %2931 = vst [vmem:[%s2891 + $0x98] sm:$0xff] %v2930
                %s2932 = sadd.s32 1, %s2889
                %p2933 = scmp.ge.s32.totalorder %s2932, %s2881
                %s2934 = scalar_select %p2933, 0, %s2932
                %s2935 = smul.u32 %s2934, 160
                %s2936 = smul.u32 %s2934, 160
                %s2937 = scalar_lea.vmem %s2455, %s2935 [#allocation6]
                %s2938 = scalar_lea.vmem %s2872, %s2936
              $region217: #{tpu_custom_call.1} parent=211 // loop_footer
                %s2886 = sadd.s32 %s2884, 1
              $region218: #{tpu_custom_call.1} parent=211 // loop_footer_branch
                %2883 = sbr.rel target = $region214
              $region219: #{tpu_custom_call.1} parent=211 // loop_exit
                _
              %s2939 = sdiv.u32.pop %s2868, 20
              %s2940 = srem.u32.pop %s2868, 20
              %s2941 = smul.u32 %s2939, 20
              %s2942 = smul.u32 8, %s2941
              %s2943 = scalar_lea.vmem %s2455, %s2942 [#allocation6]
              %s2944 = smul.u32 8, %s2941
              %s2945 = scalar_lea.vmem %s2872, %s2944
              // While loop
              $region220: #{tpu_custom_call.1} parent=211 // loop_pre_header
                _
              $region221: #{tpu_custom_call.1} parent=211 // loop_header
                %s2947 = sphi 0, %s2949
                %p2948 = scmp.ge.s32.totalorder %s2947, %s2940
                %s2952 = sphi 0, %s2959
                %s2953 = sphi %s2943, %s2962
                %s2954 = sphi %s2945, %s2963
              $region222: #{tpu_custom_call.1} parent=211 // loop_header_branch
                %2951 = sbr.rel (%p2948) target = $region226
              $region223: #{tpu_custom_call.1} parent=211 // loop_body
                %v2955 = vld [vmem:[%s2953] sm:$0xff]
                %2956 = vst [vmem:[%s2954] sm:$0xff] %v2955
                %s2957 = sadd.s32 1, %s2952
                %p2958 = scmp.ge.s32.totalorder %s2957, %s2940
                %s2959 = scalar_select %p2958, 0, %s2957
                %s2960 = smul.u32 %s2959, 8
                %s2961 = smul.u32 %s2959, 8
                %s2962 = scalar_lea.vmem %s2943, %s2960 [#allocation6]
                %s2963 = scalar_lea.vmem %s2945, %s2961
              $region224: #{tpu_custom_call.1} parent=211 // loop_footer
                %s2949 = sadd.s32 %s2947, 1
              $region225: #{tpu_custom_call.1} parent=211 // loop_footer_branch
                %2946 = sbr.rel target = $region221
              $region226: #{tpu_custom_call.1} parent=211 // loop_exit
                _
            $region212: #{tpu_custom_call.1} parent=203 // pred_fallthru
              _
          $region204: #{tpu_custom_call.1} parent=199 // pred_fallthru
            _
          %3051 = vnop
        $region200: #{tpu_custom_call.1} parent=87 // pred_fallthru
          _
        // Predicated region
        $region249: #{tpu_custom_call.1} parent=87 // pred_check
          %p3052 = pneg %p520
        $region250: #{tpu_custom_call.1} parent=87 // pred_check_branch
          %3054 = sbr.rel (%p3052) target = $region252
        $region251: #{tpu_custom_call.1} parent=87 // pred_region
          %s3055 = smul.u32 20, %s36
          %s3056 = ssub.s32 38, %s3055
          %p3057 = scmp.lt.s32.totalorder %s3056, 20
          %s3058 = scalar_select %p3057, %s3056, 20
          %s3059 = smul.u32 128, %s3058
          %p3060 = scmp.ne.s32.totalorder 0, %s3059
          %s3061 = smul.addr %s3055, 8
          %s3062 = scalar_lea.vmem %s21, %s3061
          // Predicated region
          $region253: #{tpu_custom_call.1} parent=251 // pred_check
            %p3063 = pneg %p3060
          $region254: #{tpu_custom_call.1} parent=251 // pred_check_branch
            %3065 = sbr.rel (%p3063) target = $region256
          $region255: #{tpu_custom_call.1} parent=251 // pred_region
            // Predicated region
            $region257: #{tpu_custom_call.1} parent=255 // pred_check
              _
            $region258: #{tpu_custom_call.1} parent=255 // pred_check_branch
              %3067 = sbr.rel (0) target = $region260
            $region259: #{tpu_custom_call.1} parent=255 // pred_region
              // Predicated region
              $region279: #{tpu_custom_call.1} parent=259 // pred_check
                _
              $region280: #{tpu_custom_call.1} parent=259 // pred_check_branch
                %3155 = sbr.rel (0) target = $region282
              $region281: #{tpu_custom_call.1} parent=259 // pred_region
                %s3156 = sdiv.u32.pop %s3058, 20
                %s3157 = srem.u32.pop %s3058, 20
                // While loop
                $region283: #{tpu_custom_call.1} parent=281 // loop_pre_header
                  _
                $region284: #{tpu_custom_call.1} parent=281 // loop_header
                  %s3159 = sphi 0, %s3161
                  %p3160 = scmp.ge.s32.totalorder %s3159, %s3156
                  %s3164 = sphi 0, %s3209
                  %s3165 = sphi %s2459, %s3212
                  %s3166 = sphi %s3062, %s3213
                $region285: #{tpu_custom_call.1} parent=281 // loop_header_branch
                  %3163 = sbr.rel (%p3160) target = $region289
                $region286: #{tpu_custom_call.1} parent=281 // loop_body
                  %v3167 = vld [vmem:[%s3165] sm:$0xff]
                  %3168 = vst [vmem:[%s3166] sm:$0xff] %v3167
                  %v3169 = vld [vmem:[%s3165 + $0x8] sm:$0xff]
                  %3170 = vst [vmem:[%s3166 + $0x8] sm:$0xff] %v3169
                  %v3171 = vld [vmem:[%s3165 + $0x10] sm:$0xff]
                  %3172 = vst [vmem:[%s3166 + $0x10] sm:$0xff] %v3171
                  %v3173 = vld [vmem:[%s3165 + $0x18] sm:$0xff]
                  %3174 = vst [vmem:[%s3166 + $0x18] sm:$0xff] %v3173
                  %v3175 = vld [vmem:[%s3165 + $0x20] sm:$0xff]
                  %3176 = vst [vmem:[%s3166 + $0x20] sm:$0xff] %v3175
                  %v3177 = vld [vmem:[%s3165 + $0x28] sm:$0xff]
                  %3178 = vst [vmem:[%s3166 + $0x28] sm:$0xff] %v3177
                  %v3179 = vld [vmem:[%s3165 + $0x30] sm:$0xff]
                  %3180 = vst [vmem:[%s3166 + $0x30] sm:$0xff] %v3179
                  %v3181 = vld [vmem:[%s3165 + $0x38] sm:$0xff]
                  %3182 = vst [vmem:[%s3166 + $0x38] sm:$0xff] %v3181
                  %v3183 = vld [vmem:[%s3165 + $0x40] sm:$0xff]
                  %3184 = vst [vmem:[%s3166 + $0x40] sm:$0xff] %v3183
                  %v3185 = vld [vmem:[%s3165 + $0x48] sm:$0xff]
                  %3186 = vst [vmem:[%s3166 + $0x48] sm:$0xff] %v3185
                  %v3187 = vld [vmem:[%s3165 + $0x50] sm:$0xff]
                  %3188 = vst [vmem:[%s3166 + $0x50] sm:$0xff] %v3187
                  %v3189 = vld [vmem:[%s3165 + $0x58] sm:$0xff]
                  %3190 = vst [vmem:[%s3166 + $0x58] sm:$0xff] %v3189
                  %v3191 = vld [vmem:[%s3165 + $0x60] sm:$0xff]
                  %3192 = vst [vmem:[%s3166 + $0x60] sm:$0xff] %v3191
                  %v3193 = vld [vmem:[%s3165 + $0x68] sm:$0xff]
                  %3194 = vst [vmem:[%s3166 + $0x68] sm:$0xff] %v3193
                  %v3195 = vld [vmem:[%s3165 + $0x70] sm:$0xff]
                  %3196 = vst [vmem:[%s3166 + $0x70] sm:$0xff] %v3195
                  %v3197 = vld [vmem:[%s3165 + $0x78] sm:$0xff]
                  %3198 = vst [vmem:[%s3166 + $0x78] sm:$0xff] %v3197
                  %v3199 = vld [vmem:[%s3165 + $0x80] sm:$0xff]
                  %3200 = vst [vmem:[%s3166 + $0x80] sm:$0xff] %v3199
                  %v3201 = vld [vmem:[%s3165 + $0x88] sm:$0xff]
                  %3202 = vst [vmem:[%s3166 + $0x88] sm:$0xff] %v3201
                  %v3203 = vld [vmem:[%s3165 + $0x90] sm:$0xff]
                  %3204 = vst [vmem:[%s3166 + $0x90] sm:$0xff] %v3203
                  %v3205 = vld [vmem:[%s3165 + $0x98] sm:$0xff]
                  %3206 = vst [vmem:[%s3166 + $0x98] sm:$0xff] %v3205
                  %s3207 = sadd.s32 1, %s3164
                  %p3208 = scmp.ge.s32.totalorder %s3207, %s3156
                  %s3209 = scalar_select %p3208, 0, %s3207
                  %s3210 = smul.u32 %s3209, 160
                  %s3211 = smul.u32 %s3209, 160
                  %s3212 = scalar_lea.vmem %s2459, %s3210 [#allocation7]
                  %s3213 = scalar_lea.vmem %s3062, %s3211
                $region287: #{tpu_custom_call.1} parent=281 // loop_footer
                  %s3161 = sadd.s32 %s3159, 1
                $region288: #{tpu_custom_call.1} parent=281 // loop_footer_branch
                  %3158 = sbr.rel target = $region284
                $region289: #{tpu_custom_call.1} parent=281 // loop_exit
                  _
                %s3214 = sdiv.u32.pop %s3058, 20
                %s3215 = srem.u32.pop %s3058, 20
                %s3216 = smul.u32 %s3214, 20
                %s3217 = smul.u32 8, %s3216
                %s3218 = scalar_lea.vmem %s2459, %s3217 [#allocation7]
                %s3219 = smul.u32 8, %s3216
                %s3220 = scalar_lea.vmem %s3062, %s3219
                // While loop
                $region290: #{tpu_custom_call.1} parent=281 // loop_pre_header
                  _
                $region291: #{tpu_custom_call.1} parent=281 // loop_header
                  %s3222 = sphi 0, %s3224
                  %p3223 = scmp.ge.s32.totalorder %s3222, %s3215
                  %s3227 = sphi 0, %s3234
                  %s3228 = sphi %s3218, %s3237
                  %s3229 = sphi %s3220, %s3238
                $region292: #{tpu_custom_call.1} parent=281 // loop_header_branch
                  %3226 = sbr.rel (%p3223) target = $region296
                $region293: #{tpu_custom_call.1} parent=281 // loop_body
                  %v3230 = vld [vmem:[%s3228] sm:$0xff]
                  %3231 = vst [vmem:[%s3229] sm:$0xff] %v3230
                  %s3232 = sadd.s32 1, %s3227
                  %p3233 = scmp.ge.s32.totalorder %s3232, %s3215
                  %s3234 = scalar_select %p3233, 0, %s3232
                  %s3235 = smul.u32 %s3234, 8
                  %s3236 = smul.u32 %s3234, 8
                  %s3237 = scalar_lea.vmem %s3218, %s3235 [#allocation7]
                  %s3238 = scalar_lea.vmem %s3220, %s3236
                $region294: #{tpu_custom_call.1} parent=281 // loop_footer
                  %s3224 = sadd.s32 %s3222, 1
                $region295: #{tpu_custom_call.1} parent=281 // loop_footer_branch
                  %3221 = sbr.rel target = $region291
                $region296: #{tpu_custom_call.1} parent=281 // loop_exit
                  _
              $region282: #{tpu_custom_call.1} parent=259 // pred_fallthru
                _
              // Predicated region
              $region297: #{tpu_custom_call.1} parent=259 // pred_check
                _
              $region298: #{tpu_custom_call.1} parent=259 // pred_check_branch
                %3240 = sbr.rel target = $region300
              $region299: #{tpu_custom_call.1} parent=259 // pred_region
                _
              $region300: #{tpu_custom_call.1} parent=259 // pred_fallthru
                _
            $region260: #{tpu_custom_call.1} parent=255 // pred_fallthru
              _
            // Predicated region
            $region261: #{tpu_custom_call.1} parent=255 // pred_check
              _
            $region262: #{tpu_custom_call.1} parent=255 // pred_check_branch
              %3069 = sbr.rel target = $region264
            $region263: #{tpu_custom_call.1} parent=255 // pred_region
              %s3071 = sdiv.u32.pop %s3058, 20
              %s3072 = srem.u32.pop %s3058, 20
              // While loop
              $region265: #{tpu_custom_call.1} parent=263 // loop_pre_header
                _
              $region266: #{tpu_custom_call.1} parent=263 // loop_header
                %s3074 = sphi 0, %s3076
                %p3075 = scmp.ge.s32.totalorder %s3074, %s3071
                %s3079 = sphi 0, %s3124
                %s3080 = sphi %s2459, %s3127
                %s3081 = sphi %s3062, %s3128
              $region267: #{tpu_custom_call.1} parent=263 // loop_header_branch
                %3078 = sbr.rel (%p3075) target = $region271
              $region268: #{tpu_custom_call.1} parent=263 // loop_body
                %v3082 = vld [vmem:[%s3080] sm:$0xff]
                %3083 = vst [vmem:[%s3081] sm:$0xff] %v3082
                %v3084 = vld [vmem:[%s3080 + $0x8] sm:$0xff]
                %3085 = vst [vmem:[%s3081 + $0x8] sm:$0xff] %v3084
                %v3086 = vld [vmem:[%s3080 + $0x10] sm:$0xff]
                %3087 = vst [vmem:[%s3081 + $0x10] sm:$0xff] %v3086
                %v3088 = vld [vmem:[%s3080 + $0x18] sm:$0xff]
                %3089 = vst [vmem:[%s3081 + $0x18] sm:$0xff] %v3088
                %v3090 = vld [vmem:[%s3080 + $0x20] sm:$0xff]
                %3091 = vst [vmem:[%s3081 + $0x20] sm:$0xff] %v3090
                %v3092 = vld [vmem:[%s3080 + $0x28] sm:$0xff]
                %3093 = vst [vmem:[%s3081 + $0x28] sm:$0xff] %v3092
                %v3094 = vld [vmem:[%s3080 + $0x30] sm:$0xff]
                %3095 = vst [vmem:[%s3081 + $0x30] sm:$0xff] %v3094
                %v3096 = vld [vmem:[%s3080 + $0x38] sm:$0xff]
                %3097 = vst [vmem:[%s3081 + $0x38] sm:$0xff] %v3096
                %v3098 = vld [vmem:[%s3080 + $0x40] sm:$0xff]
                %3099 = vst [vmem:[%s3081 + $0x40] sm:$0xff] %v3098
                %v3100 = vld [vmem:[%s3080 + $0x48] sm:$0xff]
                %3101 = vst [vmem:[%s3081 + $0x48] sm:$0xff] %v3100
                %v3102 = vld [vmem:[%s3080 + $0x50] sm:$0xff]
                %3103 = vst [vmem:[%s3081 + $0x50] sm:$0xff] %v3102
                %v3104 = vld [vmem:[%s3080 + $0x58] sm:$0xff]
                %3105 = vst [vmem:[%s3081 + $0x58] sm:$0xff] %v3104
                %v3106 = vld [vmem:[%s3080 + $0x60] sm:$0xff]
                %3107 = vst [vmem:[%s3081 + $0x60] sm:$0xff] %v3106
                %v3108 = vld [vmem:[%s3080 + $0x68] sm:$0xff]
                %3109 = vst [vmem:[%s3081 + $0x68] sm:$0xff] %v3108
                %v3110 = vld [vmem:[%s3080 + $0x70] sm:$0xff]
                %3111 = vst [vmem:[%s3081 + $0x70] sm:$0xff] %v3110
                %v3112 = vld [vmem:[%s3080 + $0x78] sm:$0xff]
                %3113 = vst [vmem:[%s3081 + $0x78] sm:$0xff] %v3112
                %v3114 = vld [vmem:[%s3080 + $0x80] sm:$0xff]
                %3115 = vst [vmem:[%s3081 + $0x80] sm:$0xff] %v3114
                %v3116 = vld [vmem:[%s3080 + $0x88] sm:$0xff]
                %3117 = vst [vmem:[%s3081 + $0x88] sm:$0xff] %v3116
                %v3118 = vld [vmem:[%s3080 + $0x90] sm:$0xff]
                %3119 = vst [vmem:[%s3081 + $0x90] sm:$0xff] %v3118
                %v3120 = vld [vmem:[%s3080 + $0x98] sm:$0xff]
                %3121 = vst [vmem:[%s3081 + $0x98] sm:$0xff] %v3120
                %s3122 = sadd.s32 1, %s3079
                %p3123 = scmp.ge.s32.totalorder %s3122, %s3071
                %s3124 = scalar_select %p3123, 0, %s3122
                %s3125 = smul.u32 %s3124, 160
                %s3126 = smul.u32 %s3124, 160
                %s3127 = scalar_lea.vmem %s2459, %s3125 [#allocation7]
                %s3128 = scalar_lea.vmem %s3062, %s3126
              $region269: #{tpu_custom_call.1} parent=263 // loop_footer
                %s3076 = sadd.s32 %s3074, 1
              $region270: #{tpu_custom_call.1} parent=263 // loop_footer_branch
                %3073 = sbr.rel target = $region266
              $region271: #{tpu_custom_call.1} parent=263 // loop_exit
                _
              %s3129 = sdiv.u32.pop %s3058, 20
              %s3130 = srem.u32.pop %s3058, 20
              %s3131 = smul.u32 %s3129, 20
              %s3132 = smul.u32 8, %s3131
              %s3133 = scalar_lea.vmem %s2459, %s3132 [#allocation7]
              %s3134 = smul.u32 8, %s3131
              %s3135 = scalar_lea.vmem %s3062, %s3134
              // While loop
              $region272: #{tpu_custom_call.1} parent=263 // loop_pre_header
                _
              $region273: #{tpu_custom_call.1} parent=263 // loop_header
                %s3137 = sphi 0, %s3139
                %p3138 = scmp.ge.s32.totalorder %s3137, %s3130
                %s3142 = sphi 0, %s3149
                %s3143 = sphi %s3133, %s3152
                %s3144 = sphi %s3135, %s3153
              $region274: #{tpu_custom_call.1} parent=263 // loop_header_branch
                %3141 = sbr.rel (%p3138) target = $region278
              $region275: #{tpu_custom_call.1} parent=263 // loop_body
                %v3145 = vld [vmem:[%s3143] sm:$0xff]
                %3146 = vst [vmem:[%s3144] sm:$0xff] %v3145
                %s3147 = sadd.s32 1, %s3142
                %p3148 = scmp.ge.s32.totalorder %s3147, %s3130
                %s3149 = scalar_select %p3148, 0, %s3147
                %s3150 = smul.u32 %s3149, 8
                %s3151 = smul.u32 %s3149, 8
                %s3152 = scalar_lea.vmem %s3133, %s3150 [#allocation7]
                %s3153 = scalar_lea.vmem %s3135, %s3151
              $region276: #{tpu_custom_call.1} parent=263 // loop_footer
                %s3139 = sadd.s32 %s3137, 1
              $region277: #{tpu_custom_call.1} parent=263 // loop_footer_branch
                %3136 = sbr.rel target = $region273
              $region278: #{tpu_custom_call.1} parent=263 // loop_exit
                _
            $region264: #{tpu_custom_call.1} parent=255 // pred_fallthru
              _
          $region256: #{tpu_custom_call.1} parent=251 // pred_fallthru
            _
          %3241 = vnop
        $region252: #{tpu_custom_call.1} parent=87 // pred_fallthru
          _
      $region88: #{tpu_custom_call.1} parent=5 // pred_fallthru
        _
      %p3242 = scmp.le.s32.totalorder 2, %s31
      // Predicated region
      $region301: #{tpu_custom_call.1} parent=5 // pred_check
        %p3243 = pneg %p3242
      $region302: #{tpu_custom_call.1} parent=5 // pred_check_branch
        %3245 = sbr.rel (%p3243) target = $region304
      $region303: #{tpu_custom_call.1} parent=5 // pred_region
        %s3246 = ssub.s32 %s31, 2
        // Predicated region
        $region305: #{tpu_custom_call.1} parent=303 // pred_check
          %p3247 = pneg %p422
        $region306: #{tpu_custom_call.1} parent=303 // pred_check_branch
          %3249 = sbr.rel (%p3247) target = $region308
        $region307: #{tpu_custom_call.1} parent=303 // pred_region
          %s3250 = sand.u32 %s407, 1
          %s3251 = sand.u32 %s407, 1
          %s3252 = smul.addr %s3251, 160
          %s3253 = scalar_lea.vmem [#allocation2], %s3252
        $region308: #{tpu_custom_call.1} parent=303 // pred_fallthru
          _
        // Predicated region
        $region309: #{tpu_custom_call.1} parent=303 // pred_check
          %p3254 = pneg %p448
        $region310: #{tpu_custom_call.1} parent=303 // pred_check_branch
          %3256 = sbr.rel (%p3254) target = $region312
        $region311: #{tpu_custom_call.1} parent=303 // pred_region
          %s3257 = sand.u32 %s433, 1
          %s3258 = scalar_lea.sflag [#allocation4], %s3257
          %s3259 = sand.u32 %s433, 1
          %s3260 = smul.addr %s3259, 160
          %s3261 = scalar_lea.vmem [#allocation3], %s3260
          %3262 = dma.done %s3258, 2560
        $region312: #{tpu_custom_call.1} parent=303 // pred_fallthru
          _
        // Predicated region
        $region313: #{tpu_custom_call.1} parent=303 // pred_check
          %p3263 = pneg %p474
        $region314: #{tpu_custom_call.1} parent=303 // pred_check_branch
          %3265 = sbr.rel (%p3263) target = $region316
        $region315: #{tpu_custom_call.1} parent=303 // pred_region
          %s3266 = sand.u32 %s459, 1
          %s3267 = sand.u32 %s459, 1
          %s3268 = smul.addr %s3267, 160
          %s3269 = scalar_lea.vmem [#allocation5], %s3268
        $region316: #{tpu_custom_call.1} parent=303 // pred_fallthru
          _
        // Predicated region
        $region317: #{tpu_custom_call.1} parent=303 // pred_check
          %p3270 = pneg %p500
        $region318: #{tpu_custom_call.1} parent=303 // pred_check_branch
          %3272 = sbr.rel (%p3270) target = $region320
        $region319: #{tpu_custom_call.1} parent=303 // pred_region
          %s3273 = sand.u32 %s485, 1
          %s3274 = sand.u32 %s485, 1
          %s3275 = smul.addr %s3274, 160
          %s3276 = scalar_lea.vmem [#allocation6], %s3275
        $region320: #{tpu_custom_call.1} parent=303 // pred_fallthru
          _
        // Predicated region
        $region321: #{tpu_custom_call.1} parent=303 // pred_check
          %p3277 = pneg %p526
        $region322: #{tpu_custom_call.1} parent=303 // pred_check_branch
          %3279 = sbr.rel (%p3277) target = $region324
        $region323: #{tpu_custom_call.1} parent=303 // pred_region
          %s3280 = sand.u32 %s511, 1
          %s3281 = sand.u32 %s511, 1
          %s3282 = smul.addr %s3281, 160
          %s3283 = scalar_lea.vmem [#allocation7], %s3282
        $region324: #{tpu_custom_call.1} parent=303 // pred_fallthru
          _
      $region304: #{tpu_custom_call.1} parent=5 // pred_fallthru
        _
    $region6: #{tpu_custom_call.1} parent=1 // loop_footer
      %s35 = sadd.s32 1, %s31
    $region7: #{tpu_custom_call.1} parent=1 // loop_footer_branch
      %30 = sbr.rel target = $region3
    $region8: #{tpu_custom_call.1} parent=1 // loop_exit
      _
    %3284 = vsyncpa [#allocation4], 1
    %s3285 = scalar_lea.sflag [#allocation4], 1
    %3286 = vsyncpa %s3285, 1

</llo_original>
